<compile_context>
chip_gen: v7x
topology: tpu7x:2x2x1
jax: 0.10.0
libtpu: 0.0.40
codegen_flags: <defaults>
</compile_context>

<pallas_src>
import math

import numpy as np
import jax
import jax.numpy as jnp
from jax import lax
from jax.experimental import pallas as pl
from jax.experimental.pallas import tpu as pltpu


_PAR = pltpu.CompilerParams(dimension_semantics=("parallel",))


# ---------------------------------------------------------------------------
# Host-side constant builders (trace-time; become jit constants)
# ---------------------------------------------------------------------------

def _num_groups(c):
    if c % 16 == 0:
        return 16
    if c % 8 == 0:
        return 8
    return c


def _pad_base(width):
    # leading zero region of the flat padded buffer, multiple of 8, >= W+1
    return ((width + 1 + 7) // 8) * 8


def _edge_masks(H, W):
    """(P,1) validity masks for dx=-1 / dx=+1 taps of a centered 3x3 conv."""
    xs = np.arange(H * W) % W
    left = (xs >= 1).astype(np.float32)[:, None]
    right = (xs <= W - 2).astype(np.float32)[:, None]
    return jnp.asarray(left), jnp.asarray(right)


def _down_masks(H, W):
    """(P,1) validity masks for dx=+1 / dx=+2 taps of the stride-2 conv."""
    xs = np.arange(H * W) % W
    m1 = (xs <= W - 2).astype(np.float32)[:, None]
    m2 = (xs <= W - 3).astype(np.float32)[:, None]
    return jnp.asarray(m1), jnp.asarray(m2)


def _down_select(H, W):
    """(H/2*W/2, H*W) one-hot matrix selecting even rows/cols (stride-2)."""
    Ho, Wo = H // 2, W // 2
    S = np.zeros((Ho * Wo, H * W), np.float32)
    idx = np.arange(Ho * Wo)
    yo, xo = idx // Wo, idx % Wo
    S[idx, 2 * yo * W + 2 * xo] = 1.0
    return jnp.asarray(S)


def _up_mat(H, W):
    """(4*H*W, H*W) one-hot matrix implementing nearest-neighbour 2x upsample."""
    H2, W2 = 2 * H, 2 * W
    U = np.zeros((H2 * W2, H * W), np.float32)
    idx = np.arange(H2 * W2)
    y, x = idx // W2, idx % W2
    U[idx, (y // 2) * W + (x // 2)] = 1.0
    return jnp.asarray(U)


def _group_mats(C, G):
    """One-hot channel->group (C,G) and group->channel (G,C) matrices."""
    cs = C // G
    gm = (np.arange(C)[:, None] // cs == np.arange(G)[None, :]).astype(np.float32)
    return jnp.asarray(gm), jnp.asarray(gm.T)


def _gm_dict(channel_counts):
    d = {}
    for C in channel_counts:
        g = _num_groups(C)
        if C // g > 1:
            d[int(C)] = _group_mats(C, g)
    return d


def _full_spec(shape):
    nd = len(shape)
    return pl.BlockSpec(tuple(shape), lambda n, _nd=nd: (0,) * _nd)


# ---------------------------------------------------------------------------
# In-kernel building blocks (operate on per-sample (P, C) values)
# ---------------------------------------------------------------------------

def _silu(x):
    return x * jax.nn.sigmoid(x)


def _gn(x, p, gms, swish):
    """GroupNorm(eps=1e-6, affine) on one sample laid out (P=H*W, C)."""
    P, C = x.shape
    groups = _num_groups(C)
    cs = C // groups
    s1 = jnp.sum(x, axis=0, keepdims=True)
    s2 = jnp.sum(x * x, axis=0, keepdims=True)
    if cs == 1:
        inv_n = 1.0 / float(P)
        mean = s1 * inv_n
        var = s2 * inv_n - mean * mean
        inv = lax.rsqrt(var + 1e-6)
    else:
        gm, gmt = gms[C]
        inv_n = 1.0 / float(P * cs)
        mean_g = jnp.dot(s1, gm, preferred_element_type=jnp.float32) * inv_n
        ex2_g = jnp.dot(s2, gm, preferred_element_type=jnp.float32) * inv_n
        var_g = ex2_g - mean_g * mean_g
        inv_g = lax.rsqrt(var_g + 1e-6)
        mean = jnp.dot(mean_g, gmt, preferred_element_type=jnp.float32)
        inv = jnp.dot(inv_g, gmt, preferred_element_type=jnp.float32)
    y = (x - mean) * (inv * p["gamma"]) + p["beta"]
    return _silu(y) if swish else y


def _conv3x3(h, p, W, pad_ref, col_ref, mleft, mright):
    """3x3 / stride-1 / SAME conv: 9 flat-shift taps -> one K=9*Cin matmul."""
    P, C = h.shape
    head = _pad_base(W)
    rows = head + P + W + 1
    pad_ref[0:head, 0:C] = jnp.zeros((head, C), jnp.float32)
    pad_ref[head + P:rows, 0:C] = jnp.zeros((W + 1, C), jnp.float32)
    pad_ref[head:head + P, 0:C] = h
    for t in range(9):
        dy, dx = t // 3 - 1, t % 3 - 1
        s = dy * W + dx
        tap = pad_ref[head + s:head + s + P, 0:C]
        if dx == -1:
            tap = tap * mleft
        elif dx == 1:
            tap = tap * mright
        col_ref[0:P, t * C:(t + 1) * C] = tap
    return (jnp.dot(col_ref[0:P, 0:9 * C], p["w"],
                    preferred_element_type=jnp.float32) + p["b"])


def _conv3x3_stride2(h, p, W, pad_ref, col_ref, m1, m2, sel):
    """torch F.pad(x,(0,1,0,1)) + 3x3 stride-2 conv, realised as an
    anchor-at-(0,0) stride-1 conv + an even-row/col selection matmul."""
    P, C = h.shape
    head = _pad_base(W)
    rows = head + P + 2 * W + 2
    pad_ref[0:head, 0:C] = jnp.zeros((head, C), jnp.float32)
    pad_ref[head + P:rows, 0:C] = jnp.zeros((2 * W + 2, C), jnp.float32)
    pad_ref[head:head + P, 0:C] = h
    for t in range(9):
        dy, dx = t // 3, t % 3
        s = dy * W + dx
        tap = pad_ref[head + s:head + s + P, 0:C]
        if dx == 1:
            tap = tap * m1
        elif dx == 2:
            tap = tap * m2
        col_ref[0:P, t * C:(t + 1) * C] = tap
    full = (jnp.dot(col_ref[0:P, 0:9 * C], p["w"],
                    preferred_element_type=jnp.float32) + p["b"])
    return jnp.dot(sel, full, preferred_element_type=jnp.float32)


def _nin(x, p):
    """1x1 conv == channel matmul."""
    return jnp.dot(x, p["w"], preferred_element_type=jnp.float32) + p["b"]


def _concat_lanes(a, b, buf_ref):
    """Channel (lane) concatenation staged through a VMEM scratch buffer."""
    P, Ca = a.shape
    Cb = b.shape[1]
    buf_ref[0:P, 0:Ca] = a
    buf_ref[0:P, Ca:Ca + Cb] = b
    return buf_ref[0:P, 0:Ca + Cb]


def _resnet(x, p, gms, W, pad_ref, col_ref, mleft, mright):
    h = _gn(x, p["norm1"], gms, swish=True)
    h = _conv3x3(h, p["conv1"], W, pad_ref, col_ref, mleft, mright)
    h = _gn(h, p["norm2"], gms, swish=True)
    # dropout rate is 0.0 -> identity
    h = _conv3x3(h, p["conv2"], W, pad_ref, col_ref, mleft, mright)
    xs = _nin(x, p["nin"]) if "nin" in p else x
    return xs + h


def _attn(x, p, gms):
    """Single-head spatial self-attention; c**-0.5 is folded into q weights."""
    h = _gn(x, p["norm"], gms, swish=False)
    q = _nin(h, p["q"])
    k = _nin(h, p["k"])
    v = _nin(h, p["v"])
    logits = lax.dot_general(q, k, (((1,), (1,)), ((), ())),
                             preferred_element_type=jnp.float32)   # (P, P)
    logits = logits - jnp.max(logits, axis=-1, keepdims=True)
    e = jnp.exp(logits)
    pmat = e / jnp.sum(e, axis=-1, keepdims=True)
    a = jnp.dot(pmat, v, preferred_element_type=jnp.float32)
    return x + _nin(a, p["proj"])


# ---------------------------------------------------------------------------
# Generic fused-stage runner: one pallas_call, grid over the batch
# ---------------------------------------------------------------------------

def run_stage(program, acts, params, out_shapes, pad_shape, col_shape):
    """Run `program(acts, params, pad_ref, col_ref) -> [outputs]` per sample."""
    leaves, treedef = jax.tree_util.tree_flatten(params)
    n_act, n_leaf, n_out = len(acts), len(leaves), len(out_shapes)

    def kernel(*refs):
        act_refs = refs[:n_act]
        leaf_refs = refs[n_act:n_act + n_leaf]
        out_refs = refs[n_act + n_leaf:n_act + n_leaf + n_out]
        pad_ref, col_ref = refs[n_act + n_leaf + n_out:]
        p = jax.tree_util.tree_unflatten(treedef, [r[...] for r in leaf_refs])
        outs = program([r[0] for r in act_refs], p, pad_ref, col_ref)
        for o_ref, o in zip(out_refs, outs):
            o_ref[0] = o

    N = acts[0].shape[0]
    in_specs = ([pl.BlockSpec((1,) + tuple(a.shape[1:]), lambda n: (n, 0, 0))
                 for a in acts]
                + [_full_spec(l.shape) for l in leaves])
    out_specs = tuple(pl.BlockSpec((1,) + tuple(s[1:]), lambda n: (n, 0, 0))
                      for s in out_shapes)
    out_shape = tuple(jax.ShapeDtypeStruct(tuple(s), jnp.float32)
                      for s in out_shapes)
    outs = pl.pallas_call(
        kernel,
        out_shape=out_shape,
        grid=(N,),
        in_specs=in_specs,
        out_specs=out_specs,
        scratch_shapes=[pltpu.VMEM(tuple(pad_shape), jnp.float32),
                        pltpu.VMEM(tuple(col_shape), jnp.float32)],
        compiler_params=_PAR,
    )(*acts, *leaves)
    return tuple(outs) if isinstance(outs, (tuple, list)) else (outs,)


# ---------------------------------------------------------------------------
# Full forward: four fused pallas_calls inside one jit
# ---------------------------------------------------------------------------

@jax.jit
def _forward_jit(params, x_nchw, ab):
    """Specialised for ch_mult=(1,2), num_res_blocks=1, attn at res/2."""
    N, Cin, H, W = x_nchw.shape
    H1, W1 = H // 2, W // 2
    P0, P1 = H * W, H1 * W1
    x = jnp.transpose(x_nchw, (0, 2, 3, 1)).reshape(N, P0, Cin)

    c0 = params["conv_in"]["w"].shape[1]            # 16
    c1 = params["mid"]["block_1"]["conv1"]["w"].shape[1]   # 32
    co = params["conv_out"]["w"].shape[1]            # 3

    mL0, mR0 = _edge_masks(H, W)
    mL1, mR1 = _edge_masks(H1, W1)
    dm1, dm2 = _down_masks(H, W)
    sel = _down_select(H, W)
    upm = _up_mat(H1, W1)

    scale = float(c1) ** (-0.5)

    def scaled_q(ap):
        return dict(ap, q={"w": ap["q"]["w"] * scale, "b": ap["q"]["b"] * scale})

    # --- stage A: conv_in -> ResnetBlock(c0) -> Downsample --------------------
    pA = {"mL": mL0, "mR": mR0, "dm1": dm1, "dm2": dm2, "sel": sel,
          "conv_in": params["conv_in"],
          "rb": params["down"][0]["block"][0],
          "ds": params["down"][0]["downsample"]["conv"],
          "gms": _gm_dict({c0})}

    def prog_a(xs, p, pad, col):
        xin, = xs
        h0 = _conv3x3(xin, p["conv_in"], W, pad, col, p["mL"], p["mR"])
        h1 = _resnet(h0, p["rb"], p["gms"], W, pad, col, p["mL"], p["mR"])
        h2 = _conv3x3_stride2(h1, p["ds"], W, pad, col,
                              p["dm1"], p["dm2"], p["sel"])
        return [h0, h1, h2]

    h0, h1, h2 = run_stage(
        prog_a, [x], pA,
        [(N, P0, c0), (N, P0, c0), (N, P1, c0)],
        pad_shape=(_pad_base(W) + P0 + 2 * W + 2, max(c0, Cin)),
        col_shape=(P0, 9 * max(c0, Cin)))

    # --- stage B: ResnetBlock(c0->c1)+Attn, mid block_1 + attn_1 + block_2 ----
    pB = {"mL": mL1, "mR": mR1,
          "rb0": params["down"][1]["block"][0],
          "at0": scaled_q(params["down"][1]["attn"][0]),
          "mb1": params["mid"]["block_1"],
          "mat": scaled_q(params["mid"]["attn_1"]),
          "mb2": params["mid"]["block_2"],
          "gms": _gm_dict({c0, c1})}

    def prog_b(xs, p, pad, col):
        hin, = xs
        h = _resnet(hin, p["rb0"], p["gms"], W1, pad, col, p["mL"], p["mR"])
        h3 = _attn(h, p["at0"], p["gms"])
        h = _resnet(h3, p["mb1"], p["gms"], W1, pad, col, p["mL"], p["mR"])
        h = _attn(h, p["mat"], p["gms"])
        hm = _resnet(h, p["mb2"], p["gms"], W1, pad, col, p["mL"], p["mR"])
        return [h3, hm]

    h3, hmid = run_stage(
        prog_b, [h2], pB,
        [(N, P1, c1), (N, P1, c1)],
        pad_shape=(_pad_base(W1) + P1 + W1 + 1, c1),
        col_shape=(P1, 9 * c1))

    # --- stage C: up level 1 (2x ResnetBlock+Attn with skips) + Upsample ------
    pC = {"mL1": mL1, "mR1": mR1, "mL0": mL0, "mR0": mR0, "up": upm,
          "rb0": params["up"][1]["block"][0],
          "at0": scaled_q(params["up"][1]["attn"][0]),
          "rb1": params["up"][1]["block"][1],
          "at1": scaled_q(params["up"][1]["attn"][1]),
          "upc": params["up"][1]["upsample"]["conv"],
          "gms": _gm_dict({c1, c0 + c1, 2 * c1})}

    def prog_c(xs, p, pad, col):
        hm, hs3, hs2 = xs
        h = _concat_lanes(hm, hs3, col)
        h = _resnet(h, p["rb0"], p["gms"], W1, pad, col, p["mL1"], p["mR1"])
        h = _attn(h, p["at0"], p["gms"])
        h = _concat_lanes(h, hs2, col)
        h = _resnet(h, p["rb1"], p["gms"], W1, pad, col, p["mL1"], p["mR1"])
        h = _attn(h, p["at1"], p["gms"])
        h = jnp.dot(p["up"], h, preferred_element_type=jnp.float32)  # nearest 2x
        h = _conv3x3(h, p["upc"], W, pad, col, p["mL0"], p["mR0"])
        return [h]

    (hup,) = run_stage(
        prog_c, [hmid, h3, h2], pC,
        [(N, P0, c1)],
        pad_shape=(_pad_base(W) + P0 + W + 1, 2 * c1),
        col_shape=(P0, 9 * 2 * c1))

    # --- stage D: up level 0 (2x ResnetBlock with skips) + out head + mix -----
    pD = {"mL": mL0, "mR": mR0, "ab": ab,
          "rb0": params["up"][0]["block"][0],
          "rb1": params["up"][0]["block"][1],
          "norm_out": params["norm_out"],
          "conv_out": params["conv_out"],
          "gms": _gm_dict({c1, c0 + c1})}

    def prog_d(xs, p, pad, col):
        h, hs1, hs0, x0 = xs
        h = _concat_lanes(h, hs1, col)
        h = _resnet(h, p["rb0"], p["gms"], W, pad, col, p["mL"], p["mR"])
        h = _concat_lanes(h, hs0, col)
        h = _resnet(h, p["rb1"], p["gms"], W, pad, col, p["mL"], p["mR"])
        h = _gn(h, p["norm_out"], p["gms"], swish=True)
        et = _conv3x3(h, p["conv_out"], W, pad, col, p["mL"], p["mR"])
        # SampleBlock: a*x + b*et (learn_alpha == False)
        return [p["ab"][:, 0:1] * x0 + p["ab"][:, 1:2] * et]

    (out,) = run_stage(
        prog_d, [hup, h1, h0, x], pD,
        [(N, P0, co)],
        pad_shape=(_pad_base(W) + P0 + W + 1, c0 + c1),
        col_shape=(P0, 9 * (c0 + c1)))

    return jnp.transpose(out.reshape(N, H, W, co), (0, 3, 1, 2))


def unet_block_forward(params, betas, x_nchw, t, last_t):
    """UnetBlock.forward(x, t, last_t): in_ch == out_ch == 3 so the
    PixelUnshuffle/PixelShuffle branches are not taken; pred_mean is True
    (train_type == 'layer_v2') and last_t is given, so SampleBlock applies."""
    alphas = np.cumprod(np.concatenate([[1.0], 1.0 - np.asarray(betas, np.float64)]))
    at = float(alphas[t + 1])
    at_next = float(alphas[last_t + 1])
    a = math.sqrt(at_next) / math.sqrt(at)
    b = (math.sqrt(1.0 - at_next)
         - math.sqrt(1.0 - at) / math.sqrt(at) * math.sqrt(at_next))
    ab = jnp.array([[a, b]], jnp.float32)
    return _forward_jit(params, x_nchw, ab)


# ---------------------------------------------------------------------------
# Pure-JAX (XLA) reference forward, used only for correctness checking
# ---------------------------------------------------------------------------

@jax.jit
def _ref_forward(params, x_nchw, ab):
    def conv3(x, p, stride=1, ds_pad=False):
        cin = x.shape[-1]
        w = p["w"].reshape(3, 3, cin, -1)
        if ds_pad:
            x = jnp.pad(x, ((0, 0), (0, 1), (0, 1), (0, 0)))
            padding = "VALID"
        else:
            padding = "SAME"
        y = lax.conv_general_dilated(x, w, (stride, stride), padding,
                                     dimension_numbers=("NHWC", "HWIO", "NHWC"))
        return y + p["b"].reshape(1, 1, 1, -1)

    def nin(x, p):
        return jnp.einsum("nhwc,cd->nhwd", x, p["w"]) + p["b"].reshape(1, 1, 1, -1)

    def gn(x, p):
        n, hh, ww, C = x.shape
        G = _num_groups(C)
        xg = x.reshape(n, hh * ww, G, C // G)
        mean = xg.mean(axis=(1, 3), keepdims=True)
        var = jnp.mean((xg - mean) ** 2, axis=(1, 3), keepdims=True)
        xn = ((xg - mean) / jnp.sqrt(var + 1e-6)).reshape(n, hh, ww, C)
        return xn * p["gamma"].reshape(1, 1, 1, C) + p["beta"].reshape(1, 1, 1, C)

    def silu(v):
        return v * jax.nn.sigmoid(v)

    def resnet(x, p):
        h = conv3(silu(gn(x, p["norm1"])), p["conv1"])
        h = conv3(silu(gn(h, p["norm2"])), p["conv2"])
        xs = nin(x, p["nin"]) if "nin" in p else x
        return xs + h

    def attn(x, p):
        n, hh, ww, C = x.shape
        hn = gn(x, p["norm"])
        q = nin(hn, p["q"]).reshape(n, hh * ww, C)
        k = nin(hn, p["k"]).reshape(n, hh * ww, C)
        v = nin(hn, p["v"]).reshape(n, hh * ww, C)
        wmat = jnp.einsum("bic,bjc->bij", q, k) * (float(C) ** -0.5)
        wmat = jax.nn.softmax(wmat, axis=2)
        ho = jnp.einsum("bij,bjc->bic", wmat, v).reshape(n, hh, ww, C)
        return x + nin(ho, p["proj"])

    x = jnp.transpose(x_nchw, (0, 2, 3, 1))
    hs = [conv3(x, params["conv_in"])]
    hs.append(resnet(hs[-1], params["down"][0]["block"][0]))
    hs.append(conv3(hs[-1], params["down"][0]["downsample"]["conv"],
                    stride=2, ds_pad=True))
    h = attn(resnet(hs[-1], params["down"][1]["block"][0]),
             params["down"][1]["attn"][0])
    hs.append(h)
    h = resnet(hs[-1], params["mid"]["block_1"])
    h = attn(h, params["mid"]["attn_1"])
    h = resnet(h, params["mid"]["block_2"])
    h = resnet(jnp.concatenate([h, hs.pop()], -1), params["up"][1]["block"][0])
    h = attn(h, params["up"][1]["attn"][0])
    h = resnet(jnp.concatenate([h, hs.pop()], -1), params["up"][1]["block"][1])
    h = attn(h, params["up"][1]["attn"][1])
    h = jnp.repeat(jnp.repeat(h, 2, axis=1), 2, axis=2)
    h = conv3(h, params["up"][1]["upsample"]["conv"])
    h = resnet(jnp.concatenate([h, hs.pop()], -1), params["up"][0]["block"][0])
    h = resnet(jnp.concatenate([h, hs.pop()], -1), params["up"][0]["block"][1])
    et = conv3(silu(gn(h, params["norm_out"])), params["conv_out"])
    out = ab[0, 0] * x + ab[0, 1] * et
    return jnp.transpose(out, (0, 3, 1, 2))


# ---------------------------------------------------------------------------
# Deterministic parameter initialization (shapes per _UnetBlock.__init__)
# ---------------------------------------------------------------------------

class _Rng:
    def __init__(self, seed):
        self.key = jax.random.PRNGKey(seed)

    def next(self):
        self.key, sub = jax.random.split(self.key)
        return sub


def init_conv(rng, cin, cout, k):
    fan_in = cin * k * k
    # weight stored as (K*K*Cin, Cout); rows ordered (ky, kx, cin)
    w = jax.random.normal(rng.next(), (k * k * cin, cout), jnp.float32) / np.sqrt(fan_in)
    b = 0.05 * jax.random.normal(rng.next(), (1, cout), jnp.float32)
    return {"w": w, "b": b}


def init_gn(rng, c):
    return {"gamma": 1.0 + 0.1 * jax.random.normal(rng.next(), (1, c), jnp.float32),
            "beta": 0.05 * jax.random.normal(rng.next(), (1, c), jnp.float32)}


def init_resnet(rng, cin, cout):
    p = {"norm1": init_gn(rng, cin), "conv1": init_conv(rng, cin, cout, 3),
         "norm2": init_gn(rng, cout), "conv2": init_conv(rng, cout, cout, 3)}
    if cin != cout:
        p["nin"] = init_conv(rng, cin, cout, 1)
    return p


def init_attn(rng, c):
    return {"norm": init_gn(rng, c),
            "q": init_conv(rng, c, c, 1), "k": init_conv(rng, c, c, 1),
            "v": init_conv(rng, c, c, 1), "proj": init_conv(rng, c, c, 1)}


def init_unet_params(rng, cfg):
    ch = cfg["ch"]
    ch_mult = tuple(cfg["ch_mult"])
    in_ch_mult = (1,) + ch_mult
    nrb = cfg["num_res_blocks"]
    attn_res = cfg["attn_resolutions"]
    params = {"conv_in": init_conv(rng, cfg["in_channels"], ch, 3)}
    curr_res = cfg["resolution"]
    down = []
    block_in = ch
    for i_level in range(len(ch_mult)):
        blocks, attns = [], []
        block_in = ch * in_ch_mult[i_level]
        block_out = ch * ch_mult[i_level]
        for _ in range(nrb):
            blocks.append(init_resnet(rng, block_in, block_out))
            block_in = block_out
            if curr_res in attn_res:
                attns.append(init_attn(rng, block_in))
        lvl = {"block": blocks, "attn": attns}
        if i_level != len(ch_mult) - 1:
            lvl["downsample"] = {"conv": init_conv(rng, block_in, block_in, 3)}
            curr_res //= 2
        down.append(lvl)
    params["down"] = down
    params["mid"] = {"block_1": init_resnet(rng, block_in, block_in),
                     "attn_1": init_attn(rng, block_in),
                     "block_2": init_resnet(rng, block_in, block_in)}
    up = [None] * len(ch_mult)
    for i_level in reversed(range(len(ch_mult))):
        blocks, attns = [], []
        block_out = ch * ch_mult[i_level]
        skip_in = ch * ch_mult[i_level]
        for i_block in range(nrb + 1):
            if i_block == nrb:
                skip_in = ch * in_ch_mult[i_level]
            blocks.append(init_resnet(rng, block_in + skip_in, block_out))
            block_in = block_out
            if curr_res in attn_res:
                attns.append(init_attn(rng, block_in))
        lvl = {"block": blocks, "attn": attns}
        if i_level != 0:
            lvl["upsample"] = {"conv": init_conv(rng, block_in, block_in, 3)}
            curr_res *= 2
        up[i_level] = lvl
    params["up"] = up
    params["norm_out"] = init_gn(rng, block_in)
    params["conv_out"] = init_conv(rng, block_in, cfg["out_ch"], 3)
    return params


# ---------------------------------------------------------------------------
# Self-checks of the in-kernel conv paths against lax.conv
# ---------------------------------------------------------------------------

def _self_check_convs():
    key = jax.random.PRNGKey(1)
    N, H, W, Cin, Cout = 2, 16, 16, 32, 16
    k1, k2, k3 = jax.random.split(key, 3)
    x = jax.random.normal(k1, (N, H * W, Cin), jnp.float32)
    w = jax.random.normal(k2, (9 * Cin, Cout), jnp.float32) * 0.1
    b = jax.random.normal(k3, (1, Cout), jnp.float32) * 0.1
    mL, mR = _edge_masks(H, W)

    def prog(xs, p, pad, col):
        return [_conv3x3(xs[0], p["c"], W, pad, col, p["mL"], p["mR"])]

    (out,) = run_stage(prog, [x], {"c": {"w": w, "b": b}, "mL": mL, "mR": mR},
                       [(N, H * W, Cout)],
                       (_pad_base(W) + H * W + W + 1, Cin), (H * W, 9 * Cin))
    ref = lax.conv_general_dilated(
        x.reshape(N, H, W, Cin), w.reshape(3, 3, Cin, Cout), (1, 1), "SAME",
        dimension_numbers=("NHWC", "HWIO", "NHWC")).reshape(N, H * W, Cout) + b
    err = float(jnp.max(jnp.abs(out - ref)))
    assert err < 1e-3, f"conv3x3 self-check failed, max abs err = {err}"

    d1, d2 = _down_masks(H, W)
    sel = _down_select(H, W)

    def prog2(xs, p, pad, col):
        return [_conv3x3_stride2(xs[0], p["c"], W, pad, col,
                                 p["d1"], p["d2"], p["sel"])]

    (out2,) = run_stage(prog2, [x],
                        {"c": {"w": w, "b": b}, "d1": d1, "d2": d2, "sel": sel},
                        [(N, (H // 2) * (W // 2), Cout)],
                        (_pad_base(W) + H * W + 2 * W + 2, Cin), (H * W, 9 * Cin))
    xp = jnp.pad(x.reshape(N, H, W, Cin), ((0, 0), (0, 1), (0, 1), (0, 0)))
    ref2 = lax.conv_general_dilated(
        xp, w.reshape(3, 3, Cin, Cout), (2, 2), "VALID",
        dimension_numbers=("NHWC", "HWIO", "NHWC")
    ).reshape(N, (H // 2) * (W // 2), Cout) + b
    err2 = float(jnp.max(jnp.abs(out2 - ref2)))
    assert err2 < 1e-3, f"stride-2 conv self-check failed, max abs err = {err2}"


# ---------------------------------------------------------------------------

if __name__ == "__main__":
    _self_check_convs()

    cfg = dict(ch=16, ch_mult=(1, 2), num_res_blocks=1, attn_resolutions=(8,),
               in_channels=3, out_ch=3, resolution=16)
    rng = _Rng(0)
    params = init_unet_params(rng, cfg)

    key = jax.random.PRNGKey(0)
    x = jax.random.normal(key, (2, 3, 16, 16), jnp.float32)   # NCHW, like torch
    betas = np.linspace(1e-4, 2e-2, 10, dtype=np.float64)     # num_diffusion_timesteps=10

    t, last_t = 5, 3
    out = unet_block_forward(params, betas, x, t=t, last_t=last_t)
    out = jax.block_until_ready(out)
    assert out.shape == (2, 3, 16, 16), out.shape
    assert bool(jnp.all(jnp.isfinite(out)))

    # Cross-check the fused Pallas pipeline against the pure-JAX reference.
    alphas = np.cumprod(np.concatenate([[1.0], 1.0 - betas]))
    a = math.sqrt(float(alphas[last_t + 1])) / math.sqrt(float(alphas[t + 1]))
    b = (math.sqrt(1.0 - float(alphas[last_t + 1]))
         - math.sqrt(1.0 - float(alphas[t + 1])) / math.sqrt(float(alphas[t + 1]))
         * math.sqrt(float(alphas[last_t + 1])))
    ref = _ref_forward(params, x, jnp.array([[a, b]], jnp.float32))
    err = float(jnp.max(jnp.abs(out - ref)))
    assert err < 3e-2, f"forward mismatch vs reference: max abs err = {err}"

    print("KERNEL_OK")
</pallas_src>

<mosaic_0001>
module attributes {stable_mosaic.version = 11 : i64} {
  func.func @kernel(%arg0: i32, %arg1: memref<1x256x32xf32, #tpu.memory_space<vmem>>, %arg2: memref<1x16xf32, #tpu.memory_space<vmem>>, %arg3: memref<288x16xf32, #tpu.memory_space<vmem>>, %arg4: memref<256x1xf32, #tpu.memory_space<vmem>>, %arg5: memref<256x1xf32, #tpu.memory_space<vmem>>, %arg6: memref<1x256x16xf32, #tpu.memory_space<vmem>>, %arg7: memref<297x32xf32, #tpu.memory_space<vmem>>, %arg8: memref<256x288xf32, #tpu.memory_space<vmem>>) attributes {dimension_semantics = [#tpu.dimension_semantics<parallel>], iteration_bounds = array<i64: 2>, scalar_prefetch = 0 : i64, scratch_operands = 2 : i64, tpu.core_type = #tpu.core_type<tc>, window_params = [{transform_indices = @transform_0, window_bounds = array<i64: 1, 256, 32>}, {pipeline_mode = #tpu.pipeline_mode<synchronous>, transform_indices = @transform_1, window_bounds = array<i64: 1, 16>}, {pipeline_mode = #tpu.pipeline_mode<synchronous>, transform_indices = @transform_2, window_bounds = array<i64: 288, 16>}, {pipeline_mode = #tpu.pipeline_mode<synchronous>, transform_indices = @transform_3, window_bounds = array<i64: 256, 1>}, {pipeline_mode = #tpu.pipeline_mode<synchronous>, transform_indices = @transform_4, window_bounds = array<i64: 256, 1>}, {transform_indices = @transform_5, window_bounds = array<i64: 1, 256, 16>}]} {
    %c0 = arith.constant 0 : index
    %c0_0 = arith.constant 0 : index
    %0 = vector.load %arg2[%c0, %c0_0] : memref<1x16xf32, #tpu.memory_space<vmem>>, vector<1x16xf32>
    %c0_1 = arith.constant 0 : index
    %c0_2 = arith.constant 0 : index
    %1 = vector.load %arg3[%c0_1, %c0_2] : memref<288x16xf32, #tpu.memory_space<vmem>>, vector<288x16xf32>
    %c0_3 = arith.constant 0 : index
    %c0_4 = arith.constant 0 : index
    %2 = vector.load %arg4[%c0_3, %c0_4] : memref<256x1xf32, #tpu.memory_space<vmem>>, vector<256x1xf32>
    %c0_5 = arith.constant 0 : index
    %c0_6 = arith.constant 0 : index
    %3 = vector.load %arg5[%c0_5, %c0_6] : memref<256x1xf32, #tpu.memory_space<vmem>>, vector<256x1xf32>
    %c0_7 = arith.constant 0 : index
    %c0_8 = arith.constant 0 : index
    %c0_9 = arith.constant 0 : index
    %4 = vector.load %arg1[%c0_7, %c0_8, %c0_9] : memref<1x256x32xf32, #tpu.memory_space<vmem>>, vector<1x256x32xf32>
    %5 = vector.shape_cast %4 : vector<1x256x32xf32> to vector<256x32xf32>
    %cst = arith.constant 0.000000e+00 : f32
    %6 = vector.broadcast %cst : f32 to vector<24x32xf32>
    %c0_10 = arith.constant 0 : index
    %c0_11 = arith.constant 0 : index
    %7 = vector.load %arg7[%c0_10, %c0_11] : memref<297x32xf32, #tpu.memory_space<vmem>>, vector<24x32xf32>
    tpu.vector_store %arg7[%c0_10, %c0_11], %6 {strides = array<i32>} : memref<297x32xf32, #tpu.memory_space<vmem>>, vector<24x32xf32>,
    %cst_12 = arith.constant 0.000000e+00 : f32
    %8 = vector.broadcast %cst_12 : f32 to vector<17x32xf32>
    %c280 = arith.constant 280 : index
    %c0_13 = arith.constant 0 : index
    %9 = vector.load %arg7[%c280, %c0_13] : memref<297x32xf32, #tpu.memory_space<vmem>>, vector<17x32xf32>
    tpu.vector_store %arg7[%c280, %c0_13], %8 {strides = array<i32>} : memref<297x32xf32, #tpu.memory_space<vmem>>, vector<17x32xf32>,
    %c24 = arith.constant 24 : index
    %c0_14 = arith.constant 0 : index
    %10 = vector.load %arg7[%c24, %c0_14] : memref<297x32xf32, #tpu.memory_space<vmem>>, vector<256x32xf32>
    tpu.vector_store %arg7[%c24, %c0_14], %5 {strides = array<i32>} : memref<297x32xf32, #tpu.memory_space<vmem>>, vector<256x32xf32>,
    %c7 = arith.constant 7 : index
    %c0_15 = arith.constant 0 : index
    %11 = vector.load %arg7[%c7, %c0_15] : memref<297x32xf32, #tpu.memory_space<vmem>>, vector<256x32xf32>
    %12 = vector.broadcast %2 : vector<256x1xf32> to vector<256x32xf32>
    %13 = arith.mulf %11, %12 : vector<256x32xf32>
    %c0_16 = arith.constant 0 : index
    %c0_17 = arith.constant 0 : index
    %14 = vector.load %arg8[%c0_16, %c0_17] : memref<256x288xf32, #tpu.memory_space<vmem>>, vector<256x32xf32>
    tpu.vector_store %arg8[%c0_16, %c0_17], %13 {strides = array<i32>} : memref<256x288xf32, #tpu.memory_space<vmem>>, vector<256x32xf32>,
    %c8 = arith.constant 8 : index
    %c0_18 = arith.constant 0 : index
    %15 = vector.load %arg7[%c8, %c0_18] : memref<297x32xf32, #tpu.memory_space<vmem>>, vector<256x32xf32>
    %c0_19 = arith.constant 0 : index
    %c32 = arith.constant 32 : index
    %16 = vector.load %arg8[%c0_19, %c32] : memref<256x288xf32, #tpu.memory_space<vmem>>, vector<256x32xf32>
    tpu.vector_store %arg8[%c0_19, %c32], %15 {strides = array<i32>} : memref<256x288xf32, #tpu.memory_space<vmem>>, vector<256x32xf32>,
    %c9 = arith.constant 9 : index
    %c0_20 = arith.constant 0 : index
    %17 = vector.load %arg7[%c9, %c0_20] : memref<297x32xf32, #tpu.memory_space<vmem>>, vector<256x32xf32>
    %18 = vector.broadcast %3 : vector<256x1xf32> to vector<256x32xf32>
    %19 = arith.mulf %17, %18 : vector<256x32xf32>
    %c0_21 = arith.constant 0 : index
    %c64 = arith.constant 64 : index
    %20 = vector.load %arg8[%c0_21, %c64] : memref<256x288xf32, #tpu.memory_space<vmem>>, vector<256x32xf32>
    tpu.vector_store %arg8[%c0_21, %c64], %19 {strides = array<i32>} : memref<256x288xf32, #tpu.memory_space<vmem>>, vector<256x32xf32>,
    %c23 = arith.constant 23 : index
    %c0_22 = arith.constant 0 : index
    %21 = vector.load %arg7[%c23, %c0_22] : memref<297x32xf32, #tpu.memory_space<vmem>>, vector<256x32xf32>
    %22 = vector.broadcast %2 : vector<256x1xf32> to vector<256x32xf32>
    %23 = arith.mulf %21, %22 : vector<256x32xf32>
    %c0_23 = arith.constant 0 : index
    %c96 = arith.constant 96 : index
    %24 = vector.load %arg8[%c0_23, %c96] : memref<256x288xf32, #tpu.memory_space<vmem>>, vector<256x32xf32>
    tpu.vector_store %arg8[%c0_23, %c96], %23 {strides = array<i32>} : memref<256x288xf32, #tpu.memory_space<vmem>>, vector<256x32xf32>,
    %c24_24 = arith.constant 24 : index
    %c0_25 = arith.constant 0 : index
    %25 = vector.load %arg7[%c24_24, %c0_25] : memref<297x32xf32, #tpu.memory_space<vmem>>, vector<256x32xf32>
    %c0_26 = arith.constant 0 : index
    %c128 = arith.constant 128 : index
    %26 = vector.load %arg8[%c0_26, %c128] : memref<256x288xf32, #tpu.memory_space<vmem>>, vector<256x32xf32>
    tpu.vector_store %arg8[%c0_26, %c128], %25 {strides = array<i32>} : memref<256x288xf32, #tpu.memory_space<vmem>>, vector<256x32xf32>,
    %c25 = arith.constant 25 : index
    %c0_27 = arith.constant 0 : index
    %27 = vector.load %arg7[%c25, %c0_27] : memref<297x32xf32, #tpu.memory_space<vmem>>, vector<256x32xf32>
    %28 = vector.broadcast %3 : vector<256x1xf32> to vector<256x32xf32>
    %29 = arith.mulf %27, %28 : vector<256x32xf32>
    %c0_28 = arith.constant 0 : index
    %c160 = arith.constant 160 : index
    %30 = vector.load %arg8[%c0_28, %c160] : memref<256x288xf32, #tpu.memory_space<vmem>>, vector<256x32xf32>
    tpu.vector_store %arg8[%c0_28, %c160], %29 {strides = array<i32>} : memref<256x288xf32, #tpu.memory_space<vmem>>, vector<256x32xf32>,
    %c39 = arith.constant 39 : index
    %c0_29 = arith.constant 0 : index
    %31 = vector.load %arg7[%c39, %c0_29] : memref<297x32xf32, #tpu.memory_space<vmem>>, vector<256x32xf32>
    %32 = vector.broadcast %2 : vector<256x1xf32> to vector<256x32xf32>
    %33 = arith.mulf %31, %32 : vector<256x32xf32>
    %c0_30 = arith.constant 0 : index
    %c192 = arith.constant 192 : index
    %34 = vector.load %arg8[%c0_30, %c192] : memref<256x288xf32, #tpu.memory_space<vmem>>, vector<256x32xf32>
    tpu.vector_store %arg8[%c0_30, %c192], %33 {strides = array<i32>} : memref<256x288xf32, #tpu.memory_space<vmem>>, vector<256x32xf32>,
    %c40 = arith.constant 40 : index
    %c0_31 = arith.constant 0 : index
    %35 = vector.load %arg7[%c40, %c0_31] : memref<297x32xf32, #tpu.memory_space<vmem>>, vector<256x32xf32>
    %c0_32 = arith.constant 0 : index
    %c224 = arith.constant 224 : index
    %36 = vector.load %arg8[%c0_32, %c224] : memref<256x288xf32, #tpu.memory_space<vmem>>, vector<256x32xf32>
    tpu.vector_store %arg8[%c0_32, %c224], %35 {strides = array<i32>} : memref<256x288xf32, #tpu.memory_space<vmem>>, vector<256x32xf32>,
    %c41 = arith.constant 41 : index
    %c0_33 = arith.constant 0 : index
    %37 = vector.load %arg7[%c41, %c0_33] : memref<297x32xf32, #tpu.memory_space<vmem>>, vector<256x32xf32>
    %38 = vector.broadcast %3 : vector<256x1xf32> to vector<256x32xf32>
    %39 = arith.mulf %37, %38 : vector<256x32xf32>
    %c0_34 = arith.constant 0 : index
    %c256 = arith.constant 256 : index
    %40 = vector.load %arg8[%c0_34, %c256] : memref<256x288xf32, #tpu.memory_space<vmem>>, vector<256x32xf32>
    tpu.vector_store %arg8[%c0_34, %c256], %39 {strides = array<i32>} : memref<256x288xf32, #tpu.memory_space<vmem>>, vector<256x32xf32>,
    %c0_35 = arith.constant 0 : index
    %c0_36 = arith.constant 0 : index
    %41 = vector.load %arg8[%c0_35, %c0_36] : memref<256x288xf32, #tpu.memory_space<vmem>>, vector<256x288xf32>
    %cst_37 = arith.constant dense<0.000000e+00> : vector<256x16xf32>
    %42 = tpu.matmul %41, %1, %cst_37 {dimension_numbers = #tpu.dot_dimension_numbers<[1], [0], [0], [1], [0, 0, 1, 1], [], []>} : vector<256x288xf32>, vector<288x16xf32>, vector<256x16xf32> -> vector<256x16xf32>
    %43 = vector.broadcast %0 : vector<1x16xf32> to vector<256x16xf32>
    %44 = arith.addf %42, %43 : vector<256x16xf32>
    %c0_38 = arith.constant 0 : index
    %c0_39 = arith.constant 0 : index
    %c0_40 = arith.constant 0 : index
    %45 = vector.load %arg6[%c0_38, %c0_39, %c0_40] : memref<1x256x16xf32, #tpu.memory_space<vmem>>, vector<1x256x16xf32>
    %46 = vector.shape_cast %45 : vector<1x256x16xf32> to vector<256x16xf32>
    %47 = vector.shape_cast %44 : vector<256x16xf32> to vector<1x256x16xf32>
    tpu.vector_store %arg6[%c0_38, %c0_39, %c0_40], %47 {strides = array<i32>} : memref<1x256x16xf32, #tpu.memory_space<vmem>>, vector<1x256x16xf32>,
    return
  }
  func.func @transform_0(%arg0: i32) -> (i32, i32, i32) {
    %c0_i32 = arith.constant 0 : i32
    %c0_i32_0 = arith.constant 0 : i32
    %c0_i32_1 = arith.constant 0 : i32
    return %arg0, %c0_i32, %c0_i32_0 : i32, i32, i32
  }
  func.func @transform_1(%arg0: i32) -> (i32, i32) {
    %c0_i32 = arith.constant 0 : i32
    %c0_i32_0 = arith.constant 0 : i32
    %c0_i32_1 = arith.constant 0 : i32
    return %c0_i32, %c0_i32_0 : i32, i32
  }
  func.func @transform_2(%arg0: i32) -> (i32, i32) {
    %c0_i32 = arith.constant 0 : i32
    %c0_i32_0 = arith.constant 0 : i32
    %c0_i32_1 = arith.constant 0 : i32
    return %c0_i32, %c0_i32_0 : i32, i32
  }
  func.func @transform_3(%arg0: i32) -> (i32, i32) {
    %c0_i32 = arith.constant 0 : i32
    %c0_i32_0 = arith.constant 0 : i32
    %c0_i32_1 = arith.constant 0 : i32
    return %c0_i32, %c0_i32_0 : i32, i32
  }
  func.func @transform_4(%arg0: i32) -> (i32, i32) {
    %c0_i32 = arith.constant 0 : i32
    %c0_i32_0 = arith.constant 0 : i32
    %c0_i32_1 = arith.constant 0 : i32
    return %c0_i32, %c0_i32_0 : i32, i32
  }
  func.func @transform_5(%arg0: i32) -> (i32, i32, i32) {
    %c0_i32 = arith.constant 0 : i32
    %c0_i32_0 = arith.constant 0 : i32
    %c0_i32_1 = arith.constant 0 : i32
    return %arg0, %c0_i32, %c0_i32_0 : i32, i32, i32
  }
}

</mosaic_0001>

<llo_original>
// kernel: tpu_custom_call.1
$region0: #{tpu_custom_call.1}
  #allocation0 [shape = 'u32[]', space=smem, size = 0x4, offset = 0x4, fixed_abs, tag = 'smem constant byte address 0x4 - core index']
  #allocation1 [shape = 'u32[144,128]{1,0:T(1,128)}', space=vmem, size = 0x12000, scoped, tag = 'internal scratch']
  #allocation2 [shape = 'f32[297,32]{1,0:T(8,128)}', space=vmem, size = 0x26000, scoped, tag = 'scratch operand']
  #allocation3 [shape = 'f32[256,288]{1,0:T(8,128)}', space=vmem, size = 0x60000, scoped, tag = 'scratch operand']
  %s0 = inlined_call_operand.vmem [shape: f32[2,256,32], index: 0, kind: input, shape index: {}]
  %s1 = inlined_call_operand.vmem [shape: f32[1,16], index: 1, kind: input, shape index: {}]
  %s2 = inlined_call_operand.vmem [shape: f32[288,16], index: 2, kind: input, shape index: {}]
  %s3 = inlined_call_operand.vmem [shape: f32[256,1], index: 3, kind: input, shape index: {}]
  %s4 = inlined_call_operand.vmem [shape: f32[256,1], index: 4, kind: input, shape index: {}]
  %s5 = inlined_call_operand.vmem [shape: f32[2,256,16], index: 5, kind: output, shape index: {}]
  %s6 = sld [smem:[#allocation0]]
  $region53: #{tpu_custom_call.1} parent=0
    _
  %s8 = ssub.s32 1, %s6
  %s9 = scalar_select 0, %s8, %s6
  loop: start=0, step=1, limit=4
  $region2: #{tpu_custom_call.1} parent=0 // loop_pre_header
    _
  $region3: #{tpu_custom_call.1} parent=0 // loop_header
    %s11 = sphi 0, %s15
    %p12 = scmp.ge.s32.totalorder %s11, 4
    %s21 = sphi 0, %s23
    %s24 = sphi 0, %s21
    %s25 = sphi 0, %s24
    %s41 = sphi 0, %s25
    %s45 = sphi 0, %s45
    %s47 = sphi 0, %s45
    %s48 = sphi 0, %s47
    %s62 = sphi 0, %s48
    %s66 = sphi 0, %s66
    %s68 = sphi 0, %s66
    %s69 = sphi 0, %s68
    %s83 = sphi 0, %s69
    %s87 = sphi 0, %s87
    %s89 = sphi 0, %s87
    %s90 = sphi 0, %s89
    %s104 = sphi 0, %s90
    %s108 = sphi 0, %s108
    %s110 = sphi 0, %s108
    %s111 = sphi 0, %s110
    %s125 = sphi 0, %s111
    %s131 = sphi 0, %s133
    %s134 = sphi 0, %s131
    %s135 = sphi 0, %s134
    %s151 = sphi 0, %s135
  $region4: #{tpu_custom_call.1} parent=0 // loop_header_branch
    %14 = sbr.rel (%p12) target = $region8
  $region5: #{tpu_custom_call.1} parent=0 // loop_body
    %s16 = ssub.s32 %s11, 1
    %s17 = ssub.s32 %s11, 2
    %s18 = sadd.s32 %s11, 1
    %s19 = ssub.s32 %s11, %s18
    %p20 = scmp.eq.s32.totalorder %s19, 0
    %s22 = sadd.s32 %s21, 1
    %s23 = scalar_select %p20, %s21, %s22
    %p26 = pneg %p20
    %p27 = scmp.eq.s32.totalorder %s11, 1
    %p28 = por %p26, %p27
    %p29 = scmp.ne.s32.totalorder %s21, %s24
    %p30 = scmp.eq.s32.totalorder %s11, 0
    %p31 = por %p29, %p30
    %p32 = scmp.ne.s32.totalorder %s21, %s24
    %p33 = scmp.eq.s32.totalorder %s16, 1
    %p34 = por %p32, %p33
    %p35 = scmp.ne.s32.totalorder %s24, %s25
    %p36 = scmp.eq.s32.totalorder %s16, 0
    %p37 = por %p35, %p36
    %p38 = scmp.ne.s32.totalorder %s24, %s25
    %p39 = scmp.eq.s32.totalorder %s17, 1
    %p40 = por %p38, %p39
    %p42 = scmp.ne.s32.totalorder %s25, %s41
    %p43 = scmp.eq.s32.totalorder %s17, 0
    %p44 = por %p42, %p43
    %s46 = sadd.s32 %s45, 1
    %p49 = scmp.eq.s32.totalorder %s11, 1
    %p50 = scmp.ne.s32.totalorder %s45, %s47
    %p51 = scmp.eq.s32.totalorder %s11, 0
    %p52 = por %p50, %p51
    %p53 = scmp.ne.s32.totalorder %s45, %s47
    %p54 = scmp.eq.s32.totalorder %s16, 1
    %p55 = por %p53, %p54
    %p56 = scmp.ne.s32.totalorder %s47, %s48
    %p57 = scmp.eq.s32.totalorder %s16, 0
    %p58 = por %p56, %p57
    %p59 = scmp.ne.s32.totalorder %s47, %s48
    %p60 = scmp.eq.s32.totalorder %s17, 1
    %p61 = por %p59, %p60
    %p63 = scmp.ne.s32.totalorder %s48, %s62
    %p64 = scmp.eq.s32.totalorder %s17, 0
    %p65 = por %p63, %p64
    %s67 = sadd.s32 %s66, 1
    %p70 = scmp.eq.s32.totalorder %s11, 1
    %p71 = scmp.ne.s32.totalorder %s66, %s68
    %p72 = scmp.eq.s32.totalorder %s11, 0
    %p73 = por %p71, %p72
    %p74 = scmp.ne.s32.totalorder %s66, %s68
    %p75 = scmp.eq.s32.totalorder %s16, 1
    %p76 = por %p74, %p75
    %p77 = scmp.ne.s32.totalorder %s68, %s69
    %p78 = scmp.eq.s32.totalorder %s16, 0
    %p79 = por %p77, %p78
    %p80 = scmp.ne.s32.totalorder %s68, %s69
    %p81 = scmp.eq.s32.totalorder %s17, 1
    %p82 = por %p80, %p81
    %p84 = scmp.ne.s32.totalorder %s69, %s83
    %p85 = scmp.eq.s32.totalorder %s17, 0
    %p86 = por %p84, %p85
    %s88 = sadd.s32 %s87, 1
    %p91 = scmp.eq.s32.totalorder %s11, 1
    %p92 = scmp.ne.s32.totalorder %s87, %s89
    %p93 = scmp.eq.s32.totalorder %s11, 0
    %p94 = por %p92, %p93
    %p95 = scmp.ne.s32.totalorder %s87, %s89
    %p96 = scmp.eq.s32.totalorder %s16, 1
    %p97 = por %p95, %p96
    %p98 = scmp.ne.s32.totalorder %s89, %s90
    %p99 = scmp.eq.s32.totalorder %s16, 0
    %p100 = por %p98, %p99
    %p101 = scmp.ne.s32.totalorder %s89, %s90
    %p102 = scmp.eq.s32.totalorder %s17, 1
    %p103 = por %p101, %p102
    %p105 = scmp.ne.s32.totalorder %s90, %s104
    %p106 = scmp.eq.s32.totalorder %s17, 0
    %p107 = por %p105, %p106
    %s109 = sadd.s32 %s108, 1
    %p112 = scmp.eq.s32.totalorder %s11, 1
    %p113 = scmp.ne.s32.totalorder %s108, %s110
    %p114 = scmp.eq.s32.totalorder %s11, 0
    %p115 = por %p113, %p114
    %p116 = scmp.ne.s32.totalorder %s108, %s110
    %p117 = scmp.eq.s32.totalorder %s16, 1
    %p118 = por %p116, %p117
    %p119 = scmp.ne.s32.totalorder %s110, %s111
    %p120 = scmp.eq.s32.totalorder %s16, 0
    %p121 = por %p119, %p120
    %p122 = scmp.ne.s32.totalorder %s110, %s111
    %p123 = scmp.eq.s32.totalorder %s17, 1
    %p124 = por %p122, %p123
    %p126 = scmp.ne.s32.totalorder %s111, %s125
    %p127 = scmp.eq.s32.totalorder %s17, 0
    %p128 = por %p126, %p127
    %s129 = ssub.s32 %s11, %s18
    %p130 = scmp.eq.s32.totalorder %s129, 0
    %s132 = sadd.s32 %s131, 1
    %s133 = scalar_select %p130, %s131, %s132
    %p136 = pneg %p130
    %p137 = scmp.eq.s32.totalorder %s11, 1
    %p138 = por %p136, %p137
    %p139 = scmp.ne.s32.totalorder %s131, %s134
    %p140 = scmp.eq.s32.totalorder %s11, 0
    %p141 = por %p139, %p140
    %p142 = scmp.ne.s32.totalorder %s131, %s134
    %p143 = scmp.eq.s32.totalorder %s16, 1
    %p144 = por %p142, %p143
    %p145 = scmp.ne.s32.totalorder %s134, %s135
    %p146 = scmp.eq.s32.totalorder %s16, 0
    %p147 = por %p145, %p146
    %p148 = scmp.ne.s32.totalorder %s134, %s135
    %p149 = scmp.eq.s32.totalorder %s17, 1
    %p150 = por %p148, %p149
    %p152 = scmp.ne.s32.totalorder %s135, %s151
    %p153 = scmp.eq.s32.totalorder %s17, 0
    %p154 = por %p152, %p153
    %p155 = scmp.le.s32.totalorder 1, %s11
    %p156 = scmp.lt.s32.totalorder %s11, 3
    %p157 = pnand %p155, %p156
    %p158 = pneg %p157
    // Predicated region
    $region9: #{tpu_custom_call.1} parent=5 // pred_check
      _
    $region10: #{tpu_custom_call.1} parent=5 // pred_check_branch
      %160 = sbr.rel (%p157) target = $region12
    $region11: #{tpu_custom_call.1} parent=5 // pred_region
      %s161 = ssub.s32 %s11, 1
      // Predicated region
      $region13: #{tpu_custom_call.1} parent=11 // pred_check
        %p162 = pneg %p58
      $region14: #{tpu_custom_call.1} parent=11 // pred_check_branch
        %164 = sbr.rel (%p162) target = $region16
      $region15: #{tpu_custom_call.1} parent=11 // pred_region
        _
      $region16: #{tpu_custom_call.1} parent=11 // pred_fallthru
        _
      // Predicated region
      $region17: #{tpu_custom_call.1} parent=11 // pred_check
        %p165 = pneg %p79
      $region18: #{tpu_custom_call.1} parent=11 // pred_check_branch
        %167 = sbr.rel (%p165) target = $region20
      $region19: #{tpu_custom_call.1} parent=11 // pred_region
        _
      $region20: #{tpu_custom_call.1} parent=11 // pred_fallthru
        _
      // Predicated region
      $region21: #{tpu_custom_call.1} parent=11 // pred_check
        %p168 = pneg %p100
      $region22: #{tpu_custom_call.1} parent=11 // pred_check_branch
        %170 = sbr.rel (%p168) target = $region24
      $region23: #{tpu_custom_call.1} parent=11 // pred_region
        _
      $region24: #{tpu_custom_call.1} parent=11 // pred_fallthru
        _
      // Predicated region
      $region25: #{tpu_custom_call.1} parent=11 // pred_check
        %p171 = pneg %p121
      $region26: #{tpu_custom_call.1} parent=11 // pred_check_branch
        %173 = sbr.rel (%p171) target = $region28
      $region27: #{tpu_custom_call.1} parent=11 // pred_region
        _
      $region28: #{tpu_custom_call.1} parent=11 // pred_fallthru
        _
    $region12: #{tpu_custom_call.1} parent=5 // pred_fallthru
      _
    %p174 = scmp.lt.s32.totalorder %s11, 2
    // Predicated region
    $region29: #{tpu_custom_call.1} parent=5 // pred_check
      %p175 = pneg %p174
    $region30: #{tpu_custom_call.1} parent=5 // pred_check_branch
      %177 = sbr.rel (%p175) target = $region32
    $region31: #{tpu_custom_call.1} parent=5 // pred_region
      // Predicated region
      $region33: #{tpu_custom_call.1} parent=31 // pred_check
        %p178 = pneg %p31
      $region34: #{tpu_custom_call.1} parent=31 // pred_check_branch
        %180 = sbr.rel (%p178) target = $region36
      $region35: #{tpu_custom_call.1} parent=31 // pred_region
        %p181 = scmp.lt.s32.totalorder %s11, 1
        %s182 = scalar_select %p181, %s11, 1
        %s183 = smul.addr %s182, 32
        %s184 = smul.addr %s183, 8
        %s185 = scalar_lea.vmem %s0, %s184
      $region36: #{tpu_custom_call.1} parent=31 // pred_fallthru
        _
    $region32: #{tpu_custom_call.1} parent=5 // pred_fallthru
      _
    %p186 = scmp.le.s32.totalorder 1, %s11
    %p187 = scmp.lt.s32.totalorder %s11, 3
    %p188 = pnand %p186, %p187
    %p189 = pneg %p188
    // Predicated region
    $region37: #{tpu_custom_call.1} parent=5 // pred_check
      _
    $region38: #{tpu_custom_call.1} parent=5 // pred_check_branch
      %191 = sbr.rel (%p188) target = $region40
    $region39: #{tpu_custom_call.1} parent=5 // pred_region
      %s192 = ssub.s32 %s11, 1
      %p193 = scmp.lt.s32.totalorder %s16, 1
      %s194 = scalar_select %p193, %s16, 1
      %s195 = smul.addr %s194, 32
      %s196 = smul.addr %s195, 8
      %s197 = scalar_lea.vmem %s0, %s196
      %p198 = pneg %p37
      %p199 = pneg %p34
      %p200 = pneg %p58
      %p201 = pneg %p55
      %p202 = pneg %p79
      %p203 = pneg %p76
      %p204 = pneg %p100
      %p205 = pneg %p97
      %p206 = pneg %p121
      %p207 = pneg %p118
      %p208 = pneg %p147
      %p209 = pneg %p144
      %p210 = scmp.lt.s32.totalorder %s16, 1
      %s211 = scalar_select %p210, %s16, 1
      %s212 = smul.addr %s211, 32
      %s213 = smul.addr %s212, 8
      %s214 = scalar_lea.vmem %s5, %s213
      %p215 = scmp.lt.s32.totalorder %s16, 1
      %s216 = scalar_select %p215, %s16, 1
      %s217 = smul.addr %s216, 32
      %s218 = smul.addr %s217, 8
      %s219 = scalar_lea.vmem %s0, %s218
      %p220 = scmp.lt.s32.totalorder %s16, 1
      %s221 = scalar_select %p220, %s16, 1
      %s222 = smul.addr %s221, 32
      %s223 = smul.addr %s222, 8
      %s224 = scalar_lea.vmem %s5, %s223
      %v225 = vld [vmem:[%s1] sm:$0x1]
      %v226 = vld [vmem:[%s2] sm:$0xff]
      %v227 = vld [vmem:[%s2 + $0x8] sm:$0xff]
      %v228 = vld [vmem:[%s2 + $0x10] sm:$0xff]
      %v229 = vld [vmem:[%s2 + $0x18] sm:$0xff]
      %v230 = vld [vmem:[%s2 + $0x20] sm:$0xff]
      %v231 = vld [vmem:[%s2 + $0x28] sm:$0xff]
      %v232 = vld [vmem:[%s2 + $0x30] sm:$0xff]
      %v233 = vld [vmem:[%s2 + $0x38] sm:$0xff]
      %v234 = vld [vmem:[%s2 + $0x40] sm:$0xff]
      %v235 = vld [vmem:[%s2 + $0x48] sm:$0xff]
      %v236 = vld [vmem:[%s2 + $0x50] sm:$0xff]
      %v237 = vld [vmem:[%s2 + $0x58] sm:$0xff]
      %v238 = vld [vmem:[%s2 + $0x60] sm:$0xff]
      %v239 = vld [vmem:[%s2 + $0x68] sm:$0xff]
      %v240 = vld [vmem:[%s2 + $0x70] sm:$0xff]
      %v241 = vld [vmem:[%s2 + $0x78] sm:$0xff]
      %v242 = vld [vmem:[%s2 + $0x80] sm:$0xff]
      %v243 = vld [vmem:[%s2 + $0x88] sm:$0xff]
      %v244 = vld [vmem:[%s2 + $0x90] sm:$0xff]
      %v245 = vld [vmem:[%s2 + $0x98] sm:$0xff]
      %v246 = vld [vmem:[%s2 + $0xa0] sm:$0xff]
      %v247 = vld [vmem:[%s2 + $0xa8] sm:$0xff]
      %v248 = vld [vmem:[%s2 + $0xb0] sm:$0xff]
      %v249 = vld [vmem:[%s2 + $0xb8] sm:$0xff]
      %v250 = vld [vmem:[%s2 + $0xc0] sm:$0xff]
      %v251 = vld [vmem:[%s2 + $0xc8] sm:$0xff]
      %v252 = vld [vmem:[%s2 + $0xd0] sm:$0xff]
      %v253 = vld [vmem:[%s2 + $0xd8] sm:$0xff]
      %v254 = vld [vmem:[%s2 + $0xe0] sm:$0xff]
      %v255 = vld [vmem:[%s2 + $0xe8] sm:$0xff]
      %v256 = vld [vmem:[%s2 + $0xf0] sm:$0xff]
      %v257 = vld [vmem:[%s2 + $0xf8] sm:$0xff]
      %v258 = vld [vmem:[%s2 + $0x100] sm:$0xff]
      %v259 = vld [vmem:[%s2 + $0x108] sm:$0xff]
      %v260 = vld [vmem:[%s2 + $0x110] sm:$0xff]
      %v261 = vld [vmem:[%s2 + $0x118] sm:$0xff]
      %v262 = vld [vmem:[%s3] sm:$0xff]
      %v263 = vld [vmem:[%s3 + $0x8] sm:$0xff]
      %v264 = vld [vmem:[%s3 + $0x10] sm:$0xff]
      %v265 = vld [vmem:[%s3 + $0x18] sm:$0xff]
      %v266 = vld [vmem:[%s3 + $0x20] sm:$0xff]
      %v267 = vld [vmem:[%s3 + $0x28] sm:$0xff]
      %v268 = vld [vmem:[%s3 + $0x30] sm:$0xff]
      %v269 = vld [vmem:[%s3 + $0x38] sm:$0xff]
      %v270 = vld [vmem:[%s3 + $0x40] sm:$0xff]
      %v271 = vld [vmem:[%s3 + $0x48] sm:$0xff]
      %v272 = vld [vmem:[%s3 + $0x50] sm:$0xff]
      %v273 = vld [vmem:[%s3 + $0x58] sm:$0xff]
      %v274 = vld [vmem:[%s3 + $0x60] sm:$0xff]
      %v275 = vld [vmem:[%s3 + $0x68] sm:$0xff]
      %v276 = vld [vmem:[%s3 + $0x70] sm:$0xff]
      %v277 = vld [vmem:[%s3 + $0x78] sm:$0xff]
      %v278 = vld [vmem:[%s3 + $0x80] sm:$0xff]
      %v279 = vld [vmem:[%s3 + $0x88] sm:$0xff]
      %v280 = vld [vmem:[%s3 + $0x90] sm:$0xff]
      %v281 = vld [vmem:[%s3 + $0x98] sm:$0xff]
      %v282 = vld [vmem:[%s3 + $0xa0] sm:$0xff]
      %v283 = vld [vmem:[%s3 + $0xa8] sm:$0xff]
      %v284 = vld [vmem:[%s3 + $0xb0] sm:$0xff]
      %v285 = vld [vmem:[%s3 + $0xb8] sm:$0xff]
      %v286 = vld [vmem:[%s3 + $0xc0] sm:$0xff]
      %v287 = vld [vmem:[%s3 + $0xc8] sm:$0xff]
      %v288 = vld [vmem:[%s3 + $0xd0] sm:$0xff]
      %v289 = vld [vmem:[%s3 + $0xd8] sm:$0xff]
      %v290 = vld [vmem:[%s3 + $0xe0] sm:$0xff]
      %v291 = vld [vmem:[%s3 + $0xe8] sm:$0xff]
      %v292 = vld [vmem:[%s3 + $0xf0] sm:$0xff]
      %v293 = vld [vmem:[%s3 + $0xf8] sm:$0xff]
      %v294 = vld [vmem:[%s4] sm:$0xff]
      %v295 = vld [vmem:[%s4 + $0x8] sm:$0xff]
      %v296 = vld [vmem:[%s4 + $0x10] sm:$0xff]
      %v297 = vld [vmem:[%s4 + $0x18] sm:$0xff]
      %v298 = vld [vmem:[%s4 + $0x20] sm:$0xff]
      %v299 = vld [vmem:[%s4 + $0x28] sm:$0xff]
      %v300 = vld [vmem:[%s4 + $0x30] sm:$0xff]
      %v301 = vld [vmem:[%s4 + $0x38] sm:$0xff]
      %v302 = vld [vmem:[%s4 + $0x40] sm:$0xff]
      %v303 = vld [vmem:[%s4 + $0x48] sm:$0xff]
      %v304 = vld [vmem:[%s4 + $0x50] sm:$0xff]
      %v305 = vld [vmem:[%s4 + $0x58] sm:$0xff]
      %v306 = vld [vmem:[%s4 + $0x60] sm:$0xff]
      %v307 = vld [vmem:[%s4 + $0x68] sm:$0xff]
      %v308 = vld [vmem:[%s4 + $0x70] sm:$0xff]
      %v309 = vld [vmem:[%s4 + $0x78] sm:$0xff]
      %v310 = vld [vmem:[%s4 + $0x80] sm:$0xff]
      %v311 = vld [vmem:[%s4 + $0x88] sm:$0xff]
      %v312 = vld [vmem:[%s4 + $0x90] sm:$0xff]
      %v313 = vld [vmem:[%s4 + $0x98] sm:$0xff]
      %v314 = vld [vmem:[%s4 + $0xa0] sm:$0xff]
      %v315 = vld [vmem:[%s4 + $0xa8] sm:$0xff]
      %v316 = vld [vmem:[%s4 + $0xb0] sm:$0xff]
      %v317 = vld [vmem:[%s4 + $0xb8] sm:$0xff]
      %v318 = vld [vmem:[%s4 + $0xc0] sm:$0xff]
      %v319 = vld [vmem:[%s4 + $0xc8] sm:$0xff]
      %v320 = vld [vmem:[%s4 + $0xd0] sm:$0xff]
      %v321 = vld [vmem:[%s4 + $0xd8] sm:$0xff]
      %v322 = vld [vmem:[%s4 + $0xe0] sm:$0xff]
      %v323 = vld [vmem:[%s4 + $0xe8] sm:$0xff]
      %v324 = vld [vmem:[%s4 + $0xf0] sm:$0xff]
      %v325 = vld [vmem:[%s4 + $0xf8] sm:$0xff]
      %v326 = vld [vmem:[%s219] sm:$0xff]
      %v327 = vld [vmem:[%s219 + $0x8] sm:$0xff]
      %v328 = vld [vmem:[%s219 + $0x10] sm:$0xff]
      %v329 = vld [vmem:[%s219 + $0x18] sm:$0xff]
      %v330 = vld [vmem:[%s219 + $0x20] sm:$0xff]
      %v331 = vld [vmem:[%s219 + $0x28] sm:$0xff]
      %v332 = vld [vmem:[%s219 + $0x30] sm:$0xff]
      %v333 = vld [vmem:[%s219 + $0x38] sm:$0xff]
      %v334 = vld [vmem:[%s219 + $0x40] sm:$0xff]
      %v335 = vld [vmem:[%s219 + $0x48] sm:$0xff]
      %v336 = vld [vmem:[%s219 + $0x50] sm:$0xff]
      %v337 = vld [vmem:[%s219 + $0x58] sm:$0xff]
      %v338 = vld [vmem:[%s219 + $0x60] sm:$0xff]
      %v339 = vld [vmem:[%s219 + $0x68] sm:$0xff]
      %v340 = vld [vmem:[%s219 + $0x70] sm:$0xff]
      %v341 = vld [vmem:[%s219 + $0x78] sm:$0xff]
      %v342 = vld [vmem:[%s219 + $0x80] sm:$0xff]
      %v343 = vld [vmem:[%s219 + $0x88] sm:$0xff]
      %v344 = vld [vmem:[%s219 + $0x90] sm:$0xff]
      %v345 = vld [vmem:[%s219 + $0x98] sm:$0xff]
      %v346 = vld [vmem:[%s219 + $0xa0] sm:$0xff]
      %v347 = vld [vmem:[%s219 + $0xa8] sm:$0xff]
      %v348 = vld [vmem:[%s219 + $0xb0] sm:$0xff]
      %v349 = vld [vmem:[%s219 + $0xb8] sm:$0xff]
      %v350 = vld [vmem:[%s219 + $0xc0] sm:$0xff]
      %v351 = vld [vmem:[%s219 + $0xc8] sm:$0xff]
      %v352 = vld [vmem:[%s219 + $0xd0] sm:$0xff]
      %v353 = vld [vmem:[%s219 + $0xd8] sm:$0xff]
      %v354 = vld [vmem:[%s219 + $0xe0] sm:$0xff]
      %v355 = vld [vmem:[%s219 + $0xe8] sm:$0xff]
      %v356 = vld [vmem:[%s219 + $0xf0] sm:$0xff]
      %v357 = vld [vmem:[%s219 + $0xf8] sm:$0xff]
      %vm358 = vcmask 261120
      %359 = vst.msk [vmem:[#allocation2] sm:$0xff] %vm358, 0.0
      %360 = vst.msk [vmem:[#allocation2 + $0x8] sm:$0xff] %vm358, 0.0
      %361 = vst.msk [vmem:[#allocation2 + $0x10] sm:$0xff] %vm358, 0.0
      %362 = vst.msk [vmem:[#allocation2 + $0x118] sm:$0xff] %vm358, 0.0
      %363 = vst.msk [vmem:[#allocation2 + $0x120] sm:$0xff] %vm358, 0.0
      %vm364 = vcmask 253952
      %365 = vst.msk [vmem:[#allocation2 + $0x128] sm:$0x1] %vm364, 0.0
      %366 = vst.msk [vmem:[#allocation2 + $0x18] sm:$0xff] %vm358, %v326
      %367 = vst.msk [vmem:[#allocation2 + $0x20] sm:$0xff] %vm358, %v327
      %368 = vst.msk [vmem:[#allocation2 + $0x28] sm:$0xff] %vm358, %v328
      %369 = vst.msk [vmem:[#allocation2 + $0x30] sm:$0xff] %vm358, %v329
      %370 = vst.msk [vmem:[#allocation2 + $0x38] sm:$0xff] %vm358, %v330
      %371 = vst.msk [vmem:[#allocation2 + $0x40] sm:$0xff] %vm358, %v331
      %372 = vst.msk [vmem:[#allocation2 + $0x48] sm:$0xff] %vm358, %v332
      %373 = vst.msk [vmem:[#allocation2 + $0x50] sm:$0xff] %vm358, %v333
      %374 = vst.msk [vmem:[#allocation2 + $0x58] sm:$0xff] %vm358, %v334
      %375 = vst.msk [vmem:[#allocation2 + $0x60] sm:$0xff] %vm358, %v335
      %376 = vst.msk [vmem:[#allocation2 + $0x68] sm:$0xff] %vm358, %v336
      %377 = vst.msk [vmem:[#allocation2 + $0x70] sm:$0xff] %vm358, %v337
      %378 = vst.msk [vmem:[#allocation2 + $0x78] sm:$0xff] %vm358, %v338
      %379 = vst.msk [vmem:[#allocation2 + $0x80] sm:$0xff] %vm358, %v339
      %380 = vst.msk [vmem:[#allocation2 + $0x88] sm:$0xff] %vm358, %v340
      %381 = vst.msk [vmem:[#allocation2 + $0x90] sm:$0xff] %vm358, %v341
      %382 = vst.msk [vmem:[#allocation2 + $0x98] sm:$0xff] %vm358, %v342
      %383 = vst.msk [vmem:[#allocation2 + $0xa0] sm:$0xff] %vm358, %v343
      %384 = vst.msk [vmem:[#allocation2 + $0xa8] sm:$0xff] %vm358, %v344
      %385 = vst.msk [vmem:[#allocation2 + $0xb0] sm:$0xff] %vm358, %v345
      %386 = vst.msk [vmem:[#allocation2 + $0xb8] sm:$0xff] %vm358, %v346
      %387 = vst.msk [vmem:[#allocation2 + $0xc0] sm:$0xff] %vm358, %v347
      %388 = vst.msk [vmem:[#allocation2 + $0xc8] sm:$0xff] %vm358, %v348
      %389 = vst.msk [vmem:[#allocation2 + $0xd0] sm:$0xff] %vm358, %v349
      %390 = vst.msk [vmem:[#allocation2 + $0xd8] sm:$0xff] %vm358, %v350
      %391 = vst.msk [vmem:[#allocation2 + $0xe0] sm:$0xff] %vm358, %v351
      %392 = vst.msk [vmem:[#allocation2 + $0xe8] sm:$0xff] %vm358, %v352
      %393 = vst.msk [vmem:[#allocation2 + $0xf0] sm:$0xff] %vm358, %v353
      %394 = vst.msk [vmem:[#allocation2 + $0xf8] sm:$0xff] %vm358, %v354
      %395 = vst.msk [vmem:[#allocation2 + $0x100] sm:$0xff] %vm358, %v355
      %396 = vst.msk [vmem:[#allocation2 + $0x108] sm:$0xff] %vm358, %v356
      %397 = vst.msk [vmem:[#allocation2 + $0x110] sm:$0xff] %vm358, %v357
      %v398 = vld [vmem:[#allocation2 + $0x7] sm:$0xff]
      %v399 = vld [vmem:[#allocation2 + $0xf] sm:$0xff]
      %v400 = vld [vmem:[#allocation2 + $0x17] sm:$0xff]
      %v401 = vld [vmem:[#allocation2 + $0x1f] sm:$0xff]
      %v402 = vld [vmem:[#allocation2 + $0x27] sm:$0xff]
      %v403 = vld [vmem:[#allocation2 + $0x2f] sm:$0xff]
      %v404 = vld [vmem:[#allocation2 + $0x37] sm:$0xff]
      %v405 = vld [vmem:[#allocation2 + $0x3f] sm:$0xff]
      %v406 = vld [vmem:[#allocation2 + $0x47] sm:$0xff]
      %v407 = vld [vmem:[#allocation2 + $0x4f] sm:$0xff]
      %v408 = vld [vmem:[#allocation2 + $0x57] sm:$0xff]
      %v409 = vld [vmem:[#allocation2 + $0x5f] sm:$0xff]
      %v410 = vld [vmem:[#allocation2 + $0x67] sm:$0xff]
      %v411 = vld [vmem:[#allocation2 + $0x6f] sm:$0xff]
      %v412 = vld [vmem:[#allocation2 + $0x77] sm:$0xff]
      %v413 = vld [vmem:[#allocation2 + $0x7f] sm:$0xff]
      %v414 = vld [vmem:[#allocation2 + $0x87] sm:$0xff]
      %v415 = vld [vmem:[#allocation2 + $0x8f] sm:$0xff]
      %v416 = vld [vmem:[#allocation2 + $0x97] sm:$0xff]
      %v417 = vld [vmem:[#allocation2 + $0x9f] sm:$0xff]
      %v418 = vld [vmem:[#allocation2 + $0xa7] sm:$0xff]
      %v419 = vld [vmem:[#allocation2 + $0xaf] sm:$0xff]
      %v420 = vld [vmem:[#allocation2 + $0xb7] sm:$0xff]
      %v421 = vld [vmem:[#allocation2 + $0xbf] sm:$0xff]
      %v422 = vld [vmem:[#allocation2 + $0xc7] sm:$0xff]
      %v423 = vld [vmem:[#allocation2 + $0xcf] sm:$0xff]
      %v424 = vld [vmem:[#allocation2 + $0xd7] sm:$0xff]
      %v425 = vld [vmem:[#allocation2 + $0xdf] sm:$0xff]
      %v426 = vld [vmem:[#allocation2 + $0xe7] sm:$0xff]
      %v427 = vld [vmem:[#allocation2 + $0xef] sm:$0xff]
      %v428 = vld [vmem:[#allocation2 + $0xf7] sm:$0xff]
      %v429 = vld [vmem:[#allocation2 + $0xff] sm:$0xff]
      %431 = vset.pattern.permute.xlu0 0
      %432 = vperm.xlu0 %431, %v262
      %v433 = vpop.permute.xlu0 %432
      %436 = vset.pattern.permute.xlu0 0
      %437 = vperm.xlu0 %436, %v263
      %v438 = vpop.permute.xlu0 %437
      %441 = vset.pattern.permute.xlu0 0
      %442 = vperm.xlu0 %441, %v264
      %v443 = vpop.permute.xlu0 %442
      %446 = vset.pattern.permute.xlu0 0
      %447 = vperm.xlu0 %446, %v265
      %v448 = vpop.permute.xlu0 %447
      %451 = vset.pattern.permute.xlu0 0
      %452 = vperm.xlu0 %451, %v266
      %v453 = vpop.permute.xlu0 %452
      %456 = vset.pattern.permute.xlu0 0
      %457 = vperm.xlu0 %456, %v267
      %v458 = vpop.permute.xlu0 %457
      %461 = vset.pattern.permute.xlu0 0
      %462 = vperm.xlu0 %461, %v268
      %v463 = vpop.permute.xlu0 %462
      %466 = vset.pattern.permute.xlu0 0
      %467 = vperm.xlu0 %466, %v269
      %v468 = vpop.permute.xlu0 %467
      %471 = vset.pattern.permute.xlu0 0
      %472 = vperm.xlu0 %471, %v270
      %v473 = vpop.permute.xlu0 %472
      %476 = vset.pattern.permute.xlu0 0
      %477 = vperm.xlu0 %476, %v271
      %v478 = vpop.permute.xlu0 %477
      %481 = vset.pattern.permute.xlu0 0
      %482 = vperm.xlu0 %481, %v272
      %v483 = vpop.permute.xlu0 %482
      %486 = vset.pattern.permute.xlu0 0
      %487 = vperm.xlu0 %486, %v273
      %v488 = vpop.permute.xlu0 %487
      %491 = vset.pattern.permute.xlu0 0
      %492 = vperm.xlu0 %491, %v274
      %v493 = vpop.permute.xlu0 %492
      %496 = vset.pattern.permute.xlu0 0
      %497 = vperm.xlu0 %496, %v275
      %v498 = vpop.permute.xlu0 %497
      %501 = vset.pattern.permute.xlu0 0
      %502 = vperm.xlu0 %501, %v276
      %v503 = vpop.permute.xlu0 %502
      %506 = vset.pattern.permute.xlu0 0
      %507 = vperm.xlu0 %506, %v277
      %v508 = vpop.permute.xlu0 %507
      %511 = vset.pattern.permute.xlu0 0
      %512 = vperm.xlu0 %511, %v278
      %v513 = vpop.permute.xlu0 %512
      %516 = vset.pattern.permute.xlu0 0
      %517 = vperm.xlu0 %516, %v279
      %v518 = vpop.permute.xlu0 %517
      %521 = vset.pattern.permute.xlu0 0
      %522 = vperm.xlu0 %521, %v280
      %v523 = vpop.permute.xlu0 %522
      %526 = vset.pattern.permute.xlu0 0
      %527 = vperm.xlu0 %526, %v281
      %v528 = vpop.permute.xlu0 %527
      %531 = vset.pattern.permute.xlu0 0
      %532 = vperm.xlu0 %531, %v282
      %v533 = vpop.permute.xlu0 %532
      %536 = vset.pattern.permute.xlu0 0
      %537 = vperm.xlu0 %536, %v283
      %v538 = vpop.permute.xlu0 %537
      %541 = vset.pattern.permute.xlu0 0
      %542 = vperm.xlu0 %541, %v284
      %v543 = vpop.permute.xlu0 %542
      %546 = vset.pattern.permute.xlu0 0
      %547 = vperm.xlu0 %546, %v285
      %v548 = vpop.permute.xlu0 %547
      %551 = vset.pattern.permute.xlu0 0
      %552 = vperm.xlu0 %551, %v286
      %v553 = vpop.permute.xlu0 %552
      %556 = vset.pattern.permute.xlu0 0
      %557 = vperm.xlu0 %556, %v287
      %v558 = vpop.permute.xlu0 %557
      %561 = vset.pattern.permute.xlu0 0
      %562 = vperm.xlu0 %561, %v288
      %v563 = vpop.permute.xlu0 %562
      %566 = vset.pattern.permute.xlu0 0
      %567 = vperm.xlu0 %566, %v289
      %v568 = vpop.permute.xlu0 %567
      %571 = vset.pattern.permute.xlu0 0
      %572 = vperm.xlu0 %571, %v290
      %v573 = vpop.permute.xlu0 %572
      %576 = vset.pattern.permute.xlu0 0
      %577 = vperm.xlu0 %576, %v291
      %v578 = vpop.permute.xlu0 %577
      %581 = vset.pattern.permute.xlu0 0
      %582 = vperm.xlu0 %581, %v292
      %v583 = vpop.permute.xlu0 %582
      %586 = vset.pattern.permute.xlu0 0
      %587 = vperm.xlu0 %586, %v293
      %v588 = vpop.permute.xlu0 %587
      %v590 = vmul.f32 %v398, %v433
      %v591 = vmul.f32 %v399, %v438
      %v592 = vmul.f32 %v400, %v443
      %v593 = vmul.f32 %v401, %v448
      %v594 = vmul.f32 %v402, %v453
      %v595 = vmul.f32 %v403, %v458
      %v596 = vmul.f32 %v404, %v463
      %v597 = vmul.f32 %v405, %v468
      %v598 = vmul.f32 %v406, %v473
      %v599 = vmul.f32 %v407, %v478
      %v600 = vmul.f32 %v408, %v483
      %v601 = vmul.f32 %v409, %v488
      %v602 = vmul.f32 %v410, %v493
      %v603 = vmul.f32 %v411, %v498
      %v604 = vmul.f32 %v412, %v503
      %v605 = vmul.f32 %v413, %v508
      %v606 = vmul.f32 %v414, %v513
      %v607 = vmul.f32 %v415, %v518
      %v608 = vmul.f32 %v416, %v523
      %v609 = vmul.f32 %v417, %v528
      %v610 = vmul.f32 %v418, %v533
      %v611 = vmul.f32 %v419, %v538
      %v612 = vmul.f32 %v420, %v543
      %v613 = vmul.f32 %v421, %v548
      %v614 = vmul.f32 %v422, %v553
      %v615 = vmul.f32 %v423, %v558
      %v616 = vmul.f32 %v424, %v563
      %v617 = vmul.f32 %v425, %v568
      %v618 = vmul.f32 %v426, %v573
      %v619 = vmul.f32 %v427, %v578
      %v620 = vmul.f32 %v428, %v583
      %v621 = vmul.f32 %v429, %v588
      %622 = vst.msk [vmem:[#allocation3] sm:$0xff] %vm358, %v590
      %623 = vst.msk [vmem:[#allocation3 + $0x18] sm:$0xff] %vm358, %v591
      %624 = vst.msk [vmem:[#allocation3 + $0x30] sm:$0xff] %vm358, %v592
      %625 = vst.msk [vmem:[#allocation3 + $0x48] sm:$0xff] %vm358, %v593
      %626 = vst.msk [vmem:[#allocation3 + $0x60] sm:$0xff] %vm358, %v594
      %627 = vst.msk [vmem:[#allocation3 + $0x78] sm:$0xff] %vm358, %v595
      %628 = vst.msk [vmem:[#allocation3 + $0x90] sm:$0xff] %vm358, %v596
      %629 = vst.msk [vmem:[#allocation3 + $0xa8] sm:$0xff] %vm358, %v597
      %630 = vst.msk [vmem:[#allocation3 + $0xc0] sm:$0xff] %vm358, %v598
      %631 = vst.msk [vmem:[#allocation3 + $0xd8] sm:$0xff] %vm358, %v599
      %632 = vst.msk [vmem:[#allocation3 + $0xf0] sm:$0xff] %vm358, %v600
      %633 = vst.msk [vmem:[#allocation3 + $0x108] sm:$0xff] %vm358, %v601
      %634 = vst.msk [vmem:[#allocation3 + $0x120] sm:$0xff] %vm358, %v602
      %635 = vst.msk [vmem:[#allocation3 + $0x138] sm:$0xff] %vm358, %v603
      %636 = vst.msk [vmem:[#allocation3 + $0x150] sm:$0xff] %vm358, %v604
      %637 = vst.msk [vmem:[#allocation3 + $0x168] sm:$0xff] %vm358, %v605
      %638 = vst.msk [vmem:[#allocation3 + $0x180] sm:$0xff] %vm358, %v606
      %639 = vst.msk [vmem:[#allocation3 + $0x198] sm:$0xff] %vm358, %v607
      %640 = vst.msk [vmem:[#allocation3 + $0x1b0] sm:$0xff] %vm358, %v608
      %641 = vst.msk [vmem:[#allocation3 + $0x1c8] sm:$0xff] %vm358, %v609
      %642 = vst.msk [vmem:[#allocation3 + $0x1e0] sm:$0xff] %vm358, %v610
      %643 = vst.msk [vmem:[#allocation3 + $0x1f8] sm:$0xff] %vm358, %v611
      %644 = vst.msk [vmem:[#allocation3 + $0x210] sm:$0xff] %vm358, %v612
      %645 = vst.msk [vmem:[#allocation3 + $0x228] sm:$0xff] %vm358, %v613
      %646 = vst.msk [vmem:[#allocation3 + $0x240] sm:$0xff] %vm358, %v614
      %647 = vst.msk [vmem:[#allocation3 + $0x258] sm:$0xff] %vm358, %v615
      %648 = vst.msk [vmem:[#allocation3 + $0x270] sm:$0xff] %vm358, %v616
      %649 = vst.msk [vmem:[#allocation3 + $0x288] sm:$0xff] %vm358, %v617
      %650 = vst.msk [vmem:[#allocation3 + $0x2a0] sm:$0xff] %vm358, %v618
      %651 = vst.msk [vmem:[#allocation3 + $0x2b8] sm:$0xff] %vm358, %v619
      %652 = vst.msk [vmem:[#allocation3 + $0x2d0] sm:$0xff] %vm358, %v620
      %653 = vst.msk [vmem:[#allocation3 + $0x2e8] sm:$0xff] %vm358, %v621
      %v654 = vld [vmem:[#allocation2 + $0x8] sm:$0xff]
      %v655 = vld [vmem:[#allocation2 + $0x10] sm:$0xff]
      %v656 = vld [vmem:[#allocation2 + $0x18] sm:$0xff]
      %v657 = vld [vmem:[#allocation2 + $0x20] sm:$0xff]
      %v658 = vld [vmem:[#allocation2 + $0x28] sm:$0xff]
      %v659 = vld [vmem:[#allocation2 + $0x30] sm:$0xff]
      %v660 = vld [vmem:[#allocation2 + $0x38] sm:$0xff]
      %v661 = vld [vmem:[#allocation2 + $0x40] sm:$0xff]
      %v662 = vld [vmem:[#allocation2 + $0x48] sm:$0xff]
      %v663 = vld [vmem:[#allocation2 + $0x50] sm:$0xff]
      %v664 = vld [vmem:[#allocation2 + $0x58] sm:$0xff]
      %v665 = vld [vmem:[#allocation2 + $0x60] sm:$0xff]
      %v666 = vld [vmem:[#allocation2 + $0x68] sm:$0xff]
      %v667 = vld [vmem:[#allocation2 + $0x70] sm:$0xff]
      %v668 = vld [vmem:[#allocation2 + $0x78] sm:$0xff]
      %v669 = vld [vmem:[#allocation2 + $0x80] sm:$0xff]
      %v670 = vld [vmem:[#allocation2 + $0x88] sm:$0xff]
      %v671 = vld [vmem:[#allocation2 + $0x90] sm:$0xff]
      %v672 = vld [vmem:[#allocation2 + $0x98] sm:$0xff]
      %v673 = vld [vmem:[#allocation2 + $0xa0] sm:$0xff]
      %v674 = vld [vmem:[#allocation2 + $0xa8] sm:$0xff]
      %v675 = vld [vmem:[#allocation2 + $0xb0] sm:$0xff]
      %v676 = vld [vmem:[#allocation2 + $0xb8] sm:$0xff]
      %v677 = vld [vmem:[#allocation2 + $0xc0] sm:$0xff]
      %v678 = vld [vmem:[#allocation2 + $0xc8] sm:$0xff]
      %v679 = vld [vmem:[#allocation2 + $0xd0] sm:$0xff]
      %v680 = vld [vmem:[#allocation2 + $0xd8] sm:$0xff]
      %v681 = vld [vmem:[#allocation2 + $0xe0] sm:$0xff]
      %v682 = vld [vmem:[#allocation2 + $0xe8] sm:$0xff]
      %v683 = vld [vmem:[#allocation2 + $0xf0] sm:$0xff]
      %v684 = vld [vmem:[#allocation2 + $0xf8] sm:$0xff]
      %v685 = vld [vmem:[#allocation2 + $0x100] sm:$0xff]
      %718 = vrot.lane.b32.xlu0 %v654, 32
      %v719 = vpop.permute.xlu0 %718
      %720 = vrot.lane.b32.xlu0 %v655, 32
      %v721 = vpop.permute.xlu0 %720
      %722 = vrot.lane.b32.xlu0 %v656, 32
      %v723 = vpop.permute.xlu0 %722
      %724 = vrot.lane.b32.xlu0 %v657, 32
      %v725 = vpop.permute.xlu0 %724
      %726 = vrot.lane.b32.xlu0 %v658, 32
      %v727 = vpop.permute.xlu0 %726
      %728 = vrot.lane.b32.xlu0 %v659, 32
      %v729 = vpop.permute.xlu0 %728
      %730 = vrot.lane.b32.xlu0 %v660, 32
      %v731 = vpop.permute.xlu0 %730
      %732 = vrot.lane.b32.xlu0 %v661, 32
      %v733 = vpop.permute.xlu0 %732
      %734 = vrot.lane.b32.xlu0 %v662, 32
      %v735 = vpop.permute.xlu0 %734
      %736 = vrot.lane.b32.xlu0 %v663, 32
      %v737 = vpop.permute.xlu0 %736
      %738 = vrot.lane.b32.xlu0 %v664, 32
      %v739 = vpop.permute.xlu0 %738
      %740 = vrot.lane.b32.xlu0 %v665, 32
      %v741 = vpop.permute.xlu0 %740
      %742 = vrot.lane.b32.xlu0 %v666, 32
      %v743 = vpop.permute.xlu0 %742
      %744 = vrot.lane.b32.xlu0 %v667, 32
      %v745 = vpop.permute.xlu0 %744
      %746 = vrot.lane.b32.xlu0 %v668, 32
      %v747 = vpop.permute.xlu0 %746
      %748 = vrot.lane.b32.xlu0 %v669, 32
      %v749 = vpop.permute.xlu0 %748
      %750 = vrot.lane.b32.xlu0 %v670, 32
      %v751 = vpop.permute.xlu0 %750
      %752 = vrot.lane.b32.xlu0 %v671, 32
      %v753 = vpop.permute.xlu0 %752
      %754 = vrot.lane.b32.xlu0 %v672, 32
      %v755 = vpop.permute.xlu0 %754
      %756 = vrot.lane.b32.xlu0 %v673, 32
      %v757 = vpop.permute.xlu0 %756
      %758 = vrot.lane.b32.xlu0 %v674, 32
      %v759 = vpop.permute.xlu0 %758
      %760 = vrot.lane.b32.xlu0 %v675, 32
      %v761 = vpop.permute.xlu0 %760
      %762 = vrot.lane.b32.xlu0 %v676, 32
      %v763 = vpop.permute.xlu0 %762
      %764 = vrot.lane.b32.xlu0 %v677, 32
      %v765 = vpop.permute.xlu0 %764
      %766 = vrot.lane.b32.xlu0 %v678, 32
      %v767 = vpop.permute.xlu0 %766
      %768 = vrot.lane.b32.xlu0 %v679, 32
      %v769 = vpop.permute.xlu0 %768
      %770 = vrot.lane.b32.xlu0 %v680, 32
      %v771 = vpop.permute.xlu0 %770
      %772 = vrot.lane.b32.xlu0 %v681, 32
      %v773 = vpop.permute.xlu0 %772
      %774 = vrot.lane.b32.xlu0 %v682, 32
      %v775 = vpop.permute.xlu0 %774
      %776 = vrot.lane.b32.xlu0 %v683, 32
      %v777 = vpop.permute.xlu0 %776
      %778 = vrot.lane.b32.xlu0 %v684, 32
      %v779 = vpop.permute.xlu0 %778
      %780 = vrot.lane.b32.xlu0 %v685, 32
      %v781 = vpop.permute.xlu0 %780
      %vm814 = vcmask 523520
      %815 = vst.msk [vmem:[#allocation3] sm:$0xff] %vm814, %v719
      %816 = vst.msk [vmem:[#allocation3 + $0x18] sm:$0xff] %vm814, %v721
      %817 = vst.msk [vmem:[#allocation3 + $0x30] sm:$0xff] %vm814, %v723
      %818 = vst.msk [vmem:[#allocation3 + $0x48] sm:$0xff] %vm814, %v725
      %819 = vst.msk [vmem:[#allocation3 + $0x60] sm:$0xff] %vm814, %v727
      %820 = vst.msk [vmem:[#allocation3 + $0x78] sm:$0xff] %vm814, %v729
      %821 = vst.msk [vmem:[#allocation3 + $0x90] sm:$0xff] %vm814, %v731
      %822 = vst.msk [vmem:[#allocation3 + $0xa8] sm:$0xff] %vm814, %v733
      %823 = vst.msk [vmem:[#allocation3 + $0xc0] sm:$0xff] %vm814, %v735
      %824 = vst.msk [vmem:[#allocation3 + $0xd8] sm:$0xff] %vm814, %v737
      %825 = vst.msk [vmem:[#allocation3 + $0xf0] sm:$0xff] %vm814, %v739
      %826 = vst.msk [vmem:[#allocation3 + $0x108] sm:$0xff] %vm814, %v741
      %827 = vst.msk [vmem:[#allocation3 + $0x120] sm:$0xff] %vm814, %v743
      %828 = vst.msk [vmem:[#allocation3 + $0x138] sm:$0xff] %vm814, %v745
      %829 = vst.msk [vmem:[#allocation3 + $0x150] sm:$0xff] %vm814, %v747
      %830 = vst.msk [vmem:[#allocation3 + $0x168] sm:$0xff] %vm814, %v749
      %831 = vst.msk [vmem:[#allocation3 + $0x180] sm:$0xff] %vm814, %v751
      %832 = vst.msk [vmem:[#allocation3 + $0x198] sm:$0xff] %vm814, %v753
      %833 = vst.msk [vmem:[#allocation3 + $0x1b0] sm:$0xff] %vm814, %v755
      %834 = vst.msk [vmem:[#allocation3 + $0x1c8] sm:$0xff] %vm814, %v757
      %835 = vst.msk [vmem:[#allocation3 + $0x1e0] sm:$0xff] %vm814, %v759
      %836 = vst.msk [vmem:[#allocation3 + $0x1f8] sm:$0xff] %vm814, %v761
      %837 = vst.msk [vmem:[#allocation3 + $0x210] sm:$0xff] %vm814, %v763
      %838 = vst.msk [vmem:[#allocation3 + $0x228] sm:$0xff] %vm814, %v765
      %839 = vst.msk [vmem:[#allocation3 + $0x240] sm:$0xff] %vm814, %v767
      %840 = vst.msk [vmem:[#allocation3 + $0x258] sm:$0xff] %vm814, %v769
      %841 = vst.msk [vmem:[#allocation3 + $0x270] sm:$0xff] %vm814, %v771
      %842 = vst.msk [vmem:[#allocation3 + $0x288] sm:$0xff] %vm814, %v773
      %843 = vst.msk [vmem:[#allocation3 + $0x2a0] sm:$0xff] %vm814, %v775
      %844 = vst.msk [vmem:[#allocation3 + $0x2b8] sm:$0xff] %vm814, %v777
      %845 = vst.msk [vmem:[#allocation3 + $0x2d0] sm:$0xff] %vm814, %v779
      %846 = vst.msk [vmem:[#allocation3 + $0x2e8] sm:$0xff] %vm814, %v781
      %v847 = vld [vmem:[#allocation2 + $0x9] sm:$0xff]
      %v848 = vld [vmem:[#allocation2 + $0x11] sm:$0xff]
      %v849 = vld [vmem:[#allocation2 + $0x19] sm:$0xff]
      %v850 = vld [vmem:[#allocation2 + $0x21] sm:$0xff]
      %v851 = vld [vmem:[#allocation2 + $0x29] sm:$0xff]
      %v852 = vld [vmem:[#allocation2 + $0x31] sm:$0xff]
      %v853 = vld [vmem:[#allocation2 + $0x39] sm:$0xff]
      %v854 = vld [vmem:[#allocation2 + $0x41] sm:$0xff]
      %v855 = vld [vmem:[#allocation2 + $0x49] sm:$0xff]
      %v856 = vld [vmem:[#allocation2 + $0x51] sm:$0xff]
      %v857 = vld [vmem:[#allocation2 + $0x59] sm:$0xff]
      %v858 = vld [vmem:[#allocation2 + $0x61] sm:$0xff]
      %v859 = vld [vmem:[#allocation2 + $0x69] sm:$0xff]
      %v860 = vld [vmem:[#allocation2 + $0x71] sm:$0xff]
      %v861 = vld [vmem:[#allocation2 + $0x79] sm:$0xff]
      %v862 = vld [vmem:[#allocation2 + $0x81] sm:$0xff]
      %v863 = vld [vmem:[#allocation2 + $0x89] sm:$0xff]
      %v864 = vld [vmem:[#allocation2 + $0x91] sm:$0xff]
      %v865 = vld [vmem:[#allocation2 + $0x99] sm:$0xff]
      %v866 = vld [vmem:[#allocation2 + $0xa1] sm:$0xff]
      %v867 = vld [vmem:[#allocation2 + $0xa9] sm:$0xff]
      %v868 = vld [vmem:[#allocation2 + $0xb1] sm:$0xff]
      %v869 = vld [vmem:[#allocation2 + $0xb9] sm:$0xff]
      %v870 = vld [vmem:[#allocation2 + $0xc1] sm:$0xff]
      %v871 = vld [vmem:[#allocation2 + $0xc9] sm:$0xff]
      %v872 = vld [vmem:[#allocation2 + $0xd1] sm:$0xff]
      %v873 = vld [vmem:[#allocation2 + $0xd9] sm:$0xff]
      %v874 = vld [vmem:[#allocation2 + $0xe1] sm:$0xff]
      %v875 = vld [vmem:[#allocation2 + $0xe9] sm:$0xff]
      %v876 = vld [vmem:[#allocation2 + $0xf1] sm:$0xff]
      %v877 = vld [vmem:[#allocation2 + $0xf9] sm:$0xff]
      %v878 = vld [vmem:[#allocation2 + $0x101] sm:$0xff]
      %880 = vset.pattern.permute.xlu0 0
      %881 = vperm.xlu0 %880, %v294
      %v882 = vpop.permute.xlu0 %881
      %885 = vset.pattern.permute.xlu0 0
      %886 = vperm.xlu0 %885, %v295
      %v887 = vpop.permute.xlu0 %886
      %890 = vset.pattern.permute.xlu0 0
      %891 = vperm.xlu0 %890, %v296
      %v892 = vpop.permute.xlu0 %891
      %895 = vset.pattern.permute.xlu0 0
      %896 = vperm.xlu0 %895, %v297
      %v897 = vpop.permute.xlu0 %896
      %900 = vset.pattern.permute.xlu0 0
      %901 = vperm.xlu0 %900, %v298
      %v902 = vpop.permute.xlu0 %901
      %905 = vset.pattern.permute.xlu0 0
      %906 = vperm.xlu0 %905, %v299
      %v907 = vpop.permute.xlu0 %906
      %910 = vset.pattern.permute.xlu0 0
      %911 = vperm.xlu0 %910, %v300
      %v912 = vpop.permute.xlu0 %911
      %915 = vset.pattern.permute.xlu0 0
      %916 = vperm.xlu0 %915, %v301
      %v917 = vpop.permute.xlu0 %916
      %920 = vset.pattern.permute.xlu0 0
      %921 = vperm.xlu0 %920, %v302
      %v922 = vpop.permute.xlu0 %921
      %925 = vset.pattern.permute.xlu0 0
      %926 = vperm.xlu0 %925, %v303
      %v927 = vpop.permute.xlu0 %926
      %930 = vset.pattern.permute.xlu0 0
      %931 = vperm.xlu0 %930, %v304
      %v932 = vpop.permute.xlu0 %931
      %935 = vset.pattern.permute.xlu0 0
      %936 = vperm.xlu0 %935, %v305
      %v937 = vpop.permute.xlu0 %936
      %940 = vset.pattern.permute.xlu0 0
      %941 = vperm.xlu0 %940, %v306
      %v942 = vpop.permute.xlu0 %941
      %945 = vset.pattern.permute.xlu0 0
      %946 = vperm.xlu0 %945, %v307
      %v947 = vpop.permute.xlu0 %946
      %950 = vset.pattern.permute.xlu0 0
      %951 = vperm.xlu0 %950, %v308
      %v952 = vpop.permute.xlu0 %951
      %955 = vset.pattern.permute.xlu0 0
      %956 = vperm.xlu0 %955, %v309
      %v957 = vpop.permute.xlu0 %956
      %960 = vset.pattern.permute.xlu0 0
      %961 = vperm.xlu0 %960, %v310
      %v962 = vpop.permute.xlu0 %961
      %965 = vset.pattern.permute.xlu0 0
      %966 = vperm.xlu0 %965, %v311
      %v967 = vpop.permute.xlu0 %966
      %970 = vset.pattern.permute.xlu0 0
      %971 = vperm.xlu0 %970, %v312
      %v972 = vpop.permute.xlu0 %971
      %975 = vset.pattern.permute.xlu0 0
      %976 = vperm.xlu0 %975, %v313
      %v977 = vpop.permute.xlu0 %976
      %980 = vset.pattern.permute.xlu0 0
      %981 = vperm.xlu0 %980, %v314
      %v982 = vpop.permute.xlu0 %981
      %985 = vset.pattern.permute.xlu0 0
      %986 = vperm.xlu0 %985, %v315
      %v987 = vpop.permute.xlu0 %986
      %990 = vset.pattern.permute.xlu0 0
      %991 = vperm.xlu0 %990, %v316
      %v992 = vpop.permute.xlu0 %991
      %995 = vset.pattern.permute.xlu0 0
      %996 = vperm.xlu0 %995, %v317
      %v997 = vpop.permute.xlu0 %996
      %1000 = vset.pattern.permute.xlu0 0
      %1001 = vperm.xlu0 %1000, %v318
      %v1002 = vpop.permute.xlu0 %1001
      %1005 = vset.pattern.permute.xlu0 0
      %1006 = vperm.xlu0 %1005, %v319
      %v1007 = vpop.permute.xlu0 %1006
      %1010 = vset.pattern.permute.xlu0 0
      %1011 = vperm.xlu0 %1010, %v320
      %v1012 = vpop.permute.xlu0 %1011
      %1015 = vset.pattern.permute.xlu0 0
      %1016 = vperm.xlu0 %1015, %v321
      %v1017 = vpop.permute.xlu0 %1016
      %1020 = vset.pattern.permute.xlu0 0
      %1021 = vperm.xlu0 %1020, %v322
      %v1022 = vpop.permute.xlu0 %1021
      %1025 = vset.pattern.permute.xlu0 0
      %1026 = vperm.xlu0 %1025, %v323
      %v1027 = vpop.permute.xlu0 %1026
      %1030 = vset.pattern.permute.xlu0 0
      %1031 = vperm.xlu0 %1030, %v324
      %v1032 = vpop.permute.xlu0 %1031
      %1035 = vset.pattern.permute.xlu0 0
      %1036 = vperm.xlu0 %1035, %v325
      %v1037 = vpop.permute.xlu0 %1036
      %v1039 = vmul.f32 %v847, %v882
      %v1040 = vmul.f32 %v848, %v887
      %v1041 = vmul.f32 %v849, %v892
      %v1042 = vmul.f32 %v850, %v897
      %v1043 = vmul.f32 %v851, %v902
      %v1044 = vmul.f32 %v852, %v907
      %v1045 = vmul.f32 %v853, %v912
      %v1046 = vmul.f32 %v854, %v917
      %v1047 = vmul.f32 %v855, %v922
      %v1048 = vmul.f32 %v856, %v927
      %v1049 = vmul.f32 %v857, %v932
      %v1050 = vmul.f32 %v858, %v937
      %v1051 = vmul.f32 %v859, %v942
      %v1052 = vmul.f32 %v860, %v947
      %v1053 = vmul.f32 %v861, %v952
      %v1054 = vmul.f32 %v862, %v957
      %v1055 = vmul.f32 %v863, %v962
      %v1056 = vmul.f32 %v864, %v967
      %v1057 = vmul.f32 %v865, %v972
      %v1058 = vmul.f32 %v866, %v977
      %v1059 = vmul.f32 %v867, %v982
      %v1060 = vmul.f32 %v868, %v987
      %v1061 = vmul.f32 %v869, %v992
      %v1062 = vmul.f32 %v870, %v997
      %v1063 = vmul.f32 %v871, %v1002
      %v1064 = vmul.f32 %v872, %v1007
      %v1065 = vmul.f32 %v873, %v1012
      %v1066 = vmul.f32 %v874, %v1017
      %v1067 = vmul.f32 %v875, %v1022
      %v1068 = vmul.f32 %v876, %v1027
      %v1069 = vmul.f32 %v877, %v1032
      %v1070 = vmul.f32 %v878, %v1037
      %1103 = vrot.lane.b32.xlu0 %v1039, 64
      %v1104 = vpop.permute.xlu0 %1103
      %1105 = vrot.lane.b32.xlu0 %v1040, 64
      %v1106 = vpop.permute.xlu0 %1105
      %1107 = vrot.lane.b32.xlu0 %v1041, 64
      %v1108 = vpop.permute.xlu0 %1107
      %1109 = vrot.lane.b32.xlu0 %v1042, 64
      %v1110 = vpop.permute.xlu0 %1109
      %1111 = vrot.lane.b32.xlu0 %v1043, 64
      %v1112 = vpop.permute.xlu0 %1111
      %1113 = vrot.lane.b32.xlu0 %v1044, 64
      %v1114 = vpop.permute.xlu0 %1113
      %1115 = vrot.lane.b32.xlu0 %v1045, 64
      %v1116 = vpop.permute.xlu0 %1115
      %1117 = vrot.lane.b32.xlu0 %v1046, 64
      %v1118 = vpop.permute.xlu0 %1117
      %1119 = vrot.lane.b32.xlu0 %v1047, 64
      %v1120 = vpop.permute.xlu0 %1119
      %1121 = vrot.lane.b32.xlu0 %v1048, 64
      %v1122 = vpop.permute.xlu0 %1121
      %1123 = vrot.lane.b32.xlu0 %v1049, 64
      %v1124 = vpop.permute.xlu0 %1123
      %1125 = vrot.lane.b32.xlu0 %v1050, 64
      %v1126 = vpop.permute.xlu0 %1125
      %1127 = vrot.lane.b32.xlu0 %v1051, 64
      %v1128 = vpop.permute.xlu0 %1127
      %1129 = vrot.lane.b32.xlu0 %v1052, 64
      %v1130 = vpop.permute.xlu0 %1129
      %1131 = vrot.lane.b32.xlu0 %v1053, 64
      %v1132 = vpop.permute.xlu0 %1131
      %1133 = vrot.lane.b32.xlu0 %v1054, 64
      %v1134 = vpop.permute.xlu0 %1133
      %1135 = vrot.lane.b32.xlu0 %v1055, 64
      %v1136 = vpop.permute.xlu0 %1135
      %1137 = vrot.lane.b32.xlu0 %v1056, 64
      %v1138 = vpop.permute.xlu0 %1137
      %1139 = vrot.lane.b32.xlu0 %v1057, 64
      %v1140 = vpop.permute.xlu0 %1139
      %1141 = vrot.lane.b32.xlu0 %v1058, 64
      %v1142 = vpop.permute.xlu0 %1141
      %1143 = vrot.lane.b32.xlu0 %v1059, 64
      %v1144 = vpop.permute.xlu0 %1143
      %1145 = vrot.lane.b32.xlu0 %v1060, 64
      %v1146 = vpop.permute.xlu0 %1145
      %1147 = vrot.lane.b32.xlu0 %v1061, 64
      %v1148 = vpop.permute.xlu0 %1147
      %1149 = vrot.lane.b32.xlu0 %v1062, 64
      %v1150 = vpop.permute.xlu0 %1149
      %1151 = vrot.lane.b32.xlu0 %v1063, 64
      %v1152 = vpop.permute.xlu0 %1151
      %1153 = vrot.lane.b32.xlu0 %v1064, 64
      %v1154 = vpop.permute.xlu0 %1153
      %1155 = vrot.lane.b32.xlu0 %v1065, 64
      %v1156 = vpop.permute.xlu0 %1155
      %1157 = vrot.lane.b32.xlu0 %v1066, 64
      %v1158 = vpop.permute.xlu0 %1157
      %1159 = vrot.lane.b32.xlu0 %v1067, 64
      %v1160 = vpop.permute.xlu0 %1159
      %1161 = vrot.lane.b32.xlu0 %v1068, 64
      %v1162 = vpop.permute.xlu0 %1161
      %1163 = vrot.lane.b32.xlu0 %v1069, 64
      %v1164 = vpop.permute.xlu0 %1163
      %1165 = vrot.lane.b32.xlu0 %v1070, 64
      %v1166 = vpop.permute.xlu0 %1165
      %vm1199 = vcmask 785920
      %1200 = vst.msk [vmem:[#allocation3] sm:$0xff] %vm1199, %v1104
      %1201 = vst.msk [vmem:[#allocation3 + $0x18] sm:$0xff] %vm1199, %v1106
      %1202 = vst.msk [vmem:[#allocation3 + $0x30] sm:$0xff] %vm1199, %v1108
      %1203 = vst.msk [vmem:[#allocation3 + $0x48] sm:$0xff] %vm1199, %v1110
      %1204 = vst.msk [vmem:[#allocation3 + $0x60] sm:$0xff] %vm1199, %v1112
      %1205 = vst.msk [vmem:[#allocation3 + $0x78] sm:$0xff] %vm1199, %v1114
      %1206 = vst.msk [vmem:[#allocation3 + $0x90] sm:$0xff] %vm1199, %v1116
      %1207 = vst.msk [vmem:[#allocation3 + $0xa8] sm:$0xff] %vm1199, %v1118
      %1208 = vst.msk [vmem:[#allocation3 + $0xc0] sm:$0xff] %vm1199, %v1120
      %1209 = vst.msk [vmem:[#allocation3 + $0xd8] sm:$0xff] %vm1199, %v1122
      %1210 = vst.msk [vmem:[#allocation3 + $0xf0] sm:$0xff] %vm1199, %v1124
      %1211 = vst.msk [vmem:[#allocation3 + $0x108] sm:$0xff] %vm1199, %v1126
      %1212 = vst.msk [vmem:[#allocation3 + $0x120] sm:$0xff] %vm1199, %v1128
      %1213 = vst.msk [vmem:[#allocation3 + $0x138] sm:$0xff] %vm1199, %v1130
      %1214 = vst.msk [vmem:[#allocation3 + $0x150] sm:$0xff] %vm1199, %v1132
      %1215 = vst.msk [vmem:[#allocation3 + $0x168] sm:$0xff] %vm1199, %v1134
      %1216 = vst.msk [vmem:[#allocation3 + $0x180] sm:$0xff] %vm1199, %v1136
      %1217 = vst.msk [vmem:[#allocation3 + $0x198] sm:$0xff] %vm1199, %v1138
      %1218 = vst.msk [vmem:[#allocation3 + $0x1b0] sm:$0xff] %vm1199, %v1140
      %1219 = vst.msk [vmem:[#allocation3 + $0x1c8] sm:$0xff] %vm1199, %v1142
      %1220 = vst.msk [vmem:[#allocation3 + $0x1e0] sm:$0xff] %vm1199, %v1144
      %1221 = vst.msk [vmem:[#allocation3 + $0x1f8] sm:$0xff] %vm1199, %v1146
      %1222 = vst.msk [vmem:[#allocation3 + $0x210] sm:$0xff] %vm1199, %v1148
      %1223 = vst.msk [vmem:[#allocation3 + $0x228] sm:$0xff] %vm1199, %v1150
      %1224 = vst.msk [vmem:[#allocation3 + $0x240] sm:$0xff] %vm1199, %v1152
      %1225 = vst.msk [vmem:[#allocation3 + $0x258] sm:$0xff] %vm1199, %v1154
      %1226 = vst.msk [vmem:[#allocation3 + $0x270] sm:$0xff] %vm1199, %v1156
      %1227 = vst.msk [vmem:[#allocation3 + $0x288] sm:$0xff] %vm1199, %v1158
      %1228 = vst.msk [vmem:[#allocation3 + $0x2a0] sm:$0xff] %vm1199, %v1160
      %1229 = vst.msk [vmem:[#allocation3 + $0x2b8] sm:$0xff] %vm1199, %v1162
      %1230 = vst.msk [vmem:[#allocation3 + $0x2d0] sm:$0xff] %vm1199, %v1164
      %1231 = vst.msk [vmem:[#allocation3 + $0x2e8] sm:$0xff] %vm1199, %v1166
      %v1232 = vld [vmem:[#allocation2 + $0x17] sm:$0xff]
      %v1233 = vld [vmem:[#allocation2 + $0x1f] sm:$0xff]
      %v1234 = vld [vmem:[#allocation2 + $0x27] sm:$0xff]
      %v1235 = vld [vmem:[#allocation2 + $0x2f] sm:$0xff]
      %v1236 = vld [vmem:[#allocation2 + $0x37] sm:$0xff]
      %v1237 = vld [vmem:[#allocation2 + $0x3f] sm:$0xff]
      %v1238 = vld [vmem:[#allocation2 + $0x47] sm:$0xff]
      %v1239 = vld [vmem:[#allocation2 + $0x4f] sm:$0xff]
      %v1240 = vld [vmem:[#allocation2 + $0x57] sm:$0xff]
      %v1241 = vld [vmem:[#allocation2 + $0x5f] sm:$0xff]
      %v1242 = vld [vmem:[#allocation2 + $0x67] sm:$0xff]
      %v1243 = vld [vmem:[#allocation2 + $0x6f] sm:$0xff]
      %v1244 = vld [vmem:[#allocation2 + $0x77] sm:$0xff]
      %v1245 = vld [vmem:[#allocation2 + $0x7f] sm:$0xff]
      %v1246 = vld [vmem:[#allocation2 + $0x87] sm:$0xff]
      %v1247 = vld [vmem:[#allocation2 + $0x8f] sm:$0xff]
      %v1248 = vld [vmem:[#allocation2 + $0x97] sm:$0xff]
      %v1249 = vld [vmem:[#allocation2 + $0x9f] sm:$0xff]
      %v1250 = vld [vmem:[#allocation2 + $0xa7] sm:$0xff]
      %v1251 = vld [vmem:[#allocation2 + $0xaf] sm:$0xff]
      %v1252 = vld [vmem:[#allocation2 + $0xb7] sm:$0xff]
      %v1253 = vld [vmem:[#allocation2 + $0xbf] sm:$0xff]
      %v1254 = vld [vmem:[#allocation2 + $0xc7] sm:$0xff]
      %v1255 = vld [vmem:[#allocation2 + $0xcf] sm:$0xff]
      %v1256 = vld [vmem:[#allocation2 + $0xd7] sm:$0xff]
      %v1257 = vld [vmem:[#allocation2 + $0xdf] sm:$0xff]
      %v1258 = vld [vmem:[#allocation2 + $0xe7] sm:$0xff]
      %v1259 = vld [vmem:[#allocation2 + $0xef] sm:$0xff]
      %v1260 = vld [vmem:[#allocation2 + $0xf7] sm:$0xff]
      %v1261 = vld [vmem:[#allocation2 + $0xff] sm:$0xff]
      %v1262 = vld [vmem:[#allocation2 + $0x107] sm:$0xff]
      %v1263 = vld [vmem:[#allocation2 + $0x10f] sm:$0xff]
      %v1264 = vmul.f32 %v1232, %v433
      %v1265 = vmul.f32 %v1233, %v438
      %v1266 = vmul.f32 %v1234, %v443
      %v1267 = vmul.f32 %v1235, %v448
      %v1268 = vmul.f32 %v1236, %v453
      %v1269 = vmul.f32 %v1237, %v458
      %v1270 = vmul.f32 %v1238, %v463
      %v1271 = vmul.f32 %v1239, %v468
      %v1272 = vmul.f32 %v1240, %v473
      %v1273 = vmul.f32 %v1241, %v478
      %v1274 = vmul.f32 %v1242, %v483
      %v1275 = vmul.f32 %v1243, %v488
      %v1276 = vmul.f32 %v1244, %v493
      %v1277 = vmul.f32 %v1245, %v498
      %v1278 = vmul.f32 %v1246, %v503
      %v1279 = vmul.f32 %v1247, %v508
      %v1280 = vmul.f32 %v1248, %v513
      %v1281 = vmul.f32 %v1249, %v518
      %v1282 = vmul.f32 %v1250, %v523
      %v1283 = vmul.f32 %v1251, %v528
      %v1284 = vmul.f32 %v1252, %v533
      %v1285 = vmul.f32 %v1253, %v538
      %v1286 = vmul.f32 %v1254, %v543
      %v1287 = vmul.f32 %v1255, %v548
      %v1288 = vmul.f32 %v1256, %v553
      %v1289 = vmul.f32 %v1257, %v558
      %v1290 = vmul.f32 %v1258, %v563
      %v1291 = vmul.f32 %v1259, %v568
      %v1292 = vmul.f32 %v1260, %v573
      %v1293 = vmul.f32 %v1261, %v578
      %v1294 = vmul.f32 %v1262, %v583
      %v1295 = vmul.f32 %v1263, %v588
      %1328 = vrot.lane.b32.xlu0 %v1264, 96
      %v1329 = vpop.permute.xlu0 %1328
      %1330 = vrot.lane.b32.xlu0 %v1265, 96
      %v1331 = vpop.permute.xlu0 %1330
      %1332 = vrot.lane.b32.xlu0 %v1266, 96
      %v1333 = vpop.permute.xlu0 %1332
      %1334 = vrot.lane.b32.xlu0 %v1267, 96
      %v1335 = vpop.permute.xlu0 %1334
      %1336 = vrot.lane.b32.xlu0 %v1268, 96
      %v1337 = vpop.permute.xlu0 %1336
      %1338 = vrot.lane.b32.xlu0 %v1269, 96
      %v1339 = vpop.permute.xlu0 %1338
      %1340 = vrot.lane.b32.xlu0 %v1270, 96
      %v1341 = vpop.permute.xlu0 %1340
      %1342 = vrot.lane.b32.xlu0 %v1271, 96
      %v1343 = vpop.permute.xlu0 %1342
      %1344 = vrot.lane.b32.xlu0 %v1272, 96
      %v1345 = vpop.permute.xlu0 %1344
      %1346 = vrot.lane.b32.xlu0 %v1273, 96
      %v1347 = vpop.permute.xlu0 %1346
      %1348 = vrot.lane.b32.xlu0 %v1274, 96
      %v1349 = vpop.permute.xlu0 %1348
      %1350 = vrot.lane.b32.xlu0 %v1275, 96
      %v1351 = vpop.permute.xlu0 %1350
      %1352 = vrot.lane.b32.xlu0 %v1276, 96
      %v1353 = vpop.permute.xlu0 %1352
      %1354 = vrot.lane.b32.xlu0 %v1277, 96
      %v1355 = vpop.permute.xlu0 %1354
      %1356 = vrot.lane.b32.xlu0 %v1278, 96
      %v1357 = vpop.permute.xlu0 %1356
      %1358 = vrot.lane.b32.xlu0 %v1279, 96
      %v1359 = vpop.permute.xlu0 %1358
      %1360 = vrot.lane.b32.xlu0 %v1280, 96
      %v1361 = vpop.permute.xlu0 %1360
      %1362 = vrot.lane.b32.xlu0 %v1281, 96
      %v1363 = vpop.permute.xlu0 %1362
      %1364 = vrot.lane.b32.xlu0 %v1282, 96
      %v1365 = vpop.permute.xlu0 %1364
      %1366 = vrot.lane.b32.xlu0 %v1283, 96
      %v1367 = vpop.permute.xlu0 %1366
      %1368 = vrot.lane.b32.xlu0 %v1284, 96
      %v1369 = vpop.permute.xlu0 %1368
      %1370 = vrot.lane.b32.xlu0 %v1285, 96
      %v1371 = vpop.permute.xlu0 %1370
      %1372 = vrot.lane.b32.xlu0 %v1286, 96
      %v1373 = vpop.permute.xlu0 %1372
      %1374 = vrot.lane.b32.xlu0 %v1287, 96
      %v1375 = vpop.permute.xlu0 %1374
      %1376 = vrot.lane.b32.xlu0 %v1288, 96
      %v1377 = vpop.permute.xlu0 %1376
      %1378 = vrot.lane.b32.xlu0 %v1289, 96
      %v1379 = vpop.permute.xlu0 %1378
      %1380 = vrot.lane.b32.xlu0 %v1290, 96
      %v1381 = vpop.permute.xlu0 %1380
      %1382 = vrot.lane.b32.xlu0 %v1291, 96
      %v1383 = vpop.permute.xlu0 %1382
      %1384 = vrot.lane.b32.xlu0 %v1292, 96
      %v1385 = vpop.permute.xlu0 %1384
      %1386 = vrot.lane.b32.xlu0 %v1293, 96
      %v1387 = vpop.permute.xlu0 %1386
      %1388 = vrot.lane.b32.xlu0 %v1294, 96
      %v1389 = vpop.permute.xlu0 %1388
      %1390 = vrot.lane.b32.xlu0 %v1295, 96
      %v1391 = vpop.permute.xlu0 %1390
      %vm1424 = vcmask 1048320
      %1425 = vst.msk [vmem:[#allocation3] sm:$0xff] %vm1424, %v1329
      %1426 = vst.msk [vmem:[#allocation3 + $0x18] sm:$0xff] %vm1424, %v1331
      %1427 = vst.msk [vmem:[#allocation3 + $0x30] sm:$0xff] %vm1424, %v1333
      %1428 = vst.msk [vmem:[#allocation3 + $0x48] sm:$0xff] %vm1424, %v1335
      %1429 = vst.msk [vmem:[#allocation3 + $0x60] sm:$0xff] %vm1424, %v1337
      %1430 = vst.msk [vmem:[#allocation3 + $0x78] sm:$0xff] %vm1424, %v1339
      %1431 = vst.msk [vmem:[#allocation3 + $0x90] sm:$0xff] %vm1424, %v1341
      %1432 = vst.msk [vmem:[#allocation3 + $0xa8] sm:$0xff] %vm1424, %v1343
      %1433 = vst.msk [vmem:[#allocation3 + $0xc0] sm:$0xff] %vm1424, %v1345
      %1434 = vst.msk [vmem:[#allocation3 + $0xd8] sm:$0xff] %vm1424, %v1347
      %1435 = vst.msk [vmem:[#allocation3 + $0xf0] sm:$0xff] %vm1424, %v1349
      %1436 = vst.msk [vmem:[#allocation3 + $0x108] sm:$0xff] %vm1424, %v1351
      %1437 = vst.msk [vmem:[#allocation3 + $0x120] sm:$0xff] %vm1424, %v1353
      %1438 = vst.msk [vmem:[#allocation3 + $0x138] sm:$0xff] %vm1424, %v1355
      %1439 = vst.msk [vmem:[#allocation3 + $0x150] sm:$0xff] %vm1424, %v1357
      %1440 = vst.msk [vmem:[#allocation3 + $0x168] sm:$0xff] %vm1424, %v1359
      %1441 = vst.msk [vmem:[#allocation3 + $0x180] sm:$0xff] %vm1424, %v1361
      %1442 = vst.msk [vmem:[#allocation3 + $0x198] sm:$0xff] %vm1424, %v1363
      %1443 = vst.msk [vmem:[#allocation3 + $0x1b0] sm:$0xff] %vm1424, %v1365
      %1444 = vst.msk [vmem:[#allocation3 + $0x1c8] sm:$0xff] %vm1424, %v1367
      %1445 = vst.msk [vmem:[#allocation3 + $0x1e0] sm:$0xff] %vm1424, %v1369
      %1446 = vst.msk [vmem:[#allocation3 + $0x1f8] sm:$0xff] %vm1424, %v1371
      %1447 = vst.msk [vmem:[#allocation3 + $0x210] sm:$0xff] %vm1424, %v1373
      %1448 = vst.msk [vmem:[#allocation3 + $0x228] sm:$0xff] %vm1424, %v1375
      %1449 = vst.msk [vmem:[#allocation3 + $0x240] sm:$0xff] %vm1424, %v1377
      %1450 = vst.msk [vmem:[#allocation3 + $0x258] sm:$0xff] %vm1424, %v1379
      %1451 = vst.msk [vmem:[#allocation3 + $0x270] sm:$0xff] %vm1424, %v1381
      %1452 = vst.msk [vmem:[#allocation3 + $0x288] sm:$0xff] %vm1424, %v1383
      %1453 = vst.msk [vmem:[#allocation3 + $0x2a0] sm:$0xff] %vm1424, %v1385
      %1454 = vst.msk [vmem:[#allocation3 + $0x2b8] sm:$0xff] %vm1424, %v1387
      %1455 = vst.msk [vmem:[#allocation3 + $0x2d0] sm:$0xff] %vm1424, %v1389
      %1456 = vst.msk [vmem:[#allocation3 + $0x2e8] sm:$0xff] %vm1424, %v1391
      %v1457 = vld [vmem:[#allocation2 + $0x18] sm:$0xff]
      %v1458 = vld [vmem:[#allocation2 + $0x20] sm:$0xff]
      %v1459 = vld [vmem:[#allocation2 + $0x28] sm:$0xff]
      %v1460 = vld [vmem:[#allocation2 + $0x30] sm:$0xff]
      %v1461 = vld [vmem:[#allocation2 + $0x38] sm:$0xff]
      %v1462 = vld [vmem:[#allocation2 + $0x40] sm:$0xff]
      %v1463 = vld [vmem:[#allocation2 + $0x48] sm:$0xff]
      %v1464 = vld [vmem:[#allocation2 + $0x50] sm:$0xff]
      %v1465 = vld [vmem:[#allocation2 + $0x58] sm:$0xff]
      %v1466 = vld [vmem:[#allocation2 + $0x60] sm:$0xff]
      %v1467 = vld [vmem:[#allocation2 + $0x68] sm:$0xff]
      %v1468 = vld [vmem:[#allocation2 + $0x70] sm:$0xff]
      %v1469 = vld [vmem:[#allocation2 + $0x78] sm:$0xff]
      %v1470 = vld [vmem:[#allocation2 + $0x80] sm:$0xff]
      %v1471 = vld [vmem:[#allocation2 + $0x88] sm:$0xff]
      %v1472 = vld [vmem:[#allocation2 + $0x90] sm:$0xff]
      %v1473 = vld [vmem:[#allocation2 + $0x98] sm:$0xff]
      %v1474 = vld [vmem:[#allocation2 + $0xa0] sm:$0xff]
      %v1475 = vld [vmem:[#allocation2 + $0xa8] sm:$0xff]
      %v1476 = vld [vmem:[#allocation2 + $0xb0] sm:$0xff]
      %v1477 = vld [vmem:[#allocation2 + $0xb8] sm:$0xff]
      %v1478 = vld [vmem:[#allocation2 + $0xc0] sm:$0xff]
      %v1479 = vld [vmem:[#allocation2 + $0xc8] sm:$0xff]
      %v1480 = vld [vmem:[#allocation2 + $0xd0] sm:$0xff]
      %v1481 = vld [vmem:[#allocation2 + $0xd8] sm:$0xff]
      %v1482 = vld [vmem:[#allocation2 + $0xe0] sm:$0xff]
      %v1483 = vld [vmem:[#allocation2 + $0xe8] sm:$0xff]
      %v1484 = vld [vmem:[#allocation2 + $0xf0] sm:$0xff]
      %v1485 = vld [vmem:[#allocation2 + $0xf8] sm:$0xff]
      %v1486 = vld [vmem:[#allocation2 + $0x100] sm:$0xff]
      %v1487 = vld [vmem:[#allocation2 + $0x108] sm:$0xff]
      %v1488 = vld [vmem:[#allocation2 + $0x110] sm:$0xff]
      %1489 = vst.msk [vmem:[#allocation3 + $0x8] sm:$0xff] %vm358, %v1457
      %1490 = vst.msk [vmem:[#allocation3 + $0x20] sm:$0xff] %vm358, %v1458
      %1491 = vst.msk [vmem:[#allocation3 + $0x38] sm:$0xff] %vm358, %v1459
      %1492 = vst.msk [vmem:[#allocation3 + $0x50] sm:$0xff] %vm358, %v1460
      %1493 = vst.msk [vmem:[#allocation3 + $0x68] sm:$0xff] %vm358, %v1461
      %1494 = vst.msk [vmem:[#allocation3 + $0x80] sm:$0xff] %vm358, %v1462
      %1495 = vst.msk [vmem:[#allocation3 + $0x98] sm:$0xff] %vm358, %v1463
      %1496 = vst.msk [vmem:[#allocation3 + $0xb0] sm:$0xff] %vm358, %v1464
      %1497 = vst.msk [vmem:[#allocation3 + $0xc8] sm:$0xff] %vm358, %v1465
      %1498 = vst.msk [vmem:[#allocation3 + $0xe0] sm:$0xff] %vm358, %v1466
      %1499 = vst.msk [vmem:[#allocation3 + $0xf8] sm:$0xff] %vm358, %v1467
      %1500 = vst.msk [vmem:[#allocation3 + $0x110] sm:$0xff] %vm358, %v1468
      %1501 = vst.msk [vmem:[#allocation3 + $0x128] sm:$0xff] %vm358, %v1469
      %1502 = vst.msk [vmem:[#allocation3 + $0x140] sm:$0xff] %vm358, %v1470
      %1503 = vst.msk [vmem:[#allocation3 + $0x158] sm:$0xff] %vm358, %v1471
      %1504 = vst.msk [vmem:[#allocation3 + $0x170] sm:$0xff] %vm358, %v1472
      %1505 = vst.msk [vmem:[#allocation3 + $0x188] sm:$0xff] %vm358, %v1473
      %1506 = vst.msk [vmem:[#allocation3 + $0x1a0] sm:$0xff] %vm358, %v1474
      %1507 = vst.msk [vmem:[#allocation3 + $0x1b8] sm:$0xff] %vm358, %v1475
      %1508 = vst.msk [vmem:[#allocation3 + $0x1d0] sm:$0xff] %vm358, %v1476
      %1509 = vst.msk [vmem:[#allocation3 + $0x1e8] sm:$0xff] %vm358, %v1477
      %1510 = vst.msk [vmem:[#allocation3 + $0x200] sm:$0xff] %vm358, %v1478
      %1511 = vst.msk [vmem:[#allocation3 + $0x218] sm:$0xff] %vm358, %v1479
      %1512 = vst.msk [vmem:[#allocation3 + $0x230] sm:$0xff] %vm358, %v1480
      %1513 = vst.msk [vmem:[#allocation3 + $0x248] sm:$0xff] %vm358, %v1481
      %1514 = vst.msk [vmem:[#allocation3 + $0x260] sm:$0xff] %vm358, %v1482
      %1515 = vst.msk [vmem:[#allocation3 + $0x278] sm:$0xff] %vm358, %v1483
      %1516 = vst.msk [vmem:[#allocation3 + $0x290] sm:$0xff] %vm358, %v1484
      %1517 = vst.msk [vmem:[#allocation3 + $0x2a8] sm:$0xff] %vm358, %v1485
      %1518 = vst.msk [vmem:[#allocation3 + $0x2c0] sm:$0xff] %vm358, %v1486
      %1519 = vst.msk [vmem:[#allocation3 + $0x2d8] sm:$0xff] %vm358, %v1487
      %1520 = vst.msk [vmem:[#allocation3 + $0x2f0] sm:$0xff] %vm358, %v1488
      %v1521 = vld [vmem:[#allocation2 + $0x19] sm:$0xff]
      %v1522 = vld [vmem:[#allocation2 + $0x21] sm:$0xff]
      %v1523 = vld [vmem:[#allocation2 + $0x29] sm:$0xff]
      %v1524 = vld [vmem:[#allocation2 + $0x31] sm:$0xff]
      %v1525 = vld [vmem:[#allocation2 + $0x39] sm:$0xff]
      %v1526 = vld [vmem:[#allocation2 + $0x41] sm:$0xff]
      %v1527 = vld [vmem:[#allocation2 + $0x49] sm:$0xff]
      %v1528 = vld [vmem:[#allocation2 + $0x51] sm:$0xff]
      %v1529 = vld [vmem:[#allocation2 + $0x59] sm:$0xff]
      %v1530 = vld [vmem:[#allocation2 + $0x61] sm:$0xff]
      %v1531 = vld [vmem:[#allocation2 + $0x69] sm:$0xff]
      %v1532 = vld [vmem:[#allocation2 + $0x71] sm:$0xff]
      %v1533 = vld [vmem:[#allocation2 + $0x79] sm:$0xff]
      %v1534 = vld [vmem:[#allocation2 + $0x81] sm:$0xff]
      %v1535 = vld [vmem:[#allocation2 + $0x89] sm:$0xff]
      %v1536 = vld [vmem:[#allocation2 + $0x91] sm:$0xff]
      %v1537 = vld [vmem:[#allocation2 + $0x99] sm:$0xff]
      %v1538 = vld [vmem:[#allocation2 + $0xa1] sm:$0xff]
      %v1539 = vld [vmem:[#allocation2 + $0xa9] sm:$0xff]
      %v1540 = vld [vmem:[#allocation2 + $0xb1] sm:$0xff]
      %v1541 = vld [vmem:[#allocation2 + $0xb9] sm:$0xff]
      %v1542 = vld [vmem:[#allocation2 + $0xc1] sm:$0xff]
      %v1543 = vld [vmem:[#allocation2 + $0xc9] sm:$0xff]
      %v1544 = vld [vmem:[#allocation2 + $0xd1] sm:$0xff]
      %v1545 = vld [vmem:[#allocation2 + $0xd9] sm:$0xff]
      %v1546 = vld [vmem:[#allocation2 + $0xe1] sm:$0xff]
      %v1547 = vld [vmem:[#allocation2 + $0xe9] sm:$0xff]
      %v1548 = vld [vmem:[#allocation2 + $0xf1] sm:$0xff]
      %v1549 = vld [vmem:[#allocation2 + $0xf9] sm:$0xff]
      %v1550 = vld [vmem:[#allocation2 + $0x101] sm:$0xff]
      %v1551 = vld [vmem:[#allocation2 + $0x109] sm:$0xff]
      %v1552 = vld [vmem:[#allocation2 + $0x111] sm:$0xff]
      %v1553 = vmul.f32 %v1521, %v882
      %v1554 = vmul.f32 %v1522, %v887
      %v1555 = vmul.f32 %v1523, %v892
      %v1556 = vmul.f32 %v1524, %v897
      %v1557 = vmul.f32 %v1525, %v902
      %v1558 = vmul.f32 %v1526, %v907
      %v1559 = vmul.f32 %v1527, %v912
      %v1560 = vmul.f32 %v1528, %v917
      %v1561 = vmul.f32 %v1529, %v922
      %v1562 = vmul.f32 %v1530, %v927
      %v1563 = vmul.f32 %v1531, %v932
      %v1564 = vmul.f32 %v1532, %v937
      %v1565 = vmul.f32 %v1533, %v942
      %v1566 = vmul.f32 %v1534, %v947
      %v1567 = vmul.f32 %v1535, %v952
      %v1568 = vmul.f32 %v1536, %v957
      %v1569 = vmul.f32 %v1537, %v962
      %v1570 = vmul.f32 %v1538, %v967
      %v1571 = vmul.f32 %v1539, %v972
      %v1572 = vmul.f32 %v1540, %v977
      %v1573 = vmul.f32 %v1541, %v982
      %v1574 = vmul.f32 %v1542, %v987
      %v1575 = vmul.f32 %v1543, %v992
      %v1576 = vmul.f32 %v1544, %v997
      %v1577 = vmul.f32 %v1545, %v1002
      %v1578 = vmul.f32 %v1546, %v1007
      %v1579 = vmul.f32 %v1547, %v1012
      %v1580 = vmul.f32 %v1548, %v1017
      %v1581 = vmul.f32 %v1549, %v1022
      %v1582 = vmul.f32 %v1550, %v1027
      %v1583 = vmul.f32 %v1551, %v1032
      %v1584 = vmul.f32 %v1552, %v1037
      %1617 = vrot.lane.b32.xlu0 %v1553, 32
      %v1618 = vpop.permute.xlu0 %1617
      %1619 = vrot.lane.b32.xlu0 %v1554, 32
      %v1620 = vpop.permute.xlu0 %1619
      %1621 = vrot.lane.b32.xlu0 %v1555, 32
      %v1622 = vpop.permute.xlu0 %1621
      %1623 = vrot.lane.b32.xlu0 %v1556, 32
      %v1624 = vpop.permute.xlu0 %1623
      %1625 = vrot.lane.b32.xlu0 %v1557, 32
      %v1626 = vpop.permute.xlu0 %1625
      %1627 = vrot.lane.b32.xlu0 %v1558, 32
      %v1628 = vpop.permute.xlu0 %1627
      %1629 = vrot.lane.b32.xlu0 %v1559, 32
      %v1630 = vpop.permute.xlu0 %1629
      %1631 = vrot.lane.b32.xlu0 %v1560, 32
      %v1632 = vpop.permute.xlu0 %1631
      %1633 = vrot.lane.b32.xlu0 %v1561, 32
      %v1634 = vpop.permute.xlu0 %1633
      %1635 = vrot.lane.b32.xlu0 %v1562, 32
      %v1636 = vpop.permute.xlu0 %1635
      %1637 = vrot.lane.b32.xlu0 %v1563, 32
      %v1638 = vpop.permute.xlu0 %1637
      %1639 = vrot.lane.b32.xlu0 %v1564, 32
      %v1640 = vpop.permute.xlu0 %1639
      %1641 = vrot.lane.b32.xlu0 %v1565, 32
      %v1642 = vpop.permute.xlu0 %1641
      %1643 = vrot.lane.b32.xlu0 %v1566, 32
      %v1644 = vpop.permute.xlu0 %1643
      %1645 = vrot.lane.b32.xlu0 %v1567, 32
      %v1646 = vpop.permute.xlu0 %1645
      %1647 = vrot.lane.b32.xlu0 %v1568, 32
      %v1648 = vpop.permute.xlu0 %1647
      %1649 = vrot.lane.b32.xlu0 %v1569, 32
      %v1650 = vpop.permute.xlu0 %1649
      %1651 = vrot.lane.b32.xlu0 %v1570, 32
      %v1652 = vpop.permute.xlu0 %1651
      %1653 = vrot.lane.b32.xlu0 %v1571, 32
      %v1654 = vpop.permute.xlu0 %1653
      %1655 = vrot.lane.b32.xlu0 %v1572, 32
      %v1656 = vpop.permute.xlu0 %1655
      %1657 = vrot.lane.b32.xlu0 %v1573, 32
      %v1658 = vpop.permute.xlu0 %1657
      %1659 = vrot.lane.b32.xlu0 %v1574, 32
      %v1660 = vpop.permute.xlu0 %1659
      %1661 = vrot.lane.b32.xlu0 %v1575, 32
      %v1662 = vpop.permute.xlu0 %1661
      %1663 = vrot.lane.b32.xlu0 %v1576, 32
      %v1664 = vpop.permute.xlu0 %1663
      %1665 = vrot.lane.b32.xlu0 %v1577, 32
      %v1666 = vpop.permute.xlu0 %1665
      %1667 = vrot.lane.b32.xlu0 %v1578, 32
      %v1668 = vpop.permute.xlu0 %1667
      %1669 = vrot.lane.b32.xlu0 %v1579, 32
      %v1670 = vpop.permute.xlu0 %1669
      %1671 = vrot.lane.b32.xlu0 %v1580, 32
      %v1672 = vpop.permute.xlu0 %1671
      %1673 = vrot.lane.b32.xlu0 %v1581, 32
      %v1674 = vpop.permute.xlu0 %1673
      %1675 = vrot.lane.b32.xlu0 %v1582, 32
      %v1676 = vpop.permute.xlu0 %1675
      %1677 = vrot.lane.b32.xlu0 %v1583, 32
      %v1678 = vpop.permute.xlu0 %1677
      %1679 = vrot.lane.b32.xlu0 %v1584, 32
      %v1680 = vpop.permute.xlu0 %1679
      %1713 = vst.msk [vmem:[#allocation3 + $0x8] sm:$0xff] %vm814, %v1618
      %1714 = vst.msk [vmem:[#allocation3 + $0x20] sm:$0xff] %vm814, %v1620
      %1715 = vst.msk [vmem:[#allocation3 + $0x38] sm:$0xff] %vm814, %v1622
      %1716 = vst.msk [vmem:[#allocation3 + $0x50] sm:$0xff] %vm814, %v1624
      %1717 = vst.msk [vmem:[#allocation3 + $0x68] sm:$0xff] %vm814, %v1626
      %1718 = vst.msk [vmem:[#allocation3 + $0x80] sm:$0xff] %vm814, %v1628
      %1719 = vst.msk [vmem:[#allocation3 + $0x98] sm:$0xff] %vm814, %v1630
      %1720 = vst.msk [vmem:[#allocation3 + $0xb0] sm:$0xff] %vm814, %v1632
      %1721 = vst.msk [vmem:[#allocation3 + $0xc8] sm:$0xff] %vm814, %v1634
      %1722 = vst.msk [vmem:[#allocation3 + $0xe0] sm:$0xff] %vm814, %v1636
      %1723 = vst.msk [vmem:[#allocation3 + $0xf8] sm:$0xff] %vm814, %v1638
      %1724 = vst.msk [vmem:[#allocation3 + $0x110] sm:$0xff] %vm814, %v1640
      %1725 = vst.msk [vmem:[#allocation3 + $0x128] sm:$0xff] %vm814, %v1642
      %1726 = vst.msk [vmem:[#allocation3 + $0x140] sm:$0xff] %vm814, %v1644
      %1727 = vst.msk [vmem:[#allocation3 + $0x158] sm:$0xff] %vm814, %v1646
      %1728 = vst.msk [vmem:[#allocation3 + $0x170] sm:$0xff] %vm814, %v1648
      %1729 = vst.msk [vmem:[#allocation3 + $0x188] sm:$0xff] %vm814, %v1650
      %1730 = vst.msk [vmem:[#allocation3 + $0x1a0] sm:$0xff] %vm814, %v1652
      %1731 = vst.msk [vmem:[#allocation3 + $0x1b8] sm:$0xff] %vm814, %v1654
      %1732 = vst.msk [vmem:[#allocation3 + $0x1d0] sm:$0xff] %vm814, %v1656
      %1733 = vst.msk [vmem:[#allocation3 + $0x1e8] sm:$0xff] %vm814, %v1658
      %1734 = vst.msk [vmem:[#allocation3 + $0x200] sm:$0xff] %vm814, %v1660
      %1735 = vst.msk [vmem:[#allocation3 + $0x218] sm:$0xff] %vm814, %v1662
      %1736 = vst.msk [vmem:[#allocation3 + $0x230] sm:$0xff] %vm814, %v1664
      %1737 = vst.msk [vmem:[#allocation3 + $0x248] sm:$0xff] %vm814, %v1666
      %1738 = vst.msk [vmem:[#allocation3 + $0x260] sm:$0xff] %vm814, %v1668
      %1739 = vst.msk [vmem:[#allocation3 + $0x278] sm:$0xff] %vm814, %v1670
      %1740 = vst.msk [vmem:[#allocation3 + $0x290] sm:$0xff] %vm814, %v1672
      %1741 = vst.msk [vmem:[#allocation3 + $0x2a8] sm:$0xff] %vm814, %v1674
      %1742 = vst.msk [vmem:[#allocation3 + $0x2c0] sm:$0xff] %vm814, %v1676
      %1743 = vst.msk [vmem:[#allocation3 + $0x2d8] sm:$0xff] %vm814, %v1678
      %1744 = vst.msk [vmem:[#allocation3 + $0x2f0] sm:$0xff] %vm814, %v1680
      %v1745 = vld [vmem:[#allocation2 + $0x27] sm:$0xff]
      %v1746 = vld [vmem:[#allocation2 + $0x2f] sm:$0xff]
      %v1747 = vld [vmem:[#allocation2 + $0x37] sm:$0xff]
      %v1748 = vld [vmem:[#allocation2 + $0x3f] sm:$0xff]
      %v1749 = vld [vmem:[#allocation2 + $0x47] sm:$0xff]
      %v1750 = vld [vmem:[#allocation2 + $0x4f] sm:$0xff]
      %v1751 = vld [vmem:[#allocation2 + $0x57] sm:$0xff]
      %v1752 = vld [vmem:[#allocation2 + $0x5f] sm:$0xff]
      %v1753 = vld [vmem:[#allocation2 + $0x67] sm:$0xff]
      %v1754 = vld [vmem:[#allocation2 + $0x6f] sm:$0xff]
      %v1755 = vld [vmem:[#allocation2 + $0x77] sm:$0xff]
      %v1756 = vld [vmem:[#allocation2 + $0x7f] sm:$0xff]
      %v1757 = vld [vmem:[#allocation2 + $0x87] sm:$0xff]
      %v1758 = vld [vmem:[#allocation2 + $0x8f] sm:$0xff]
      %v1759 = vld [vmem:[#allocation2 + $0x97] sm:$0xff]
      %v1760 = vld [vmem:[#allocation2 + $0x9f] sm:$0xff]
      %v1761 = vld [vmem:[#allocation2 + $0xa7] sm:$0xff]
      %v1762 = vld [vmem:[#allocation2 + $0xaf] sm:$0xff]
      %v1763 = vld [vmem:[#allocation2 + $0xb7] sm:$0xff]
      %v1764 = vld [vmem:[#allocation2 + $0xbf] sm:$0xff]
      %v1765 = vld [vmem:[#allocation2 + $0xc7] sm:$0xff]
      %v1766 = vld [vmem:[#allocation2 + $0xcf] sm:$0xff]
      %v1767 = vld [vmem:[#allocation2 + $0xd7] sm:$0xff]
      %v1768 = vld [vmem:[#allocation2 + $0xdf] sm:$0xff]
      %v1769 = vld [vmem:[#allocation2 + $0xe7] sm:$0xff]
      %v1770 = vld [vmem:[#allocation2 + $0xef] sm:$0xff]
      %v1771 = vld [vmem:[#allocation2 + $0xf7] sm:$0xff]
      %v1772 = vld [vmem:[#allocation2 + $0xff] sm:$0xff]
      %v1773 = vld [vmem:[#allocation2 + $0x107] sm:$0xff]
      %v1774 = vld [vmem:[#allocation2 + $0x10f] sm:$0xff]
      %v1775 = vld [vmem:[#allocation2 + $0x117] sm:$0xff]
      %v1776 = vld [vmem:[#allocation2 + $0x11f] sm:$0xff]
      %v1777 = vmul.f32 %v1745, %v433
      %v1778 = vmul.f32 %v1746, %v438
      %v1779 = vmul.f32 %v1747, %v443
      %v1780 = vmul.f32 %v1748, %v448
      %v1781 = vmul.f32 %v1749, %v453
      %v1782 = vmul.f32 %v1750, %v458
      %v1783 = vmul.f32 %v1751, %v463
      %v1784 = vmul.f32 %v1752, %v468
      %v1785 = vmul.f32 %v1753, %v473
      %v1786 = vmul.f32 %v1754, %v478
      %v1787 = vmul.f32 %v1755, %v483
      %v1788 = vmul.f32 %v1756, %v488
      %v1789 = vmul.f32 %v1757, %v493
      %v1790 = vmul.f32 %v1758, %v498
      %v1791 = vmul.f32 %v1759, %v503
      %v1792 = vmul.f32 %v1760, %v508
      %v1793 = vmul.f32 %v1761, %v513
      %v1794 = vmul.f32 %v1762, %v518
      %v1795 = vmul.f32 %v1763, %v523
      %v1796 = vmul.f32 %v1764, %v528
      %v1797 = vmul.f32 %v1765, %v533
      %v1798 = vmul.f32 %v1766, %v538
      %v1799 = vmul.f32 %v1767, %v543
      %v1800 = vmul.f32 %v1768, %v548
      %v1801 = vmul.f32 %v1769, %v553
      %v1802 = vmul.f32 %v1770, %v558
      %v1803 = vmul.f32 %v1771, %v563
      %v1804 = vmul.f32 %v1772, %v568
      %v1805 = vmul.f32 %v1773, %v573
      %v1806 = vmul.f32 %v1774, %v578
      %v1807 = vmul.f32 %v1775, %v583
      %v1808 = vmul.f32 %v1776, %v588
      %1841 = vrot.lane.b32.xlu0 %v1777, 64
      %v1842 = vpop.permute.xlu0 %1841
      %1843 = vrot.lane.b32.xlu0 %v1778, 64
      %v1844 = vpop.permute.xlu0 %1843
      %1845 = vrot.lane.b32.xlu0 %v1779, 64
      %v1846 = vpop.permute.xlu0 %1845
      %1847 = vrot.lane.b32.xlu0 %v1780, 64
      %v1848 = vpop.permute.xlu0 %1847
      %1849 = vrot.lane.b32.xlu0 %v1781, 64
      %v1850 = vpop.permute.xlu0 %1849
      %1851 = vrot.lane.b32.xlu0 %v1782, 64
      %v1852 = vpop.permute.xlu0 %1851
      %1853 = vrot.lane.b32.xlu0 %v1783, 64
      %v1854 = vpop.permute.xlu0 %1853
      %1855 = vrot.lane.b32.xlu0 %v1784, 64
      %v1856 = vpop.permute.xlu0 %1855
      %1857 = vrot.lane.b32.xlu0 %v1785, 64
      %v1858 = vpop.permute.xlu0 %1857
      %1859 = vrot.lane.b32.xlu0 %v1786, 64
      %v1860 = vpop.permute.xlu0 %1859
      %1861 = vrot.lane.b32.xlu0 %v1787, 64
      %v1862 = vpop.permute.xlu0 %1861
      %1863 = vrot.lane.b32.xlu0 %v1788, 64
      %v1864 = vpop.permute.xlu0 %1863
      %1865 = vrot.lane.b32.xlu0 %v1789, 64
      %v1866 = vpop.permute.xlu0 %1865
      %1867 = vrot.lane.b32.xlu0 %v1790, 64
      %v1868 = vpop.permute.xlu0 %1867
      %1869 = vrot.lane.b32.xlu0 %v1791, 64
      %v1870 = vpop.permute.xlu0 %1869
      %1871 = vrot.lane.b32.xlu0 %v1792, 64
      %v1872 = vpop.permute.xlu0 %1871
      %1873 = vrot.lane.b32.xlu0 %v1793, 64
      %v1874 = vpop.permute.xlu0 %1873
      %1875 = vrot.lane.b32.xlu0 %v1794, 64
      %v1876 = vpop.permute.xlu0 %1875
      %1877 = vrot.lane.b32.xlu0 %v1795, 64
      %v1878 = vpop.permute.xlu0 %1877
      %1879 = vrot.lane.b32.xlu0 %v1796, 64
      %v1880 = vpop.permute.xlu0 %1879
      %1881 = vrot.lane.b32.xlu0 %v1797, 64
      %v1882 = vpop.permute.xlu0 %1881
      %1883 = vrot.lane.b32.xlu0 %v1798, 64
      %v1884 = vpop.permute.xlu0 %1883
      %1885 = vrot.lane.b32.xlu0 %v1799, 64
      %v1886 = vpop.permute.xlu0 %1885
      %1887 = vrot.lane.b32.xlu0 %v1800, 64
      %v1888 = vpop.permute.xlu0 %1887
      %1889 = vrot.lane.b32.xlu0 %v1801, 64
      %v1890 = vpop.permute.xlu0 %1889
      %1891 = vrot.lane.b32.xlu0 %v1802, 64
      %v1892 = vpop.permute.xlu0 %1891
      %1893 = vrot.lane.b32.xlu0 %v1803, 64
      %v1894 = vpop.permute.xlu0 %1893
      %1895 = vrot.lane.b32.xlu0 %v1804, 64
      %v1896 = vpop.permute.xlu0 %1895
      %1897 = vrot.lane.b32.xlu0 %v1805, 64
      %v1898 = vpop.permute.xlu0 %1897
      %1899 = vrot.lane.b32.xlu0 %v1806, 64
      %v1900 = vpop.permute.xlu0 %1899
      %1901 = vrot.lane.b32.xlu0 %v1807, 64
      %v1902 = vpop.permute.xlu0 %1901
      %1903 = vrot.lane.b32.xlu0 %v1808, 64
      %v1904 = vpop.permute.xlu0 %1903
      %1937 = vst.msk [vmem:[#allocation3 + $0x8] sm:$0xff] %vm1199, %v1842
      %1938 = vst.msk [vmem:[#allocation3 + $0x20] sm:$0xff] %vm1199, %v1844
      %1939 = vst.msk [vmem:[#allocation3 + $0x38] sm:$0xff] %vm1199, %v1846
      %1940 = vst.msk [vmem:[#allocation3 + $0x50] sm:$0xff] %vm1199, %v1848
      %1941 = vst.msk [vmem:[#allocation3 + $0x68] sm:$0xff] %vm1199, %v1850
      %1942 = vst.msk [vmem:[#allocation3 + $0x80] sm:$0xff] %vm1199, %v1852
      %1943 = vst.msk [vmem:[#allocation3 + $0x98] sm:$0xff] %vm1199, %v1854
      %1944 = vst.msk [vmem:[#allocation3 + $0xb0] sm:$0xff] %vm1199, %v1856
      %1945 = vst.msk [vmem:[#allocation3 + $0xc8] sm:$0xff] %vm1199, %v1858
      %1946 = vst.msk [vmem:[#allocation3 + $0xe0] sm:$0xff] %vm1199, %v1860
      %1947 = vst.msk [vmem:[#allocation3 + $0xf8] sm:$0xff] %vm1199, %v1862
      %1948 = vst.msk [vmem:[#allocation3 + $0x110] sm:$0xff] %vm1199, %v1864
      %1949 = vst.msk [vmem:[#allocation3 + $0x128] sm:$0xff] %vm1199, %v1866
      %1950 = vst.msk [vmem:[#allocation3 + $0x140] sm:$0xff] %vm1199, %v1868
      %1951 = vst.msk [vmem:[#allocation3 + $0x158] sm:$0xff] %vm1199, %v1870
      %1952 = vst.msk [vmem:[#allocation3 + $0x170] sm:$0xff] %vm1199, %v1872
      %1953 = vst.msk [vmem:[#allocation3 + $0x188] sm:$0xff] %vm1199, %v1874
      %1954 = vst.msk [vmem:[#allocation3 + $0x1a0] sm:$0xff] %vm1199, %v1876
      %1955 = vst.msk [vmem:[#allocation3 + $0x1b8] sm:$0xff] %vm1199, %v1878
      %1956 = vst.msk [vmem:[#allocation3 + $0x1d0] sm:$0xff] %vm1199, %v1880
      %1957 = vst.msk [vmem:[#allocation3 + $0x1e8] sm:$0xff] %vm1199, %v1882
      %1958 = vst.msk [vmem:[#allocation3 + $0x200] sm:$0xff] %vm1199, %v1884
      %1959 = vst.msk [vmem:[#allocation3 + $0x218] sm:$0xff] %vm1199, %v1886
      %1960 = vst.msk [vmem:[#allocation3 + $0x230] sm:$0xff] %vm1199, %v1888
      %1961 = vst.msk [vmem:[#allocation3 + $0x248] sm:$0xff] %vm1199, %v1890
      %1962 = vst.msk [vmem:[#allocation3 + $0x260] sm:$0xff] %vm1199, %v1892
      %1963 = vst.msk [vmem:[#allocation3 + $0x278] sm:$0xff] %vm1199, %v1894
      %1964 = vst.msk [vmem:[#allocation3 + $0x290] sm:$0xff] %vm1199, %v1896
      %1965 = vst.msk [vmem:[#allocation3 + $0x2a8] sm:$0xff] %vm1199, %v1898
      %1966 = vst.msk [vmem:[#allocation3 + $0x2c0] sm:$0xff] %vm1199, %v1900
      %1967 = vst.msk [vmem:[#allocation3 + $0x2d8] sm:$0xff] %vm1199, %v1902
      %1968 = vst.msk [vmem:[#allocation3 + $0x2f0] sm:$0xff] %vm1199, %v1904
      %v1969 = vld [vmem:[#allocation2 + $0x28] sm:$0xff]
      %v1970 = vld [vmem:[#allocation2 + $0x30] sm:$0xff]
      %v1971 = vld [vmem:[#allocation2 + $0x38] sm:$0xff]
      %v1972 = vld [vmem:[#allocation2 + $0x40] sm:$0xff]
      %v1973 = vld [vmem:[#allocation2 + $0x48] sm:$0xff]
      %v1974 = vld [vmem:[#allocation2 + $0x50] sm:$0xff]
      %v1975 = vld [vmem:[#allocation2 + $0x58] sm:$0xff]
      %v1976 = vld [vmem:[#allocation2 + $0x60] sm:$0xff]
      %v1977 = vld [vmem:[#allocation2 + $0x68] sm:$0xff]
      %v1978 = vld [vmem:[#allocation2 + $0x70] sm:$0xff]
      %v1979 = vld [vmem:[#allocation2 + $0x78] sm:$0xff]
      %v1980 = vld [vmem:[#allocation2 + $0x80] sm:$0xff]
      %v1981 = vld [vmem:[#allocation2 + $0x88] sm:$0xff]
      %v1982 = vld [vmem:[#allocation2 + $0x90] sm:$0xff]
      %v1983 = vld [vmem:[#allocation2 + $0x98] sm:$0xff]
      %v1984 = vld [vmem:[#allocation2 + $0xa0] sm:$0xff]
      %v1985 = vld [vmem:[#allocation2 + $0xa8] sm:$0xff]
      %v1986 = vld [vmem:[#allocation2 + $0xb0] sm:$0xff]
      %v1987 = vld [vmem:[#allocation2 + $0xb8] sm:$0xff]
      %v1988 = vld [vmem:[#allocation2 + $0xc0] sm:$0xff]
      %v1989 = vld [vmem:[#allocation2 + $0xc8] sm:$0xff]
      %v1990 = vld [vmem:[#allocation2 + $0xd0] sm:$0xff]
      %v1991 = vld [vmem:[#allocation2 + $0xd8] sm:$0xff]
      %v1992 = vld [vmem:[#allocation2 + $0xe0] sm:$0xff]
      %v1993 = vld [vmem:[#allocation2 + $0xe8] sm:$0xff]
      %v1994 = vld [vmem:[#allocation2 + $0xf0] sm:$0xff]
      %v1995 = vld [vmem:[#allocation2 + $0xf8] sm:$0xff]
      %v1996 = vld [vmem:[#allocation2 + $0x100] sm:$0xff]
      %v1997 = vld [vmem:[#allocation2 + $0x108] sm:$0xff]
      %v1998 = vld [vmem:[#allocation2 + $0x110] sm:$0xff]
      %v1999 = vld [vmem:[#allocation2 + $0x118] sm:$0xff]
      %v2000 = vld [vmem:[#allocation2 + $0x120] sm:$0xff]
      %2033 = vrot.lane.b32.xlu0 %v1969, 96
      %v2034 = vpop.permute.xlu0 %2033
      %2035 = vrot.lane.b32.xlu0 %v1970, 96
      %v2036 = vpop.permute.xlu0 %2035
      %2037 = vrot.lane.b32.xlu0 %v1971, 96
      %v2038 = vpop.permute.xlu0 %2037
      %2039 = vrot.lane.b32.xlu0 %v1972, 96
      %v2040 = vpop.permute.xlu0 %2039
      %2041 = vrot.lane.b32.xlu0 %v1973, 96
      %v2042 = vpop.permute.xlu0 %2041
      %2043 = vrot.lane.b32.xlu0 %v1974, 96
      %v2044 = vpop.permute.xlu0 %2043
      %2045 = vrot.lane.b32.xlu0 %v1975, 96
      %v2046 = vpop.permute.xlu0 %2045
      %2047 = vrot.lane.b32.xlu0 %v1976, 96
      %v2048 = vpop.permute.xlu0 %2047
      %2049 = vrot.lane.b32.xlu0 %v1977, 96
      %v2050 = vpop.permute.xlu0 %2049
      %2051 = vrot.lane.b32.xlu0 %v1978, 96
      %v2052 = vpop.permute.xlu0 %2051
      %2053 = vrot.lane.b32.xlu0 %v1979, 96
      %v2054 = vpop.permute.xlu0 %2053
      %2055 = vrot.lane.b32.xlu0 %v1980, 96
      %v2056 = vpop.permute.xlu0 %2055
      %2057 = vrot.lane.b32.xlu0 %v1981, 96
      %v2058 = vpop.permute.xlu0 %2057
      %2059 = vrot.lane.b32.xlu0 %v1982, 96
      %v2060 = vpop.permute.xlu0 %2059
      %2061 = vrot.lane.b32.xlu0 %v1983, 96
      %v2062 = vpop.permute.xlu0 %2061
      %2063 = vrot.lane.b32.xlu0 %v1984, 96
      %v2064 = vpop.permute.xlu0 %2063
      %2065 = vrot.lane.b32.xlu0 %v1985, 96
      %v2066 = vpop.permute.xlu0 %2065
      %2067 = vrot.lane.b32.xlu0 %v1986, 96
      %v2068 = vpop.permute.xlu0 %2067
      %2069 = vrot.lane.b32.xlu0 %v1987, 96
      %v2070 = vpop.permute.xlu0 %2069
      %2071 = vrot.lane.b32.xlu0 %v1988, 96
      %v2072 = vpop.permute.xlu0 %2071
      %2073 = vrot.lane.b32.xlu0 %v1989, 96
      %v2074 = vpop.permute.xlu0 %2073
      %2075 = vrot.lane.b32.xlu0 %v1990, 96
      %v2076 = vpop.permute.xlu0 %2075
      %2077 = vrot.lane.b32.xlu0 %v1991, 96
      %v2078 = vpop.permute.xlu0 %2077
      %2079 = vrot.lane.b32.xlu0 %v1992, 96
      %v2080 = vpop.permute.xlu0 %2079
      %2081 = vrot.lane.b32.xlu0 %v1993, 96
      %v2082 = vpop.permute.xlu0 %2081
      %2083 = vrot.lane.b32.xlu0 %v1994, 96
      %v2084 = vpop.permute.xlu0 %2083
      %2085 = vrot.lane.b32.xlu0 %v1995, 96
      %v2086 = vpop.permute.xlu0 %2085
      %2087 = vrot.lane.b32.xlu0 %v1996, 96
      %v2088 = vpop.permute.xlu0 %2087
      %2089 = vrot.lane.b32.xlu0 %v1997, 96
      %v2090 = vpop.permute.xlu0 %2089
      %2091 = vrot.lane.b32.xlu0 %v1998, 96
      %v2092 = vpop.permute.xlu0 %2091
      %2093 = vrot.lane.b32.xlu0 %v1999, 96
      %v2094 = vpop.permute.xlu0 %2093
      %2095 = vrot.lane.b32.xlu0 %v2000, 96
      %v2096 = vpop.permute.xlu0 %2095
      %2129 = vst.msk [vmem:[#allocation3 + $0x8] sm:$0xff] %vm1424, %v2034
      %2130 = vst.msk [vmem:[#allocation3 + $0x20] sm:$0xff] %vm1424, %v2036
      %2131 = vst.msk [vmem:[#allocation3 + $0x38] sm:$0xff] %vm1424, %v2038
      %2132 = vst.msk [vmem:[#allocation3 + $0x50] sm:$0xff] %vm1424, %v2040
      %2133 = vst.msk [vmem:[#allocation3 + $0x68] sm:$0xff] %vm1424, %v2042
      %2134 = vst.msk [vmem:[#allocation3 + $0x80] sm:$0xff] %vm1424, %v2044
      %2135 = vst.msk [vmem:[#allocation3 + $0x98] sm:$0xff] %vm1424, %v2046
      %2136 = vst.msk [vmem:[#allocation3 + $0xb0] sm:$0xff] %vm1424, %v2048
      %2137 = vst.msk [vmem:[#allocation3 + $0xc8] sm:$0xff] %vm1424, %v2050
      %2138 = vst.msk [vmem:[#allocation3 + $0xe0] sm:$0xff] %vm1424, %v2052
      %2139 = vst.msk [vmem:[#allocation3 + $0xf8] sm:$0xff] %vm1424, %v2054
      %2140 = vst.msk [vmem:[#allocation3 + $0x110] sm:$0xff] %vm1424, %v2056
      %2141 = vst.msk [vmem:[#allocation3 + $0x128] sm:$0xff] %vm1424, %v2058
      %2142 = vst.msk [vmem:[#allocation3 + $0x140] sm:$0xff] %vm1424, %v2060
      %2143 = vst.msk [vmem:[#allocation3 + $0x158] sm:$0xff] %vm1424, %v2062
      %2144 = vst.msk [vmem:[#allocation3 + $0x170] sm:$0xff] %vm1424, %v2064
      %2145 = vst.msk [vmem:[#allocation3 + $0x188] sm:$0xff] %vm1424, %v2066
      %2146 = vst.msk [vmem:[#allocation3 + $0x1a0] sm:$0xff] %vm1424, %v2068
      %2147 = vst.msk [vmem:[#allocation3 + $0x1b8] sm:$0xff] %vm1424, %v2070
      %2148 = vst.msk [vmem:[#allocation3 + $0x1d0] sm:$0xff] %vm1424, %v2072
      %2149 = vst.msk [vmem:[#allocation3 + $0x1e8] sm:$0xff] %vm1424, %v2074
      %2150 = vst.msk [vmem:[#allocation3 + $0x200] sm:$0xff] %vm1424, %v2076
      %2151 = vst.msk [vmem:[#allocation3 + $0x218] sm:$0xff] %vm1424, %v2078
      %2152 = vst.msk [vmem:[#allocation3 + $0x230] sm:$0xff] %vm1424, %v2080
      %2153 = vst.msk [vmem:[#allocation3 + $0x248] sm:$0xff] %vm1424, %v2082
      %2154 = vst.msk [vmem:[#allocation3 + $0x260] sm:$0xff] %vm1424, %v2084
      %2155 = vst.msk [vmem:[#allocation3 + $0x278] sm:$0xff] %vm1424, %v2086
      %2156 = vst.msk [vmem:[#allocation3 + $0x290] sm:$0xff] %vm1424, %v2088
      %2157 = vst.msk [vmem:[#allocation3 + $0x2a8] sm:$0xff] %vm1424, %v2090
      %2158 = vst.msk [vmem:[#allocation3 + $0x2c0] sm:$0xff] %vm1424, %v2092
      %2159 = vst.msk [vmem:[#allocation3 + $0x2d8] sm:$0xff] %vm1424, %v2094
      %2160 = vst.msk [vmem:[#allocation3 + $0x2f0] sm:$0xff] %vm1424, %v2096
      %v2161 = vld [vmem:[#allocation2 + $0x29] sm:$0xff]
      %v2162 = vld [vmem:[#allocation2 + $0x31] sm:$0xff]
      %v2163 = vld [vmem:[#allocation2 + $0x39] sm:$0xff]
      %v2164 = vld [vmem:[#allocation2 + $0x41] sm:$0xff]
      %v2165 = vld [vmem:[#allocation2 + $0x49] sm:$0xff]
      %v2166 = vld [vmem:[#allocation2 + $0x51] sm:$0xff]
      %v2167 = vld [vmem:[#allocation2 + $0x59] sm:$0xff]
      %v2168 = vld [vmem:[#allocation2 + $0x61] sm:$0xff]
      %v2169 = vld [vmem:[#allocation2 + $0x69] sm:$0xff]
      %v2170 = vld [vmem:[#allocation2 + $0x71] sm:$0xff]
      %v2171 = vld [vmem:[#allocation2 + $0x79] sm:$0xff]
      %v2172 = vld [vmem:[#allocation2 + $0x81] sm:$0xff]
      %v2173 = vld [vmem:[#allocation2 + $0x89] sm:$0xff]
      %v2174 = vld [vmem:[#allocation2 + $0x91] sm:$0xff]
      %v2175 = vld [vmem:[#allocation2 + $0x99] sm:$0xff]
      %v2176 = vld [vmem:[#allocation2 + $0xa1] sm:$0xff]
      %v2177 = vld [vmem:[#allocation2 + $0xa9] sm:$0xff]
      %v2178 = vld [vmem:[#allocation2 + $0xb1] sm:$0xff]
      %v2179 = vld [vmem:[#allocation2 + $0xb9] sm:$0xff]
      %v2180 = vld [vmem:[#allocation2 + $0xc1] sm:$0xff]
      %v2181 = vld [vmem:[#allocation2 + $0xc9] sm:$0xff]
      %v2182 = vld [vmem:[#allocation2 + $0xd1] sm:$0xff]
      %v2183 = vld [vmem:[#allocation2 + $0xd9] sm:$0xff]
      %v2184 = vld [vmem:[#allocation2 + $0xe1] sm:$0xff]
      %v2185 = vld [vmem:[#allocation2 + $0xe9] sm:$0xff]
      %v2186 = vld [vmem:[#allocation2 + $0xf1] sm:$0xff]
      %v2187 = vld [vmem:[#allocation2 + $0xf9] sm:$0xff]
      %v2188 = vld [vmem:[#allocation2 + $0x101] sm:$0xff]
      %v2189 = vld [vmem:[#allocation2 + $0x109] sm:$0xff]
      %v2190 = vld [vmem:[#allocation2 + $0x111] sm:$0xff]
      %v2191 = vld [vmem:[#allocation2 + $0x119] sm:$0xff]
      %v2192 = vld [vmem:[#allocation2 + $0x121] sm:$0xff]
      %v2193 = vmul.f32 %v2161, %v882
      %v2194 = vmul.f32 %v2162, %v887
      %v2195 = vmul.f32 %v2163, %v892
      %v2196 = vmul.f32 %v2164, %v897
      %v2197 = vmul.f32 %v2165, %v902
      %v2198 = vmul.f32 %v2166, %v907
      %v2199 = vmul.f32 %v2167, %v912
      %v2200 = vmul.f32 %v2168, %v917
      %v2201 = vmul.f32 %v2169, %v922
      %v2202 = vmul.f32 %v2170, %v927
      %v2203 = vmul.f32 %v2171, %v932
      %v2204 = vmul.f32 %v2172, %v937
      %v2205 = vmul.f32 %v2173, %v942
      %v2206 = vmul.f32 %v2174, %v947
      %v2207 = vmul.f32 %v2175, %v952
      %v2208 = vmul.f32 %v2176, %v957
      %v2209 = vmul.f32 %v2177, %v962
      %v2210 = vmul.f32 %v2178, %v967
      %v2211 = vmul.f32 %v2179, %v972
      %v2212 = vmul.f32 %v2180, %v977
      %v2213 = vmul.f32 %v2181, %v982
      %v2214 = vmul.f32 %v2182, %v987
      %v2215 = vmul.f32 %v2183, %v992
      %v2216 = vmul.f32 %v2184, %v997
      %v2217 = vmul.f32 %v2185, %v1002
      %v2218 = vmul.f32 %v2186, %v1007
      %v2219 = vmul.f32 %v2187, %v1012
      %v2220 = vmul.f32 %v2188, %v1017
      %v2221 = vmul.f32 %v2189, %v1022
      %v2222 = vmul.f32 %v2190, %v1027
      %v2223 = vmul.f32 %v2191, %v1032
      %v2224 = vmul.f32 %v2192, %v1037
      %2225 = vst.msk [vmem:[#allocation3 + $0x10] sm:$0xff] %vm358, %v2193
      %2226 = vst.msk [vmem:[#allocation3 + $0x28] sm:$0xff] %vm358, %v2194
      %2227 = vst.msk [vmem:[#allocation3 + $0x40] sm:$0xff] %vm358, %v2195
      %2228 = vst.msk [vmem:[#allocation3 + $0x58] sm:$0xff] %vm358, %v2196
      %2229 = vst.msk [vmem:[#allocation3 + $0x70] sm:$0xff] %vm358, %v2197
      %2230 = vst.msk [vmem:[#allocation3 + $0x88] sm:$0xff] %vm358, %v2198
      %2231 = vst.msk [vmem:[#allocation3 + $0xa0] sm:$0xff] %vm358, %v2199
      %2232 = vst.msk [vmem:[#allocation3 + $0xb8] sm:$0xff] %vm358, %v2200
      %2233 = vst.msk [vmem:[#allocation3 + $0xd0] sm:$0xff] %vm358, %v2201
      %2234 = vst.msk [vmem:[#allocation3 + $0xe8] sm:$0xff] %vm358, %v2202
      %2235 = vst.msk [vmem:[#allocation3 + $0x100] sm:$0xff] %vm358, %v2203
      %2236 = vst.msk [vmem:[#allocation3 + $0x118] sm:$0xff] %vm358, %v2204
      %2237 = vst.msk [vmem:[#allocation3 + $0x130] sm:$0xff] %vm358, %v2205
      %2238 = vst.msk [vmem:[#allocation3 + $0x148] sm:$0xff] %vm358, %v2206
      %2239 = vst.msk [vmem:[#allocation3 + $0x160] sm:$0xff] %vm358, %v2207
      %2240 = vst.msk [vmem:[#allocation3 + $0x178] sm:$0xff] %vm358, %v2208
      %2241 = vst.msk [vmem:[#allocation3 + $0x190] sm:$0xff] %vm358, %v2209
      %2242 = vst.msk [vmem:[#allocation3 + $0x1a8] sm:$0xff] %vm358, %v2210
      %2243 = vst.msk [vmem:[#allocation3 + $0x1c0] sm:$0xff] %vm358, %v2211
      %2244 = vst.msk [vmem:[#allocation3 + $0x1d8] sm:$0xff] %vm358, %v2212
      %2245 = vst.msk [vmem:[#allocation3 + $0x1f0] sm:$0xff] %vm358, %v2213
      %2246 = vst.msk [vmem:[#allocation3 + $0x208] sm:$0xff] %vm358, %v2214
      %2247 = vst.msk [vmem:[#allocation3 + $0x220] sm:$0xff] %vm358, %v2215
      %2248 = vst.msk [vmem:[#allocation3 + $0x238] sm:$0xff] %vm358, %v2216
      %2249 = vst.msk [vmem:[#allocation3 + $0x250] sm:$0xff] %vm358, %v2217
      %2250 = vst.msk [vmem:[#allocation3 + $0x268] sm:$0xff] %vm358, %v2218
      %2251 = vst.msk [vmem:[#allocation3 + $0x280] sm:$0xff] %vm358, %v2219
      %2252 = vst.msk [vmem:[#allocation3 + $0x298] sm:$0xff] %vm358, %v2220
      %2253 = vst.msk [vmem:[#allocation3 + $0x2b0] sm:$0xff] %vm358, %v2221
      %2254 = vst.msk [vmem:[#allocation3 + $0x2c8] sm:$0xff] %vm358, %v2222
      %2255 = vst.msk [vmem:[#allocation3 + $0x2e0] sm:$0xff] %vm358, %v2223
      %2256 = vst.msk [vmem:[#allocation3 + $0x2f8] sm:$0xff] %vm358, %v2224
      %v2257 = vld [vmem:[#allocation3] sm:$0xff]
      %v2258 = vld [vmem:[#allocation3 + $0x8] sm:$0xff]
      %v2259 = vld [vmem:[#allocation3 + $0x10] sm:$0xff]
      %v2260 = vld [vmem:[#allocation3 + $0x18] sm:$0xff]
      %v2261 = vld [vmem:[#allocation3 + $0x20] sm:$0xff]
      %v2262 = vld [vmem:[#allocation3 + $0x28] sm:$0xff]
      %v2263 = vld [vmem:[#allocation3 + $0x30] sm:$0xff]
      %v2264 = vld [vmem:[#allocation3 + $0x38] sm:$0xff]
      %v2265 = vld [vmem:[#allocation3 + $0x40] sm:$0xff]
      %v2266 = vld [vmem:[#allocation3 + $0x48] sm:$0xff]
      %v2267 = vld [vmem:[#allocation3 + $0x50] sm:$0xff]
      %v2268 = vld [vmem:[#allocation3 + $0x58] sm:$0xff]
      %v2269 = vld [vmem:[#allocation3 + $0x60] sm:$0xff]
      %v2270 = vld [vmem:[#allocation3 + $0x68] sm:$0xff]
      %v2271 = vld [vmem:[#allocation3 + $0x70] sm:$0xff]
      %v2272 = vld [vmem:[#allocation3 + $0x78] sm:$0xff]
      %v2273 = vld [vmem:[#allocation3 + $0x80] sm:$0xff]
      %v2274 = vld [vmem:[#allocation3 + $0x88] sm:$0xff]
      %v2275 = vld [vmem:[#allocation3 + $0x90] sm:$0xff]
      %v2276 = vld [vmem:[#allocation3 + $0x98] sm:$0xff]
      %v2277 = vld [vmem:[#allocation3 + $0xa0] sm:$0xff]
      %v2278 = vld [vmem:[#allocation3 + $0xa8] sm:$0xff]
      %v2279 = vld [vmem:[#allocation3 + $0xb0] sm:$0xff]
      %v2280 = vld [vmem:[#allocation3 + $0xb8] sm:$0xff]
      %v2281 = vld [vmem:[#allocation3 + $0xc0] sm:$0xff]
      %v2282 = vld [vmem:[#allocation3 + $0xc8] sm:$0xff]
      %v2283 = vld [vmem:[#allocation3 + $0xd0] sm:$0xff]
      %v2284 = vld [vmem:[#allocation3 + $0xd8] sm:$0xff]
      %v2285 = vld [vmem:[#allocation3 + $0xe0] sm:$0xff]
      %v2286 = vld [vmem:[#allocation3 + $0xe8] sm:$0xff]
      %v2287 = vld [vmem:[#allocation3 + $0xf0] sm:$0xff]
      %v2288 = vld [vmem:[#allocation3 + $0xf8] sm:$0xff]
      %v2289 = vld [vmem:[#allocation3 + $0x100] sm:$0xff]
      %v2290 = vld [vmem:[#allocation3 + $0x108] sm:$0xff]
      %v2291 = vld [vmem:[#allocation3 + $0x110] sm:$0xff]
      %v2292 = vld [vmem:[#allocation3 + $0x118] sm:$0xff]
      %v2293 = vld [vmem:[#allocation3 + $0x120] sm:$0xff]
      %v2294 = vld [vmem:[#allocation3 + $0x128] sm:$0xff]
      %v2295 = vld [vmem:[#allocation3 + $0x130] sm:$0xff]
      %v2296 = vld [vmem:[#allocation3 + $0x138] sm:$0xff]
      %v2297 = vld [vmem:[#allocation3 + $0x140] sm:$0xff]
      %v2298 = vld [vmem:[#allocation3 + $0x148] sm:$0xff]
      %v2299 = vld [vmem:[#allocation3 + $0x150] sm:$0xff]
      %v2300 = vld [vmem:[#allocation3 + $0x158] sm:$0xff]
      %v2301 = vld [vmem:[#allocation3 + $0x160] sm:$0xff]
      %v2302 = vld [vmem:[#allocation3 + $0x168] sm:$0xff]
      %v2303 = vld [vmem:[#allocation3 + $0x170] sm:$0xff]
      %v2304 = vld [vmem:[#allocation3 + $0x178] sm:$0xff]
      %v2305 = vld [vmem:[#allocation3 + $0x180] sm:$0xff]
      %v2306 = vld [vmem:[#allocation3 + $0x188] sm:$0xff]
      %v2307 = vld [vmem:[#allocation3 + $0x190] sm:$0xff]
      %v2308 = vld [vmem:[#allocation3 + $0x198] sm:$0xff]
      %v2309 = vld [vmem:[#allocation3 + $0x1a0] sm:$0xff]
      %v2310 = vld [vmem:[#allocation3 + $0x1a8] sm:$0xff]
      %v2311 = vld [vmem:[#allocation3 + $0x1b0] sm:$0xff]
      %v2312 = vld [vmem:[#allocation3 + $0x1b8] sm:$0xff]
      %v2313 = vld [vmem:[#allocation3 + $0x1c0] sm:$0xff]
      %v2314 = vld [vmem:[#allocation3 + $0x1c8] sm:$0xff]
      %v2315 = vld [vmem:[#allocation3 + $0x1d0] sm:$0xff]
      %v2316 = vld [vmem:[#allocation3 + $0x1d8] sm:$0xff]
      %v2317 = vld [vmem:[#allocation3 + $0x1e0] sm:$0xff]
      %v2318 = vld [vmem:[#allocation3 + $0x1e8] sm:$0xff]
      %v2319 = vld [vmem:[#allocation3 + $0x1f0] sm:$0xff]
      %v2320 = vld [vmem:[#allocation3 + $0x1f8] sm:$0xff]
      %v2321 = vld [vmem:[#allocation3 + $0x200] sm:$0xff]
      %v2322 = vld [vmem:[#allocation3 + $0x208] sm:$0xff]
      %v2323 = vld [vmem:[#allocation3 + $0x210] sm:$0xff]
      %v2324 = vld [vmem:[#allocation3 + $0x218] sm:$0xff]
      %v2325 = vld [vmem:[#allocation3 + $0x220] sm:$0xff]
      %v2326 = vld [vmem:[#allocation3 + $0x228] sm:$0xff]
      %v2327 = vld [vmem:[#allocation3 + $0x230] sm:$0xff]
      %v2328 = vld [vmem:[#allocation3 + $0x238] sm:$0xff]
      %v2329 = vld [vmem:[#allocation3 + $0x240] sm:$0xff]
      %v2330 = vld [vmem:[#allocation3 + $0x248] sm:$0xff]
      %v2331 = vld [vmem:[#allocation3 + $0x250] sm:$0xff]
      %v2332 = vld [vmem:[#allocation3 + $0x258] sm:$0xff]
      %v2333 = vld [vmem:[#allocation3 + $0x260] sm:$0xff]
      %v2334 = vld [vmem:[#allocation3 + $0x268] sm:$0xff]
      %v2335 = vld [vmem:[#allocation3 + $0x270] sm:$0xff]
      %v2336 = vld [vmem:[#allocation3 + $0x278] sm:$0xff]
      %v2337 = vld [vmem:[#allocation3 + $0x280] sm:$0xff]
      %v2338 = vld [vmem:[#allocation3 + $0x288] sm:$0xff]
      %v2339 = vld [vmem:[#allocation3 + $0x290] sm:$0xff]
      %v2340 = vld [vmem:[#allocation3 + $0x298] sm:$0xff]
      %v2341 = vld [vmem:[#allocation3 + $0x2a0] sm:$0xff]
      %v2342 = vld [vmem:[#allocation3 + $0x2a8] sm:$0xff]
      %v2343 = vld [vmem:[#allocation3 + $0x2b0] sm:$0xff]
      %v2344 = vld [vmem:[#allocation3 + $0x2b8] sm:$0xff]
      %v2345 = vld [vmem:[#allocation3 + $0x2c0] sm:$0xff]
      %v2346 = vld [vmem:[#allocation3 + $0x2c8] sm:$0xff]
      %v2347 = vld [vmem:[#allocation3 + $0x2d0] sm:$0xff]
      %v2348 = vld [vmem:[#allocation3 + $0x2d8] sm:$0xff]
      %v2349 = vld [vmem:[#allocation3 + $0x2e0] sm:$0xff]
      %v2350 = vld [vmem:[#allocation3 + $0x2e8] sm:$0xff]
      %v2351 = vld [vmem:[#allocation3 + $0x2f0] sm:$0xff]
      %v2352 = vld [vmem:[#allocation3 + $0x2f8] sm:$0xff]
      %v2354 = vlaneseq
      %v2355 = vshrl.u32 %v2354, 7
      %v2356 = vsub.s32 0, %v2355
      %v2357 = vrot.slane %v225, %v2356
      %v2360 = vsel %vm358, %v2259, 0
      %v2363 = vsel %vm358, %v2262, 0
      %v2366 = vsel %vm358, %v2265, 0
      %v2369 = vsel %vm358, %v2268, 0
      %v2372 = vsel %vm358, %v2271, 0
      %v2375 = vsel %vm358, %v2274, 0
      %v2378 = vsel %vm358, %v2277, 0
      %v2381 = vsel %vm358, %v2280, 0
      %v2384 = vsel %vm358, %v2283, 0
      %v2387 = vsel %vm358, %v2286, 0
      %v2390 = vsel %vm358, %v2289, 0
      %v2393 = vsel %vm358, %v2292, 0
      %v2396 = vsel %vm358, %v2295, 0
      %v2399 = vsel %vm358, %v2298, 0
      %v2402 = vsel %vm358, %v2301, 0
      %v2405 = vsel %vm358, %v2304, 0
      %v2408 = vsel %vm358, %v2307, 0
      %v2411 = vsel %vm358, %v2310, 0
      %v2414 = vsel %vm358, %v2313, 0
      %v2417 = vsel %vm358, %v2316, 0
      %v2420 = vsel %vm358, %v2319, 0
      %v2423 = vsel %vm358, %v2322, 0
      %v2426 = vsel %vm358, %v2325, 0
      %v2429 = vsel %vm358, %v2328, 0
      %v2432 = vsel %vm358, %v2331, 0
      %v2435 = vsel %vm358, %v2334, 0
      %v2438 = vsel %vm358, %v2337, 0
      %v2441 = vsel %vm358, %v2340, 0
      %v2444 = vsel %vm358, %v2343, 0
      %v2447 = vsel %vm358, %v2346, 0
      %v2450 = vsel %vm358, %v2349, 0
      %v2453 = vsel %vm358, %v2352, 0
      %2455 = vmatprep.subr.mxu0 0.0
      %2456 = vmatpush1.msra.mxu0 %v226
      %2457 = vmatprep.subr.mxu0 0.0
      %2458 = vmatpush1.msra.mxu0 %v227
      %2459 = vmatprep.subr.mxu0 0.0
      %2460 = vmatpush1.msra.mxu0 %v228
      %2461 = vmatprep.subr.mxu0 0.0
      %2462 = vmatpush1.msra.mxu0 %v229
      %2463 = vmatprep.subr.mxu0 0.0
      %2464 = vmatpush1.msra.mxu0 %v230
      %2465 = vmatprep.subr.mxu0 0.0
      %2466 = vmatpush1.msra.mxu0 %v231
      %2467 = vmatprep.subr.mxu0 0.0
      %2468 = vmatpush1.msra.mxu0 %v232
      %2469 = vmatprep.subr.mxu0 0.0
      %2470 = vmatpush1.msra.mxu0 %v233
      %2471 = vmatprep.subr.mxu0 0.0
      %2472 = vmatpush1.msra.mxu0 %v234
      %2473 = vmatprep.subr.mxu0 0.0
      %2474 = vmatpush1.msra.mxu0 %v235
      %2475 = vmatprep.subr.mxu0 0.0
      %2476 = vmatpush1.msra.mxu0 %v236
      %2477 = vmatprep.subr.mxu0 0.0
      %2478 = vmatpush1.msra.mxu0 %v237
      %2479 = vmatprep.subr.mxu0 0.0
      %2480 = vmatpush1.msra.mxu0 %v238
      %2481 = vmatprep.subr.mxu0 0.0
      %2482 = vmatpush1.msra.mxu0 %v239
      %2483 = vmatprep.subr.mxu0 0.0
      %2484 = vmatpush1.msra.mxu0 %v240
      %2485 = vmatprep.subr.mxu0 0.0
      %2486 = vmatpush1.msra.mxu0 %v241
      %2487 = vmatprep.subr.mxu0 0.0
      %2488 = vmatpush1.msra.mxu0 %v242
      %2489 = vmatprep.subr.mxu0 0.0
      %2490 = vmatpush1.msra.mxu0 %v243
      %2491 = vmatprep.subr.mxu0 0.0
      %2492 = vmatpush1.msra.mxu0 %v244
      %2493 = vmatprep.subr.mxu0 0.0
      %2494 = vmatpush1.msra.mxu0 %v245
      %2495 = vmatprep.subr.mxu0 0.0
      %2496 = vmatpush1.msra.mxu0 %v246
      %2497 = vmatprep.subr.mxu0 0.0
      %2498 = vmatpush1.msra.mxu0 %v247
      %2499 = vmatprep.subr.mxu0 0.0
      %2500 = vmatpush1.msra.mxu0 %v248
      %2501 = vmatprep.subr.mxu0 0.0
      %2502 = vmatpush1.msra.mxu0 %v249
      %2503 = vmatprep.subr.mxu0 0.0
      %2504 = vmatpush1.msra.mxu0 %v250
      %2505 = vmatprep.subr.mxu0 0.0
      %2506 = vmatpush1.msra.mxu0 %v251
      %2507 = vmatprep.subr.mxu0 0.0
      %2508 = vmatpush1.msra.mxu0 %v252
      %2509 = vmatprep.subr.mxu0 0.0
      %2510 = vmatpush1.msra.mxu0 %v253
      %2511 = vmatprep.subr.mxu0 0.0
      %2512 = vmatpush1.msra.mxu0 %v254
      %2513 = vmatprep.subr.mxu0 0.0
      %2514 = vmatpush1.msra.mxu0 %v255
      %2515 = vmatprep.subr.mxu0 0.0
      %2516 = vmatpush1.msra.mxu0 %v256
      %2517 = vmatprep.subr.mxu0 0.0
      %2518 = vmatpush1.msra.mxu0 %v257
      %2519 = vmatprep.mubr.f32.mxu0 %v2258
      %2520 = vmatmul.mubr.f32.gmra.mrb[0].mxu0 %v2257
      %v2521 = vpop.f32.mrb[0].mxu0
      %v2522 = vadd.f32 %v2357, %v2521
      %v2523 = vpop.f32.mrb[0].mxu0
      %2524 = vmatprep.mubr.f32.mxu0 %v2261
      %2525 = vmatmul.mubr.f32.gmra.mrb[0].mxu0 %v2260
      %v2526 = vpop.f32.mrb[0].mxu0
      %v2527 = vadd.f32 %v2357, %v2526
      %v2528 = vpop.f32.mrb[0].mxu0
      %2529 = vmatprep.mubr.f32.mxu0 %v2264
      %2530 = vmatmul.mubr.f32.gmra.mrb[0].mxu0 %v2263
      %v2531 = vpop.f32.mrb[0].mxu0
      %v2532 = vadd.f32 %v2357, %v2531
      %v2533 = vpop.f32.mrb[0].mxu0
      %2534 = vmatprep.mubr.f32.mxu0 %v2267
      %2535 = vmatmul.mubr.f32.gmra.mrb[0].mxu0 %v2266
      %v2536 = vpop.f32.mrb[0].mxu0
      %v2537 = vadd.f32 %v2357, %v2536
      %v2538 = vpop.f32.mrb[0].mxu0
      %2539 = vmatprep.mubr.f32.mxu0 %v2270
      %2540 = vmatmul.mubr.f32.gmra.mrb[0].mxu0 %v2269
      %v2541 = vpop.f32.mrb[0].mxu0
      %v2542 = vadd.f32 %v2357, %v2541
      %v2543 = vpop.f32.mrb[0].mxu0
      %2544 = vmatprep.mubr.f32.mxu0 %v2273
      %2545 = vmatmul.mubr.f32.gmra.mrb[0].mxu0 %v2272
      %v2546 = vpop.f32.mrb[0].mxu0
      %v2547 = vadd.f32 %v2357, %v2546
      %v2548 = vpop.f32.mrb[0].mxu0
      %2549 = vmatprep.mubr.f32.mxu0 %v2276
      %2550 = vmatmul.mubr.f32.gmra.mrb[0].mxu0 %v2275
      %v2551 = vpop.f32.mrb[0].mxu0
      %v2552 = vadd.f32 %v2357, %v2551
      %v2553 = vpop.f32.mrb[0].mxu0
      %2554 = vmatprep.mubr.f32.mxu0 %v2279
      %2555 = vmatmul.mubr.f32.gmra.mrb[0].mxu0 %v2278
      %v2556 = vpop.f32.mrb[0].mxu0
      %v2557 = vadd.f32 %v2357, %v2556
      %v2558 = vpop.f32.mrb[0].mxu0
      %2559 = vmatprep.mubr.f32.mxu0 %v2282
      %2560 = vmatmul.mubr.f32.gmra.mrb[0].mxu0 %v2281
      %v2561 = vpop.f32.mrb[0].mxu0
      %v2562 = vadd.f32 %v2357, %v2561
      %v2563 = vpop.f32.mrb[0].mxu0
      %2564 = vmatprep.mubr.f32.mxu0 %v2285
      %2565 = vmatmul.mubr.f32.gmra.mrb[0].mxu0 %v2284
      %v2566 = vpop.f32.mrb[0].mxu0
      %v2567 = vadd.f32 %v2357, %v2566
      %v2568 = vpop.f32.mrb[0].mxu0
      %2569 = vmatprep.mubr.f32.mxu0 %v2288
      %2570 = vmatmul.mubr.f32.gmra.mrb[0].mxu0 %v2287
      %v2571 = vpop.f32.mrb[0].mxu0
      %v2572 = vadd.f32 %v2357, %v2571
      %v2573 = vpop.f32.mrb[0].mxu0
      %2574 = vmatprep.mubr.f32.mxu0 %v2291
      %2575 = vmatmul.mubr.f32.gmra.mrb[0].mxu0 %v2290
      %v2576 = vpop.f32.mrb[0].mxu0
      %v2577 = vadd.f32 %v2357, %v2576
      %v2578 = vpop.f32.mrb[0].mxu0
      %2579 = vmatprep.mubr.f32.mxu0 %v2294
      %2580 = vmatmul.mubr.f32.gmra.mrb[0].mxu0 %v2293
      %v2581 = vpop.f32.mrb[0].mxu0
      %v2582 = vadd.f32 %v2357, %v2581
      %v2583 = vpop.f32.mrb[0].mxu0
      %2584 = vmatprep.mubr.f32.mxu0 %v2297
      %2585 = vmatmul.mubr.f32.gmra.mrb[0].mxu0 %v2296
      %v2586 = vpop.f32.mrb[0].mxu0
      %v2587 = vadd.f32 %v2357, %v2586
      %v2588 = vpop.f32.mrb[0].mxu0
      %2589 = vmatprep.mubr.f32.mxu0 %v2300
      %2590 = vmatmul.mubr.f32.gmra.mrb[0].mxu0 %v2299
      %v2591 = vpop.f32.mrb[0].mxu0
      %v2592 = vadd.f32 %v2357, %v2591
      %v2593 = vpop.f32.mrb[0].mxu0
      %2594 = vmatprep.mubr.f32.mxu0 %v2303
      %2595 = vmatmul.mubr.f32.gmra.mrb[0].mxu0 %v2302
      %v2596 = vpop.f32.mrb[0].mxu0
      %v2597 = vadd.f32 %v2357, %v2596
      %v2598 = vpop.f32.mrb[0].mxu0
      %2599 = vmatprep.mubr.f32.mxu0 %v2306
      %2600 = vmatmul.mubr.f32.gmra.mrb[0].mxu0 %v2305
      %v2601 = vpop.f32.mrb[0].mxu0
      %v2602 = vadd.f32 %v2357, %v2601
      %v2603 = vpop.f32.mrb[0].mxu0
      %2604 = vmatprep.mubr.f32.mxu0 %v2309
      %2605 = vmatmul.mubr.f32.gmra.mrb[0].mxu0 %v2308
      %v2606 = vpop.f32.mrb[0].mxu0
      %v2607 = vadd.f32 %v2357, %v2606
      %v2608 = vpop.f32.mrb[0].mxu0
      %2609 = vmatprep.mubr.f32.mxu0 %v2312
      %2610 = vmatmul.mubr.f32.gmra.mrb[0].mxu0 %v2311
      %v2611 = vpop.f32.mrb[0].mxu0
      %v2612 = vadd.f32 %v2357, %v2611
      %v2613 = vpop.f32.mrb[0].mxu0
      %2614 = vmatprep.mubr.f32.mxu0 %v2315
      %2615 = vmatmul.mubr.f32.gmra.mrb[0].mxu0 %v2314
      %v2616 = vpop.f32.mrb[0].mxu0
      %v2617 = vadd.f32 %v2357, %v2616
      %v2618 = vpop.f32.mrb[0].mxu0
      %2619 = vmatprep.mubr.f32.mxu0 %v2318
      %2620 = vmatmul.mubr.f32.gmra.mrb[0].mxu0 %v2317
      %v2621 = vpop.f32.mrb[0].mxu0
      %v2622 = vadd.f32 %v2357, %v2621
      %v2623 = vpop.f32.mrb[0].mxu0
      %2624 = vmatprep.mubr.f32.mxu0 %v2321
      %2625 = vmatmul.mubr.f32.gmra.mrb[0].mxu0 %v2320
      %v2626 = vpop.f32.mrb[0].mxu0
      %v2627 = vadd.f32 %v2357, %v2626
      %v2628 = vpop.f32.mrb[0].mxu0
      %2629 = vmatprep.mubr.f32.mxu0 %v2324
      %2630 = vmatmul.mubr.f32.gmra.mrb[0].mxu0 %v2323
      %v2631 = vpop.f32.mrb[0].mxu0
      %v2632 = vadd.f32 %v2357, %v2631
      %v2633 = vpop.f32.mrb[0].mxu0
      %2634 = vmatprep.mubr.f32.mxu0 %v2327
      %2635 = vmatmul.mubr.f32.gmra.mrb[0].mxu0 %v2326
      %v2636 = vpop.f32.mrb[0].mxu0
      %v2637 = vadd.f32 %v2357, %v2636
      %v2638 = vpop.f32.mrb[0].mxu0
      %2639 = vmatprep.mubr.f32.mxu0 %v2330
      %2640 = vmatmul.mubr.f32.gmra.mrb[0].mxu0 %v2329
      %v2641 = vpop.f32.mrb[0].mxu0
      %v2642 = vadd.f32 %v2357, %v2641
      %v2643 = vpop.f32.mrb[0].mxu0
      %2644 = vmatprep.mubr.f32.mxu0 %v2333
      %2645 = vmatmul.mubr.f32.gmra.mrb[0].mxu0 %v2332
      %v2646 = vpop.f32.mrb[0].mxu0
      %v2647 = vadd.f32 %v2357, %v2646
      %v2648 = vpop.f32.mrb[0].mxu0
      %2649 = vmatprep.mubr.f32.mxu0 %v2336
      %2650 = vmatmul.mubr.f32.gmra.mrb[0].mxu0 %v2335
      %v2651 = vpop.f32.mrb[0].mxu0
      %v2652 = vadd.f32 %v2357, %v2651
      %v2653 = vpop.f32.mrb[0].mxu0
      %2654 = vmatprep.mubr.f32.mxu0 %v2339
      %2655 = vmatmul.mubr.f32.gmra.mrb[0].mxu0 %v2338
      %v2656 = vpop.f32.mrb[0].mxu0
      %v2657 = vadd.f32 %v2357, %v2656
      %v2658 = vpop.f32.mrb[0].mxu0
      %2659 = vmatprep.mubr.f32.mxu0 %v2342
      %2660 = vmatmul.mubr.f32.gmra.mrb[0].mxu0 %v2341
      %v2661 = vpop.f32.mrb[0].mxu0
      %v2662 = vadd.f32 %v2357, %v2661
      %v2663 = vpop.f32.mrb[0].mxu0
      %2664 = vmatprep.mubr.f32.mxu0 %v2345
      %2665 = vmatmul.mubr.f32.gmra.mrb[0].mxu0 %v2344
      %v2666 = vpop.f32.mrb[0].mxu0
      %v2667 = vadd.f32 %v2357, %v2666
      %v2668 = vpop.f32.mrb[0].mxu0
      %2669 = vmatprep.mubr.f32.mxu0 %v2348
      %2670 = vmatmul.mubr.f32.gmra.mrb[0].mxu0 %v2347
      %v2671 = vpop.f32.mrb[0].mxu0
      %v2672 = vadd.f32 %v2357, %v2671
      %v2673 = vpop.f32.mrb[0].mxu0
      %2674 = vmatprep.mubr.f32.mxu0 %v2351
      %2675 = vmatmul.mubr.f32.gmra.mrb[0].mxu0 %v2350
      %v2676 = vpop.f32.mrb[0].mxu0
      %v2677 = vadd.f32 %v2357, %v2676
      %v2678 = vpop.f32.mrb[0].mxu0
      %2679 = vdwg.mxu0
      %2680 = vmatprep.subr.mxu0 0.0
      %2681 = vmatpush1.msra.mxu0 %v258
      %2682 = vmatprep.subr.mxu0 0.0
      %2683 = vmatpush1.msra.mxu0 %v259
      %2684 = vmatprep.subr.mxu0 0.0
      %2685 = vmatpush1.msra.mxu0 %v260
      %2686 = vmatprep.subr.mxu0 0.0
      %2687 = vmatpush1.msra.mxu0 %v261
      %2688 = vmatprep.subr.mxu0 0.0
      %2689 = vmatpush1.msra.mxu0 0.0
      %2690 = vmatprep.subr.mxu0 0.0
      %2691 = vmatpush1.msra.mxu0 0.0
      %2692 = vmatprep.subr.mxu0 0.0
      %2693 = vmatpush1.msra.mxu0 0.0
      %2694 = vmatprep.subr.mxu0 0.0
      %2695 = vmatpush1.msra.mxu0 0.0
      %2696 = vmatprep.subr.mxu0 0.0
      %2697 = vmatpush1.msra.mxu0 0.0
      %2698 = vmatprep.subr.mxu0 0.0
      %2699 = vmatpush1.msra.mxu0 0.0
      %2700 = vmatprep.subr.mxu0 0.0
      %2701 = vmatpush1.msra.mxu0 0.0
      %2702 = vmatprep.subr.mxu0 0.0
      %2703 = vmatpush1.msra.mxu0 0.0
      %2704 = vmatprep.subr.mxu0 0.0
      %2705 = vmatpush1.msra.mxu0 0.0
      %2706 = vmatprep.subr.mxu0 0.0
      %2707 = vmatpush1.msra.mxu0 0.0
      %2708 = vmatprep.subr.mxu0 0.0
      %2709 = vmatpush1.msra.mxu0 0.0
      %2710 = vmatprep.subr.mxu0 0.0
      %2711 = vmatpush1.msra.mxu0 0.0
      %2712 = vmatprep.subr.mxu0 0.0
      %2713 = vmatpush1.msra.mxu0 0.0
      %2714 = vmatprep.subr.mxu0 0.0
      %2715 = vmatpush1.msra.mxu0 0.0
      %2716 = vmatprep.subr.mxu0 0.0
      %2717 = vmatpush1.msra.mxu0 0.0
      %2718 = vmatprep.subr.mxu0 0.0
      %2719 = vmatpush1.msra.mxu0 0.0
      %2720 = vmatprep.subr.mxu0 0.0
      %2721 = vmatpush1.msra.mxu0 0.0
      %2722 = vmatprep.subr.mxu0 0.0
      %2723 = vmatpush1.msra.mxu0 0.0
      %2724 = vmatprep.subr.mxu0 0.0
      %2725 = vmatpush1.msra.mxu0 0.0
      %2726 = vmatprep.subr.mxu0 0.0
      %2727 = vmatpush1.msra.mxu0 0.0
      %2728 = vmatprep.subr.mxu0 0.0
      %2729 = vmatpush1.msra.mxu0 0.0
      %2730 = vmatprep.subr.mxu0 0.0
      %2731 = vmatpush1.msra.mxu0 0.0
      %2732 = vmatprep.subr.mxu0 0.0
      %2733 = vmatpush1.msra.mxu0 0.0
      %2734 = vmatprep.subr.mxu0 0.0
      %2735 = vmatpush1.msra.mxu0 0.0
      %2736 = vmatprep.subr.mxu0 0.0
      %2737 = vmatpush1.msra.mxu0 0.0
      %2738 = vmatprep.subr.mxu0 0.0
      %2739 = vmatpush1.msra.mxu0 0.0
      %2740 = vmatprep.subr.mxu0 0.0
      %2741 = vmatpush1.msra.mxu0 0.0
      %2742 = vmatprep.subr.mxu0 0.0
      %2743 = vmatpush1.msra.mxu0 0.0
      %2744 = vmatprep.mubr.f32.mxu0 0.0
      %2745 = vmatmul.mubr.f32.gmra.mrb[0].mxu0 %v2360
      %v2746 = vpop.f32.mrb[0].mxu0
      %v2747 = vadd.f32 %v2522, %v2746
      %v2748 = vpop.f32.mrb[0].mxu0
      %2749 = vmatprep.mubr.f32.mxu0 0.0
      %2750 = vmatmul.mubr.f32.gmra.mrb[0].mxu0 %v2363
      %v2751 = vpop.f32.mrb[0].mxu0
      %v2752 = vadd.f32 %v2527, %v2751
      %v2753 = vpop.f32.mrb[0].mxu0
      %2754 = vmatprep.mubr.f32.mxu0 0.0
      %2755 = vmatmul.mubr.f32.gmra.mrb[0].mxu0 %v2366
      %v2756 = vpop.f32.mrb[0].mxu0
      %v2757 = vadd.f32 %v2532, %v2756
      %v2758 = vpop.f32.mrb[0].mxu0
      %2759 = vmatprep.mubr.f32.mxu0 0.0
      %2760 = vmatmul.mubr.f32.gmra.mrb[0].mxu0 %v2369
      %v2761 = vpop.f32.mrb[0].mxu0
      %v2762 = vadd.f32 %v2537, %v2761
      %v2763 = vpop.f32.mrb[0].mxu0
      %2764 = vmatprep.mubr.f32.mxu0 0.0
      %2765 = vmatmul.mubr.f32.gmra.mrb[0].mxu0 %v2372
      %v2766 = vpop.f32.mrb[0].mxu0
      %v2767 = vadd.f32 %v2542, %v2766
      %v2768 = vpop.f32.mrb[0].mxu0
      %2769 = vmatprep.mubr.f32.mxu0 0.0
      %2770 = vmatmul.mubr.f32.gmra.mrb[0].mxu0 %v2375
      %v2771 = vpop.f32.mrb[0].mxu0
      %v2772 = vadd.f32 %v2547, %v2771
      %v2773 = vpop.f32.mrb[0].mxu0
      %2774 = vmatprep.mubr.f32.mxu0 0.0
      %2775 = vmatmul.mubr.f32.gmra.mrb[0].mxu0 %v2378
      %v2776 = vpop.f32.mrb[0].mxu0
      %v2777 = vadd.f32 %v2552, %v2776
      %v2778 = vpop.f32.mrb[0].mxu0
      %2779 = vmatprep.mubr.f32.mxu0 0.0
      %2780 = vmatmul.mubr.f32.gmra.mrb[0].mxu0 %v2381
      %v2781 = vpop.f32.mrb[0].mxu0
      %v2782 = vadd.f32 %v2557, %v2781
      %v2783 = vpop.f32.mrb[0].mxu0
      %2784 = vmatprep.mubr.f32.mxu0 0.0
      %2785 = vmatmul.mubr.f32.gmra.mrb[0].mxu0 %v2384
      %v2786 = vpop.f32.mrb[0].mxu0
      %v2787 = vadd.f32 %v2562, %v2786
      %v2788 = vpop.f32.mrb[0].mxu0
      %2789 = vmatprep.mubr.f32.mxu0 0.0
      %2790 = vmatmul.mubr.f32.gmra.mrb[0].mxu0 %v2387
      %v2791 = vpop.f32.mrb[0].mxu0
      %v2792 = vadd.f32 %v2567, %v2791
      %v2793 = vpop.f32.mrb[0].mxu0
      %2794 = vmatprep.mubr.f32.mxu0 0.0
      %2795 = vmatmul.mubr.f32.gmra.mrb[0].mxu0 %v2390
      %v2796 = vpop.f32.mrb[0].mxu0
      %v2797 = vadd.f32 %v2572, %v2796
      %v2798 = vpop.f32.mrb[0].mxu0
      %2799 = vmatprep.mubr.f32.mxu0 0.0
      %2800 = vmatmul.mubr.f32.gmra.mrb[0].mxu0 %v2393
      %v2801 = vpop.f32.mrb[0].mxu0
      %v2802 = vadd.f32 %v2577, %v2801
      %v2803 = vpop.f32.mrb[0].mxu0
      %2804 = vmatprep.mubr.f32.mxu0 0.0
      %2805 = vmatmul.mubr.f32.gmra.mrb[0].mxu0 %v2396
      %v2806 = vpop.f32.mrb[0].mxu0
      %v2807 = vadd.f32 %v2582, %v2806
      %v2808 = vpop.f32.mrb[0].mxu0
      %2809 = vmatprep.mubr.f32.mxu0 0.0
      %2810 = vmatmul.mubr.f32.gmra.mrb[0].mxu0 %v2399
      %v2811 = vpop.f32.mrb[0].mxu0
      %v2812 = vadd.f32 %v2587, %v2811
      %v2813 = vpop.f32.mrb[0].mxu0
      %2814 = vmatprep.mubr.f32.mxu0 0.0
      %2815 = vmatmul.mubr.f32.gmra.mrb[0].mxu0 %v2402
      %v2816 = vpop.f32.mrb[0].mxu0
      %v2817 = vadd.f32 %v2592, %v2816
      %v2818 = vpop.f32.mrb[0].mxu0
      %2819 = vmatprep.mubr.f32.mxu0 0.0
      %2820 = vmatmul.mubr.f32.gmra.mrb[0].mxu0 %v2405
      %v2821 = vpop.f32.mrb[0].mxu0
      %v2822 = vadd.f32 %v2597, %v2821
      %v2823 = vpop.f32.mrb[0].mxu0
      %2824 = vmatprep.mubr.f32.mxu0 0.0
      %2825 = vmatmul.mubr.f32.gmra.mrb[0].mxu0 %v2408
      %v2826 = vpop.f32.mrb[0].mxu0
      %v2827 = vadd.f32 %v2602, %v2826
      %v2828 = vpop.f32.mrb[0].mxu0
      %2829 = vmatprep.mubr.f32.mxu0 0.0
      %2830 = vmatmul.mubr.f32.gmra.mrb[0].mxu0 %v2411
      %v2831 = vpop.f32.mrb[0].mxu0
      %v2832 = vadd.f32 %v2607, %v2831
      %v2833 = vpop.f32.mrb[0].mxu0
      %2834 = vmatprep.mubr.f32.mxu0 0.0
      %2835 = vmatmul.mubr.f32.gmra.mrb[0].mxu0 %v2414
      %v2836 = vpop.f32.mrb[0].mxu0
      %v2837 = vadd.f32 %v2612, %v2836
      %v2838 = vpop.f32.mrb[0].mxu0
      %2839 = vmatprep.mubr.f32.mxu0 0.0
      %2840 = vmatmul.mubr.f32.gmra.mrb[0].mxu0 %v2417
      %v2841 = vpop.f32.mrb[0].mxu0
      %v2842 = vadd.f32 %v2617, %v2841
      %v2843 = vpop.f32.mrb[0].mxu0
      %2844 = vmatprep.mubr.f32.mxu0 0.0
      %2845 = vmatmul.mubr.f32.gmra.mrb[0].mxu0 %v2420
      %v2846 = vpop.f32.mrb[0].mxu0
      %v2847 = vadd.f32 %v2622, %v2846
      %v2848 = vpop.f32.mrb[0].mxu0
      %2849 = vmatprep.mubr.f32.mxu0 0.0
      %2850 = vmatmul.mubr.f32.gmra.mrb[0].mxu0 %v2423
      %v2851 = vpop.f32.mrb[0].mxu0
      %v2852 = vadd.f32 %v2627, %v2851
      %v2853 = vpop.f32.mrb[0].mxu0
      %2854 = vmatprep.mubr.f32.mxu0 0.0
      %2855 = vmatmul.mubr.f32.gmra.mrb[0].mxu0 %v2426
      %v2856 = vpop.f32.mrb[0].mxu0
      %v2857 = vadd.f32 %v2632, %v2856
      %v2858 = vpop.f32.mrb[0].mxu0
      %2859 = vmatprep.mubr.f32.mxu0 0.0
      %2860 = vmatmul.mubr.f32.gmra.mrb[0].mxu0 %v2429
      %v2861 = vpop.f32.mrb[0].mxu0
      %v2862 = vadd.f32 %v2637, %v2861
      %v2863 = vpop.f32.mrb[0].mxu0
      %2864 = vmatprep.mubr.f32.mxu0 0.0
      %2865 = vmatmul.mubr.f32.gmra.mrb[0].mxu0 %v2432
      %v2866 = vpop.f32.mrb[0].mxu0
      %v2867 = vadd.f32 %v2642, %v2866
      %v2868 = vpop.f32.mrb[0].mxu0
      %2869 = vmatprep.mubr.f32.mxu0 0.0
      %2870 = vmatmul.mubr.f32.gmra.mrb[0].mxu0 %v2435
      %v2871 = vpop.f32.mrb[0].mxu0
      %v2872 = vadd.f32 %v2647, %v2871
      %v2873 = vpop.f32.mrb[0].mxu0
      %2874 = vmatprep.mubr.f32.mxu0 0.0
      %2875 = vmatmul.mubr.f32.gmra.mrb[0].mxu0 %v2438
      %v2876 = vpop.f32.mrb[0].mxu0
      %v2877 = vadd.f32 %v2652, %v2876
      %v2878 = vpop.f32.mrb[0].mxu0
      %2879 = vmatprep.mubr.f32.mxu0 0.0
      %2880 = vmatmul.mubr.f32.gmra.mrb[0].mxu0 %v2441
      %v2881 = vpop.f32.mrb[0].mxu0
      %v2882 = vadd.f32 %v2657, %v2881
      %v2883 = vpop.f32.mrb[0].mxu0
      %2884 = vmatprep.mubr.f32.mxu0 0.0
      %2885 = vmatmul.mubr.f32.gmra.mrb[0].mxu0 %v2444
      %v2886 = vpop.f32.mrb[0].mxu0
      %v2887 = vadd.f32 %v2662, %v2886
      %v2888 = vpop.f32.mrb[0].mxu0
      %2889 = vmatprep.mubr.f32.mxu0 0.0
      %2890 = vmatmul.mubr.f32.gmra.mrb[0].mxu0 %v2447
      %v2891 = vpop.f32.mrb[0].mxu0
      %v2892 = vadd.f32 %v2667, %v2891
      %v2893 = vpop.f32.mrb[0].mxu0
      %2894 = vmatprep.mubr.f32.mxu0 0.0
      %2895 = vmatmul.mubr.f32.gmra.mrb[0].mxu0 %v2450
      %v2896 = vpop.f32.mrb[0].mxu0
      %v2897 = vadd.f32 %v2672, %v2896
      %v2898 = vpop.f32.mrb[0].mxu0
      %2899 = vmatprep.mubr.f32.mxu0 0.0
      %2900 = vmatmul.mubr.f32.gmra.mrb[0].mxu0 %v2453
      %v2901 = vpop.f32.mrb[0].mxu0
      %v2902 = vadd.f32 %v2677, %v2901
      %v2903 = vpop.f32.mrb[0].mxu0
      %2904 = vdwg.mxu0
      %vm2905 = vcmask 130048
      %2906 = vst.msk [vmem:[%s224] sm:$0xff] %vm2905, %v2747
      %2907 = vst.msk [vmem:[%s224 + $0x8] sm:$0xff] %vm2905, %v2752
      %2908 = vst.msk [vmem:[%s224 + $0x10] sm:$0xff] %vm2905, %v2757
      %2909 = vst.msk [vmem:[%s224 + $0x18] sm:$0xff] %vm2905, %v2762
      %2910 = vst.msk [vmem:[%s224 + $0x20] sm:$0xff] %vm2905, %v2767
      %2911 = vst.msk [vmem:[%s224 + $0x28] sm:$0xff] %vm2905, %v2772
      %2912 = vst.msk [vmem:[%s224 + $0x30] sm:$0xff] %vm2905, %v2777
      %2913 = vst.msk [vmem:[%s224 + $0x38] sm:$0xff] %vm2905, %v2782
      %2914 = vst.msk [vmem:[%s224 + $0x40] sm:$0xff] %vm2905, %v2787
      %2915 = vst.msk [vmem:[%s224 + $0x48] sm:$0xff] %vm2905, %v2792
      %2916 = vst.msk [vmem:[%s224 + $0x50] sm:$0xff] %vm2905, %v2797
      %2917 = vst.msk [vmem:[%s224 + $0x58] sm:$0xff] %vm2905, %v2802
      %2918 = vst.msk [vmem:[%s224 + $0x60] sm:$0xff] %vm2905, %v2807
      %2919 = vst.msk [vmem:[%s224 + $0x68] sm:$0xff] %vm2905, %v2812
      %2920 = vst.msk [vmem:[%s224 + $0x70] sm:$0xff] %vm2905, %v2817
      %2921 = vst.msk [vmem:[%s224 + $0x78] sm:$0xff] %vm2905, %v2822
      %2922 = vst.msk [vmem:[%s224 + $0x80] sm:$0xff] %vm2905, %v2827
      %2923 = vst.msk [vmem:[%s224 + $0x88] sm:$0xff] %vm2905, %v2832
      %2924 = vst.msk [vmem:[%s224 + $0x90] sm:$0xff] %vm2905, %v2837
      %2925 = vst.msk [vmem:[%s224 + $0x98] sm:$0xff] %vm2905, %v2842
      %2926 = vst.msk [vmem:[%s224 + $0xa0] sm:$0xff] %vm2905, %v2847
      %2927 = vst.msk [vmem:[%s224 + $0xa8] sm:$0xff] %vm2905, %v2852
      %2928 = vst.msk [vmem:[%s224 + $0xb0] sm:$0xff] %vm2905, %v2857
      %2929 = vst.msk [vmem:[%s224 + $0xb8] sm:$0xff] %vm2905, %v2862
      %2930 = vst.msk [vmem:[%s224 + $0xc0] sm:$0xff] %vm2905, %v2867
      %2931 = vst.msk [vmem:[%s224 + $0xc8] sm:$0xff] %vm2905, %v2872
      %2932 = vst.msk [vmem:[%s224 + $0xd0] sm:$0xff] %vm2905, %v2877
      %2933 = vst.msk [vmem:[%s224 + $0xd8] sm:$0xff] %vm2905, %v2882
      %2934 = vst.msk [vmem:[%s224 + $0xe0] sm:$0xff] %vm2905, %v2887
      %2935 = vst.msk [vmem:[%s224 + $0xe8] sm:$0xff] %vm2905, %v2892
      %2936 = vst.msk [vmem:[%s224 + $0xf0] sm:$0xff] %vm2905, %v2897
      %2937 = vst.msk [vmem:[%s224 + $0xf8] sm:$0xff] %vm2905, %v2902
      %p2938 = scmp.lt.s32.totalorder %s16, 1
      %s2939 = scalar_select %p2938, %s16, 1
      %s2940 = smul.addr %s2939, 32
      %s2941 = smul.addr %s2940, 8
      %s2942 = scalar_lea.vmem %s5, %s2941
      // Predicated region
      $region41: #{tpu_custom_call.1} parent=39 // pred_check
        %p2943 = pneg %p144
      $region42: #{tpu_custom_call.1} parent=39 // pred_check_branch
        %2945 = sbr.rel (%p2943) target = $region44
      $region43: #{tpu_custom_call.1} parent=39 // pred_region
        _
      $region44: #{tpu_custom_call.1} parent=39 // pred_fallthru
        _
    $region40: #{tpu_custom_call.1} parent=5 // pred_fallthru
      _
    %p2946 = scmp.le.s32.totalorder 2, %s11
    // Predicated region
    $region45: #{tpu_custom_call.1} parent=5 // pred_check
      %p2947 = pneg %p2946
    $region46: #{tpu_custom_call.1} parent=5 // pred_check_branch
      %2949 = sbr.rel (%p2947) target = $region48
    $region47: #{tpu_custom_call.1} parent=5 // pred_region
      %s2950 = ssub.s32 %s11, 2
      // Predicated region
      $region49: #{tpu_custom_call.1} parent=47 // pred_check
        %p2951 = pneg %p150
      $region50: #{tpu_custom_call.1} parent=47 // pred_check_branch
        %2953 = sbr.rel (%p2951) target = $region52
      $region51: #{tpu_custom_call.1} parent=47 // pred_region
        %p2954 = scmp.lt.s32.totalorder %s17, 1
        %s2955 = scalar_select %p2954, %s17, 1
        %s2956 = smul.addr %s2955, 32
        %s2957 = smul.addr %s2956, 8
        %s2958 = scalar_lea.vmem %s5, %s2957
      $region52: #{tpu_custom_call.1} parent=47 // pred_fallthru
        _
    $region48: #{tpu_custom_call.1} parent=5 // pred_fallthru
      _
  $region6: #{tpu_custom_call.1} parent=0 // loop_footer
    %s15 = sadd.s32 1, %s11
  $region7: #{tpu_custom_call.1} parent=0 // loop_footer_branch
    %10 = sbr.rel target = $region3
  $region8: #{tpu_custom_call.1} parent=0 // loop_exit
    _

</llo_original>
